<compile_context>
chip_gen: v7x
topology: tpu7x:2x2x1
jax: 0.10.0
libtpu: 0.0.40
codegen_flags: <defaults>
</compile_context>

<pallas_src>
import functools

import jax
import jax.numpy as jnp
from jax import lax
from jax.experimental import pallas as pl
from jax.experimental.pallas import tpu as pltpu


def _convlstm_kernel(x_ref, wx_ref, wh_ref, b_ref, o_ref, h_st, c_st,
                     *, H, W, Cin, Chid):
    """One grid step = one (batch element, timestep).  Grid = (B, T)."""
    G = 4 * Chid                      # gate/lane width (128 for Chid=32)
    t = pl.program_id(1)

    @pl.when(t == 0)
    def _():
        # Zero initial state; the H-padding rows of h_st stay zero forever
        # because later steps only write rows [1, H].
        h_st[...] = jnp.zeros_like(h_st)
        c_st[...] = jnp.zeros_like(c_st)

    # ---- conv as two lane-dense matmuls over the whole H-padded grid -------
    mxu_dt = wx_ref.dtype
    Mp = (H + 2) * W
    x2d = x_ref[0, 0].reshape(Mp, Cin).astype(mxu_dt)        # (Mp, Cin_pad)
    h2d = h_st[...].reshape(Mp, G).astype(mxu_dt)            # (Mp, G), h in lanes < Chid
    P = (jnp.dot(x2d, wx_ref[...], preferred_element_type=jnp.float32) +
         jnp.dot(h2d, wh_ref[...], preferred_element_type=jnp.float32))
    P = P.reshape(H + 2, W, 9 * G)                           # leading-dim split: free

    # ---- combine the 9 taps: free H slices, W rolls (XLU) + masks, adds ----
    wcol = lax.broadcasted_iota(jnp.int32, (1, W, G), 1)     # column index along W
    gates = jnp.broadcast_to(b_ref[...].astype(jnp.float32), (H, W, G))
    for ky in range(3):
        for kx in range(3):
            tap = ky * 3 + kx
            q = P[ky:ky + H, :, tap * G:(tap + 1) * G]       # (H, W, G), aligned slices
            if kx == 2:      # needs column x+1 -> roll left, zero last column
                q = pltpu.roll(q, shift=W - 1, axis=1)
                q = jnp.where(wcol < W - 1, q, 0.0)
            elif kx == 0:    # needs column x-1 -> roll right, zero first column
                q = pltpu.roll(q, shift=1, axis=1)
                q = jnp.where(wcol > 0, q, 0.0)
            gates = gates + q

    # ---- gate nonlinearities: single full-width tanh + lane select ---------
    lane = lax.broadcasted_iota(jnp.int32, (1, 1, G), 2)
    is_g = lane >= 3 * Chid
    th = jnp.tanh(jnp.where(is_g, gates, 0.5 * gates))
    act = jnp.where(is_g, th, 0.5 * th + 0.5)   # [sig(i) | sig(f) | sig(o) | tanh(g)]

    # ---- LSTM update, kept 4*Chid lanes wide (3 lane rolls, no narrow slices)
    c_prev = c_st[...]                                       # (H, W, G)
    f_al = pltpu.roll(act, shift=3 * Chid, axis=2)           # f -> lanes [0, Chid)
    o_al = pltpu.roll(act, shift=2 * Chid, axis=2)           # o -> lanes [0, Chid)
    g_al = pltpu.roll(act, shift=Chid, axis=2)               # g -> lanes [0, Chid)
    c_new = f_al * c_prev + act * g_al                       # valid in lanes < Chid
    c_new = jnp.where(lane < Chid, c_new, 0.0)               # keep junk lanes at 0
    h_new = o_al * jnp.tanh(c_new)                           # junk lanes: * tanh(0) = 0

    c_st[...] = c_new
    h_st[1:H + 1, :, :] = h_new                              # pad rows stay zero
    o_ref[0, 0] = h_new.astype(o_ref.dtype)                  # lane-dense (..., 4*Chid)


def convlstm_block_forward(x, weight, bias, hidden_channels, *,
                           mxu_dtype=jnp.float32):
    """x: (B, T, Cin, H, W); weight: (4*Chid, Cin+Chid, 3, 3) PyTorch OIHW;
    bias: (4*Chid,).  Returns a list with one array of shape (B, T, Chid, H, W)."""
    B, T, Cin, H, W = x.shape
    Chid = hidden_channels
    G = 4 * Chid
    assert weight.shape == (G, Cin + Chid, 3, 3)
    assert W % 8 == 0 and G % 128 == 0, "demo layout assumes W%8==0 and 4*Chid%128==0"
    Cin_p = ((Cin + 7) // 8) * 8                              # pad x channels to 8

    # Input: time-major NHWC, H zero-padded by 1, channels padded to Cin_p.
    x_k = jnp.transpose(x, (1, 0, 3, 4, 2))                               # (T,B,H,W,Cin)
    x_k = jnp.pad(x_k, ((0, 0), (0, 0), (1, 1), (0, 0), (0, Cin_p - Cin)))
    x_k = x_k.astype(mxu_dtype)                                           # (T,B,H+2,W,Cin_p)

    # Weights: split x / h parts, fold the 9 taps into N (tap-major column blocks,
    # tap = ky*3+kx).  Wh rows are zero-padded to 4*Chid so the wide h state feeds
    # the MXU directly; Wx rows padded to Cin_p.
    w_hwio = jnp.transpose(weight, (2, 3, 1, 0))                          # (3,3,Ctot,G)
    wx = jnp.transpose(w_hwio[:, :, :Cin, :].reshape(9, Cin, G), (1, 0, 2))
    wh = jnp.transpose(w_hwio[:, :, Cin:, :].reshape(9, Chid, G), (1, 0, 2))
    wx_k = jnp.pad(wx.reshape(Cin, 9 * G), ((0, Cin_p - Cin), (0, 0))).astype(mxu_dtype)
    wh_k = jnp.pad(wh.reshape(Chid, 9 * G), ((0, G - Chid), (0, 0))).astype(mxu_dtype)
    b_k = bias.reshape(1, G).astype(jnp.float32)

    kernel = functools.partial(_convlstm_kernel, H=H, W=W, Cin=Cin_p, Chid=Chid)

    out = pl.pallas_call(
        kernel,
        out_shape=jax.ShapeDtypeStruct((T, B, H, W, G), x.dtype),
        grid_spec=pltpu.PrefetchScalarGridSpec(
            num_scalar_prefetch=0,
            grid=(B, T),                      # B: parallel (megacore), T: recurrence
            in_specs=[
                pl.BlockSpec((1, 1, H + 2, W, Cin_p), lambda b, t: (t, b, 0, 0, 0)),
                pl.BlockSpec((Cin_p, 9 * G), lambda b, t: (0, 0)),
                pl.BlockSpec((G, 9 * G), lambda b, t: (0, 0)),
                pl.BlockSpec((1, G), lambda b, t: (0, 0)),
            ],
            out_specs=pl.BlockSpec((1, 1, H, W, G), lambda b, t: (t, b, 0, 0, 0)),
            scratch_shapes=[
                pltpu.VMEM((H + 2, W, G), jnp.float32),   # h state (wide, H-padded)
                pltpu.VMEM((H, W, G), jnp.float32),       # c state (wide)
            ],
        ),
        compiler_params=pltpu.CompilerParams(
            dimension_semantics=("parallel", "arbitrary"),
            vmem_limit_bytes=32 * 1024 * 1024,
        ),
    )(x_k, wx_k, wh_k, b_k)

    # Undo the padded/lane-dense layout (slice + transpose fuse in XLA).
    out = jnp.transpose(out[..., :Chid], (1, 0, 4, 2, 3))                 # (B,T,Chid,H,W)
    return [out]                                       # return_all_layers=True, 1 layer


def _reference(x, weight, bias, Chid):
    """Pure-JAX reference of the ConvLSTM forward (correctness check)."""
    B, T, Cin, H, W = x.shape
    h = jnp.zeros((B, Chid, H, W), jnp.float32)
    c = jnp.zeros((B, Chid, H, W), jnp.float32)
    outs = []
    for t in range(T):
        comb = jnp.concatenate([x[:, t], h], axis=1)
        conv = lax.conv_general_dilated(
            comb, weight, (1, 1), "SAME",
            dimension_numbers=("NCHW", "OIHW", "NCHW"))
        conv = conv + bias[None, :, None, None]
        cc_i, cc_f, cc_o, cc_g = jnp.split(conv, 4, axis=1)
        i = jax.nn.sigmoid(cc_i); f = jax.nn.sigmoid(cc_f)
        o = jax.nn.sigmoid(cc_o); g = jnp.tanh(cc_g)
        c = f * c + i * g
        h = o * jnp.tanh(c)
        outs.append(h)
    return jnp.stack(outs, axis=1)


if __name__ == "__main__":
    B, T, Cin, H, W = 2, 8, 4, 16, 16
    Chid = 32

    key = jax.random.PRNGKey(0)
    kx_, kw_, kb_ = jax.random.split(key, 3)
    x = jax.random.normal(kx_, (B, T, Cin, H, W), jnp.float32)
    # Deterministic synthetic parameters (PyTorch Conv2d shapes).
    weight = jax.random.normal(kw_, (4 * Chid, Cin + Chid, 3, 3), jnp.float32) * 0.1
    bias = jax.random.normal(kb_, (4 * Chid,), jnp.float32) * 0.1

    out_list = convlstm_block_forward(x, weight, bias, Chid)
    out = jax.block_until_ready(out_list[0])

    ref = jax.block_until_ready(_reference(x, weight, bias, Chid))
    assert out.shape == (B, T, Chid, H, W)
    max_err = float(jnp.max(jnp.abs(out - ref)))
    assert jnp.allclose(out, ref, atol=2e-3, rtol=2e-3), max_err

    print("KERNEL_OK")
</pallas_src>

<mosaic_0001>
module attributes {stable_mosaic.version = 11 : i64} {
  func.func @_convlstm_kernel(%arg0: i32, %arg1: i32, %arg2: memref<1x1x18x16x8xf32, #tpu.memory_space<vmem>>, %arg3: memref<8x1152xf32, #tpu.memory_space<vmem>>, %arg4: memref<128x1152xf32, #tpu.memory_space<vmem>>, %arg5: memref<1x128xf32, #tpu.memory_space<vmem>>, %arg6: memref<1x1x16x16x128xf32, #tpu.memory_space<vmem>>, %arg7: memref<18x16x128xf32, #tpu.memory_space<vmem>>, %arg8: memref<16x16x128xf32, #tpu.memory_space<vmem>>) attributes {dimension_semantics = [#tpu.dimension_semantics<parallel>, #tpu.dimension_semantics<arbitrary>], iteration_bounds = array<i64: 2, 8>, scalar_prefetch = 0 : i64, scratch_operands = 2 : i64, tpu.core_type = #tpu.core_type<tc>, window_params = [{transform_indices = @transform_0, window_bounds = array<i64: 1, 1, 18, 16, 8>}, {pipeline_mode = #tpu.pipeline_mode<synchronous>, transform_indices = @transform_1, window_bounds = array<i64: 8, 1152>}, {pipeline_mode = #tpu.pipeline_mode<synchronous>, transform_indices = @transform_2, window_bounds = array<i64: 128, 1152>}, {pipeline_mode = #tpu.pipeline_mode<synchronous>, transform_indices = @transform_3, window_bounds = array<i64: 1, 128>}, {transform_indices = @transform_4, window_bounds = array<i64: 1, 1, 16, 16, 128>}]} {
    %c0_i32 = arith.constant 0 : i32
    %0 = arith.cmpi eq, %arg1, %c0_i32 : i32
    %1 = arith.extui %0 : i1 to i32
    %c0_i32_0 = arith.constant 0 : i32
    %2 = arith.cmpi ne, %1, %c0_i32_0 : i32
    scf.if %2 {
      %cst_50 = arith.constant 0.000000e+00 : f32
      %114 = vector.broadcast %cst_50 : f32 to vector<18x16x128xf32>
      %c0_51 = arith.constant 0 : index
      %c0_52 = arith.constant 0 : index
      %c0_53 = arith.constant 0 : index
      %115 = vector.load %arg7[%c0_51, %c0_52, %c0_53] : memref<18x16x128xf32, #tpu.memory_space<vmem>>, vector<18x16x128xf32>
      tpu.vector_store %arg7[%c0_51, %c0_52, %c0_53], %114 {strides = array<i32>} : memref<18x16x128xf32, #tpu.memory_space<vmem>>, vector<18x16x128xf32>,
      %cst_54 = arith.constant 0.000000e+00 : f32
      %116 = vector.broadcast %cst_54 : f32 to vector<16x16x128xf32>
      %c0_55 = arith.constant 0 : index
      %c0_56 = arith.constant 0 : index
      %c0_57 = arith.constant 0 : index
      %117 = vector.load %arg8[%c0_55, %c0_56, %c0_57] : memref<16x16x128xf32, #tpu.memory_space<vmem>>, vector<16x16x128xf32>
      tpu.vector_store %arg8[%c0_55, %c0_56, %c0_57], %116 {strides = array<i32>} : memref<16x16x128xf32, #tpu.memory_space<vmem>>, vector<16x16x128xf32>,
    } else {
    }
    %c0 = arith.constant 0 : index
    %c0_1 = arith.constant 0 : index
    %c0_2 = arith.constant 0 : index
    %c0_3 = arith.constant 0 : index
    %c0_4 = arith.constant 0 : index
    %3 = vector.load %arg2[%c0, %c0_1, %c0_2, %c0_3, %c0_4] : memref<1x1x18x16x8xf32, #tpu.memory_space<vmem>>, vector<1x1x18x16x8xf32>
    %4 = vector.shape_cast %3 : vector<1x1x18x16x8xf32> to vector<18x16x8xf32>
    %5 = vector.shape_cast %4 : vector<18x16x8xf32> to vector<288x8xf32>
    %c0_5 = arith.constant 0 : index
    %c0_6 = arith.constant 0 : index
    %c0_7 = arith.constant 0 : index
    %6 = vector.load %arg7[%c0_5, %c0_6, %c0_7] : memref<18x16x128xf32, #tpu.memory_space<vmem>>, vector<18x16x128xf32>
    %7 = vector.shape_cast %6 : vector<18x16x128xf32> to vector<288x128xf32>
    %c0_8 = arith.constant 0 : index
    %c0_9 = arith.constant 0 : index
    %8 = vector.load %arg3[%c0_8, %c0_9] : memref<8x1152xf32, #tpu.memory_space<vmem>>, vector<8x1152xf32>
    %cst = arith.constant dense<0.000000e+00> : vector<288x1152xf32>
    %9 = tpu.matmul %5, %8, %cst {dimension_numbers = #tpu.dot_dimension_numbers<[1], [0], [0], [1], [0, 0, 1, 1], [], []>} : vector<288x8xf32>, vector<8x1152xf32>, vector<288x1152xf32> -> vector<288x1152xf32>
    %c0_10 = arith.constant 0 : index
    %c0_11 = arith.constant 0 : index
    %10 = vector.load %arg4[%c0_10, %c0_11] : memref<128x1152xf32, #tpu.memory_space<vmem>>, vector<128x1152xf32>
    %cst_12 = arith.constant dense<0.000000e+00> : vector<288x1152xf32>
    %11 = tpu.matmul %7, %10, %cst_12 {dimension_numbers = #tpu.dot_dimension_numbers<[1], [0], [0], [1], [0, 0, 1, 1], [], []>} : vector<288x128xf32>, vector<128x1152xf32>, vector<288x1152xf32> -> vector<288x1152xf32>
    %12 = arith.addf %9, %11 : vector<288x1152xf32>
    %13 = vector.shape_cast %12 : vector<288x1152xf32> to vector<18x16x1152xf32>
    %14 = tpu.iota {dimensions = array<i32: 1>} : vector<1x16x128xi32>
    %c0_13 = arith.constant 0 : index
    %c0_14 = arith.constant 0 : index
    %15 = vector.load %arg5[%c0_13, %c0_14] : memref<1x128xf32, #tpu.memory_space<vmem>>, vector<1x128xf32>
    %16 = vector.shape_cast %15 : vector<1x128xf32> to vector<1x1x128xf32>
    %17 = vector.broadcast %16 : vector<1x1x128xf32> to vector<16x16x128xf32>
    %18 = vector.extract_strided_slice %13 {offsets = [0, 0, 0], sizes = [16, 16, 128], strides = [1, 1, 1]} : vector<18x16x1152xf32> to vector<16x16x128xf32>
    %c1_i32 = arith.constant 1 : i32
    %19 = tpu.dynamic_rotate %18 by %c1_i32 dim 1 : vector<16x16x128xf32>, i32 -> vector<16x16x128xf32>
    %c0_i32_15 = arith.constant 0 : i32
    %20 = vector.broadcast %c0_i32_15 : i32 to vector<1x16x128xi32>
    %21 = arith.cmpi sgt, %14, %20 : vector<1x16x128xi32>
    %cst_16 = arith.constant 0.000000e+00 : f32
    %22 = vector.shape_cast %21 : vector<1x16x128xi1> to vector<1x16x128xi1>
    %23 = vector.broadcast %22 : vector<1x16x128xi1> to vector<16x16x128xi1>
    %24 = vector.broadcast %cst_16 : f32 to vector<16x16x128xf32>
    %25 = arith.select %23, %19, %24 : vector<16x16x128xi1>, vector<16x16x128xf32>
    %26 = arith.addf %17, %25 : vector<16x16x128xf32>
    %27 = vector.extract_strided_slice %13 {offsets = [0, 0, 128], sizes = [16, 16, 128], strides = [1, 1, 1]} : vector<18x16x1152xf32> to vector<16x16x128xf32>
    %28 = arith.addf %26, %27 : vector<16x16x128xf32>
    %29 = vector.extract_strided_slice %13 {offsets = [0, 0, 256], sizes = [16, 16, 128], strides = [1, 1, 1]} : vector<18x16x1152xf32> to vector<16x16x128xf32>
    %c15_i32 = arith.constant 15 : i32
    %30 = tpu.dynamic_rotate %29 by %c15_i32 dim 1 : vector<16x16x128xf32>, i32 -> vector<16x16x128xf32>
    %c15_i32_17 = arith.constant 15 : i32
    %31 = vector.broadcast %c15_i32_17 : i32 to vector<1x16x128xi32>
    %32 = arith.cmpi slt, %14, %31 : vector<1x16x128xi32>
    %cst_18 = arith.constant 0.000000e+00 : f32
    %33 = vector.shape_cast %32 : vector<1x16x128xi1> to vector<1x16x128xi1>
    %34 = vector.broadcast %33 : vector<1x16x128xi1> to vector<16x16x128xi1>
    %35 = vector.broadcast %cst_18 : f32 to vector<16x16x128xf32>
    %36 = arith.select %34, %30, %35 : vector<16x16x128xi1>, vector<16x16x128xf32>
    %37 = arith.addf %28, %36 : vector<16x16x128xf32>
    %38 = vector.extract_strided_slice %13 {offsets = [1, 0, 384], sizes = [16, 16, 128], strides = [1, 1, 1]} : vector<18x16x1152xf32> to vector<16x16x128xf32>
    %c1_i32_19 = arith.constant 1 : i32
    %39 = tpu.dynamic_rotate %38 by %c1_i32_19 dim 1 : vector<16x16x128xf32>, i32 -> vector<16x16x128xf32>
    %c0_i32_20 = arith.constant 0 : i32
    %40 = vector.broadcast %c0_i32_20 : i32 to vector<1x16x128xi32>
    %41 = arith.cmpi sgt, %14, %40 : vector<1x16x128xi32>
    %cst_21 = arith.constant 0.000000e+00 : f32
    %42 = vector.shape_cast %41 : vector<1x16x128xi1> to vector<1x16x128xi1>
    %43 = vector.broadcast %42 : vector<1x16x128xi1> to vector<16x16x128xi1>
    %44 = vector.broadcast %cst_21 : f32 to vector<16x16x128xf32>
    %45 = arith.select %43, %39, %44 : vector<16x16x128xi1>, vector<16x16x128xf32>
    %46 = arith.addf %37, %45 : vector<16x16x128xf32>
    %47 = vector.extract_strided_slice %13 {offsets = [1, 0, 512], sizes = [16, 16, 128], strides = [1, 1, 1]} : vector<18x16x1152xf32> to vector<16x16x128xf32>
    %48 = arith.addf %46, %47 : vector<16x16x128xf32>
    %49 = vector.extract_strided_slice %13 {offsets = [1, 0, 640], sizes = [16, 16, 128], strides = [1, 1, 1]} : vector<18x16x1152xf32> to vector<16x16x128xf32>
    %c15_i32_22 = arith.constant 15 : i32
    %50 = tpu.dynamic_rotate %49 by %c15_i32_22 dim 1 : vector<16x16x128xf32>, i32 -> vector<16x16x128xf32>
    %c15_i32_23 = arith.constant 15 : i32
    %51 = vector.broadcast %c15_i32_23 : i32 to vector<1x16x128xi32>
    %52 = arith.cmpi slt, %14, %51 : vector<1x16x128xi32>
    %cst_24 = arith.constant 0.000000e+00 : f32
    %53 = vector.shape_cast %52 : vector<1x16x128xi1> to vector<1x16x128xi1>
    %54 = vector.broadcast %53 : vector<1x16x128xi1> to vector<16x16x128xi1>
    %55 = vector.broadcast %cst_24 : f32 to vector<16x16x128xf32>
    %56 = arith.select %54, %50, %55 : vector<16x16x128xi1>, vector<16x16x128xf32>
    %57 = arith.addf %48, %56 : vector<16x16x128xf32>
    %58 = vector.extract_strided_slice %13 {offsets = [2, 0, 768], sizes = [16, 16, 128], strides = [1, 1, 1]} : vector<18x16x1152xf32> to vector<16x16x128xf32>
    %c1_i32_25 = arith.constant 1 : i32
    %59 = tpu.dynamic_rotate %58 by %c1_i32_25 dim 1 : vector<16x16x128xf32>, i32 -> vector<16x16x128xf32>
    %c0_i32_26 = arith.constant 0 : i32
    %60 = vector.broadcast %c0_i32_26 : i32 to vector<1x16x128xi32>
    %61 = arith.cmpi sgt, %14, %60 : vector<1x16x128xi32>
    %cst_27 = arith.constant 0.000000e+00 : f32
    %62 = vector.shape_cast %61 : vector<1x16x128xi1> to vector<1x16x128xi1>
    %63 = vector.broadcast %62 : vector<1x16x128xi1> to vector<16x16x128xi1>
    %64 = vector.broadcast %cst_27 : f32 to vector<16x16x128xf32>
    %65 = arith.select %63, %59, %64 : vector<16x16x128xi1>, vector<16x16x128xf32>
    %66 = arith.addf %57, %65 : vector<16x16x128xf32>
    %67 = vector.extract_strided_slice %13 {offsets = [2, 0, 896], sizes = [16, 16, 128], strides = [1, 1, 1]} : vector<18x16x1152xf32> to vector<16x16x128xf32>
    %68 = arith.addf %66, %67 : vector<16x16x128xf32>
    %69 = vector.extract_strided_slice %13 {offsets = [2, 0, 1024], sizes = [16, 16, 128], strides = [1, 1, 1]} : vector<18x16x1152xf32> to vector<16x16x128xf32>
    %c15_i32_28 = arith.constant 15 : i32
    %70 = tpu.dynamic_rotate %69 by %c15_i32_28 dim 1 : vector<16x16x128xf32>, i32 -> vector<16x16x128xf32>
    %c15_i32_29 = arith.constant 15 : i32
    %71 = vector.broadcast %c15_i32_29 : i32 to vector<1x16x128xi32>
    %72 = arith.cmpi slt, %14, %71 : vector<1x16x128xi32>
    %cst_30 = arith.constant 0.000000e+00 : f32
    %73 = vector.shape_cast %72 : vector<1x16x128xi1> to vector<1x16x128xi1>
    %74 = vector.broadcast %73 : vector<1x16x128xi1> to vector<16x16x128xi1>
    %75 = vector.broadcast %cst_30 : f32 to vector<16x16x128xf32>
    %76 = arith.select %74, %70, %75 : vector<16x16x128xi1>, vector<16x16x128xf32>
    %77 = arith.addf %68, %76 : vector<16x16x128xf32>
    %78 = tpu.iota {dimensions = array<i32: 2>} : vector<1x1x128xi32>
    %c96_i32 = arith.constant 96 : i32
    %79 = vector.broadcast %c96_i32 : i32 to vector<1x1x128xi32>
    %80 = arith.cmpi sge, %78, %79 : vector<1x1x128xi32>
    %cst_31 = arith.constant 5.000000e-01 : f32
    %81 = vector.broadcast %cst_31 : f32 to vector<16x16x128xf32>
    %82 = arith.mulf %81, %77 : vector<16x16x128xf32>
    %83 = vector.shape_cast %80 : vector<1x1x128xi1> to vector<1x1x128xi1>
    %84 = vector.broadcast %83 : vector<1x1x128xi1> to vector<16x16x128xi1>
    %85 = arith.select %84, %77, %82 : vector<16x16x128xi1>, vector<16x16x128xf32>
    %86 = math.tanh %85 : vector<16x16x128xf32>
    %cst_32 = arith.constant 5.000000e-01 : f32
    %87 = vector.broadcast %cst_32 : f32 to vector<16x16x128xf32>
    %88 = arith.mulf %87, %86 : vector<16x16x128xf32>
    %cst_33 = arith.constant 5.000000e-01 : f32
    %89 = vector.broadcast %cst_33 : f32 to vector<16x16x128xf32>
    %90 = arith.addf %88, %89 : vector<16x16x128xf32>
    %91 = vector.shape_cast %80 : vector<1x1x128xi1> to vector<1x1x128xi1>
    %92 = vector.broadcast %91 : vector<1x1x128xi1> to vector<16x16x128xi1>
    %93 = arith.select %92, %86, %90 : vector<16x16x128xi1>, vector<16x16x128xf32>
    %c0_34 = arith.constant 0 : index
    %c0_35 = arith.constant 0 : index
    %c0_36 = arith.constant 0 : index
    %94 = vector.load %arg8[%c0_34, %c0_35, %c0_36] : memref<16x16x128xf32, #tpu.memory_space<vmem>>, vector<16x16x128xf32>
    %c96_i32_37 = arith.constant 96 : i32
    %95 = tpu.dynamic_rotate %93 by %c96_i32_37 dim 2 : vector<16x16x128xf32>, i32 -> vector<16x16x128xf32>
    %c64_i32 = arith.constant 64 : i32
    %96 = tpu.dynamic_rotate %93 by %c64_i32 dim 2 : vector<16x16x128xf32>, i32 -> vector<16x16x128xf32>
    %c32_i32 = arith.constant 32 : i32
    %97 = tpu.dynamic_rotate %93 by %c32_i32 dim 2 : vector<16x16x128xf32>, i32 -> vector<16x16x128xf32>
    %98 = arith.mulf %95, %94 : vector<16x16x128xf32>
    %99 = arith.mulf %93, %97 : vector<16x16x128xf32>
    %100 = arith.addf %98, %99 : vector<16x16x128xf32>
    %c32_i32_38 = arith.constant 32 : i32
    %101 = vector.broadcast %c32_i32_38 : i32 to vector<1x1x128xi32>
    %102 = arith.cmpi slt, %78, %101 : vector<1x1x128xi32>
    %cst_39 = arith.constant 0.000000e+00 : f32
    %103 = vector.shape_cast %102 : vector<1x1x128xi1> to vector<1x1x128xi1>
    %104 = vector.broadcast %103 : vector<1x1x128xi1> to vector<16x16x128xi1>
    %105 = vector.broadcast %cst_39 : f32 to vector<16x16x128xf32>
    %106 = arith.select %104, %100, %105 : vector<16x16x128xi1>, vector<16x16x128xf32>
    %107 = math.tanh %106 : vector<16x16x128xf32>
    %108 = arith.mulf %96, %107 : vector<16x16x128xf32>
    %c0_40 = arith.constant 0 : index
    %c0_41 = arith.constant 0 : index
    %c0_42 = arith.constant 0 : index
    %109 = vector.load %arg8[%c0_40, %c0_41, %c0_42] : memref<16x16x128xf32, #tpu.memory_space<vmem>>, vector<16x16x128xf32>
    tpu.vector_store %arg8[%c0_40, %c0_41, %c0_42], %106 {strides = array<i32>} : memref<16x16x128xf32, #tpu.memory_space<vmem>>, vector<16x16x128xf32>,
    %c1 = arith.constant 1 : index
    %c0_43 = arith.constant 0 : index
    %c0_44 = arith.constant 0 : index
    %110 = vector.load %arg7[%c1, %c0_43, %c0_44] : memref<18x16x128xf32, #tpu.memory_space<vmem>>, vector<16x16x128xf32>
    tpu.vector_store %arg7[%c1, %c0_43, %c0_44], %108 {strides = array<i32>} : memref<18x16x128xf32, #tpu.memory_space<vmem>>, vector<16x16x128xf32>,
    %c0_45 = arith.constant 0 : index
    %c0_46 = arith.constant 0 : index
    %c0_47 = arith.constant 0 : index
    %c0_48 = arith.constant 0 : index
    %c0_49 = arith.constant 0 : index
    %111 = vector.load %arg6[%c0_45, %c0_46, %c0_47, %c0_48, %c0_49] : memref<1x1x16x16x128xf32, #tpu.memory_space<vmem>>, vector<1x1x16x16x128xf32>
    %112 = vector.shape_cast %111 : vector<1x1x16x16x128xf32> to vector<16x16x128xf32>
    %113 = vector.shape_cast %108 : vector<16x16x128xf32> to vector<1x1x16x16x128xf32>
    tpu.vector_store %arg6[%c0_45, %c0_46, %c0_47, %c0_48, %c0_49], %113 {strides = array<i32>} : memref<1x1x16x16x128xf32, #tpu.memory_space<vmem>>, vector<1x1x16x16x128xf32>,
    return
  }
  func.func @transform_0(%arg0: i32, %arg1: i32) -> (i32, i32, i32, i32, i32) {
    %c0_i32 = arith.constant 0 : i32
    %c0_i32_0 = arith.constant 0 : i32
    %c0_i32_1 = arith.constant 0 : i32
    %c0_i32_2 = arith.constant 0 : i32
    return %arg1, %arg0, %c0_i32, %c0_i32_0, %c0_i32_1 : i32, i32, i32, i32, i32
  }
  func.func @transform_1(%arg0: i32, %arg1: i32) -> (i32, i32) {
    %c0_i32 = arith.constant 0 : i32
    %c0_i32_0 = arith.constant 0 : i32
    %c0_i32_1 = arith.constant 0 : i32
    return %c0_i32, %c0_i32_0 : i32, i32
  }
  func.func @transform_2(%arg0: i32, %arg1: i32) -> (i32, i32) {
    %c0_i32 = arith.constant 0 : i32
    %c0_i32_0 = arith.constant 0 : i32
    %c0_i32_1 = arith.constant 0 : i32
    return %c0_i32, %c0_i32_0 : i32, i32
  }
  func.func @transform_3(%arg0: i32, %arg1: i32) -> (i32, i32) {
    %c0_i32 = arith.constant 0 : i32
    %c0_i32_0 = arith.constant 0 : i32
    %c0_i32_1 = arith.constant 0 : i32
    return %c0_i32, %c0_i32_0 : i32, i32
  }
  func.func @transform_4(%arg0: i32, %arg1: i32) -> (i32, i32, i32, i32, i32) {
    %c0_i32 = arith.constant 0 : i32
    %c0_i32_0 = arith.constant 0 : i32
    %c0_i32_1 = arith.constant 0 : i32
    %c0_i32_2 = arith.constant 0 : i32
    return %arg1, %arg0, %c0_i32, %c0_i32_0, %c0_i32_1 : i32, i32, i32, i32, i32
  }
}

</mosaic_0001>

<llo_original>
// kernel: tpu_custom_call.1
$region0: #{tpu_custom_call.1}
  #allocation0 [shape = 'u32[]', space=smem, size = 0x4, offset = 0x4, fixed_abs, tag = 'smem constant byte address 0x4 - core index']
  #allocation1 [shape = 'u32[144,128]{1,0:T(1,128)}', space=vmem, size = 0x12000, scoped, tag = 'internal scratch']
  #allocation2 [shape = 'f32[18,16,128]{2,1,0:T(8,128)}', space=vmem, size = 0x24000, scoped, tag = 'scratch operand']
  #allocation3 [shape = 'f32[16,16,128]{2,1,0:T(8,128)}', space=vmem, size = 0x20000, scoped, tag = 'scratch operand']
  %s0 = inlined_call_operand.vmem [shape: f32[8,2,18,16,8], index: 0, kind: input, shape index: {}]
  %s1 = inlined_call_operand.vmem [shape: f32[8,1152], index: 1, kind: input, shape index: {}]
  %s2 = inlined_call_operand.vmem [shape: f32[128,1152], index: 2, kind: input, shape index: {}]
  %s3 = inlined_call_operand.vmem [shape: f32[1,128], index: 3, kind: input, shape index: {}]
  %s4 = inlined_call_operand.hbm [shape: f32[8,2,16,16,128], index: 4, kind: output, shape index: {}]
  %s5 = sld [smem:[#allocation0]]
  $region53: #{tpu_custom_call.1} parent=0
    _
  %s7 = ssub.s32 1, %s5
  %s8 = scalar_select 0, %s7, %s5
  $region1: #{tpu_custom_call.1} parent=0
    #allocation4 [shape = 'u8[262144]{0}', space=vmem, size = 0x40000, scoped, tag = 'output window, operand 0']
    #allocation5 [shape = 's32[2]{0}', space=sflag, size = 0x8, scoped, tag = 'scoped memory for tpu_custom_call.1']
    %9 = vsyncpa [#allocation5], 0
    %s10 = scalar_lea.sflag [#allocation5], 1
    %11 = vsyncpa %s10, 0
    loop: start=0, step=1, limit=18
    $region2: #{tpu_custom_call.1} parent=1 // loop_pre_header
      _
    $region3: #{tpu_custom_call.1} parent=1 // loop_header
      %s13 = sphi 0, %s17
      %p14 = scmp.ge.s32.totalorder %s13, 18
      %s20 = sphi 0, %s32
      %s21 = sphi 0, %s28
      %s22 = sphi 0, %s20
      %s23 = sphi 0, %s21
      %s24 = sphi 0, %s22
      %s25 = sphi 0, %s23
      %s37 = sphi 0, %s39
      %s40 = sphi 0, %s37
      %s41 = sphi 0, %s40
      %s57 = sphi 0, %s41
      %s61 = sphi 0, %s61
      %s63 = sphi 0, %s61
      %s64 = sphi 0, %s63
      %s78 = sphi 0, %s64
      %s82 = sphi 0, %s82
      %s84 = sphi 0, %s82
      %s85 = sphi 0, %s84
      %s99 = sphi 0, %s85
      %s103 = sphi 0, %s103
      %s105 = sphi 0, %s103
      %s106 = sphi 0, %s105
      %s120 = sphi 0, %s106
      %s128 = sphi 0, %s130
      %s131 = sphi 0, %s128
      %s132 = sphi 0, %s131
      %s148 = sphi 0, %s132
    $region4: #{tpu_custom_call.1} parent=1 // loop_header_branch
      %16 = sbr.rel (%p14) target = $region8
    $region5: #{tpu_custom_call.1} parent=1 // loop_body
      %s18 = ssub.s32 %s13, 1
      %s19 = ssub.s32 %s13, 2
      %s26 = sadd.s32 1, %s21
      %p27 = scmp.ge.s32.totalorder %s26, 8
      %s28 = scalar_select %p27, 0, %s26
      %s29 = sadd.s32 1, %s20
      %s30 = scalar_select %p27, %s29, %s20
      %p31 = scmp.ge.s32.totalorder %s30, 2
      %s32 = scalar_select %p31, 0, %s30
      %s33 = ssub.s32 %s21, %s28
      %s34 = ssub.s32 %s20, %s32
      %s35 = sor.u32 %s33, %s34
      %p36 = scmp.eq.s32.totalorder %s35, 0
      %s38 = sadd.s32 %s37, 1
      %s39 = scalar_select %p36, %s37, %s38
      %p42 = pneg %p36
      %p43 = scmp.eq.s32.totalorder %s13, 15
      %p44 = por %p42, %p43
      %p45 = scmp.ne.s32.totalorder %s37, %s40
      %p46 = scmp.eq.s32.totalorder %s13, 0
      %p47 = por %p45, %p46
      %p48 = scmp.ne.s32.totalorder %s37, %s40
      %p49 = scmp.eq.s32.totalorder %s18, 15
      %p50 = por %p48, %p49
      %p51 = scmp.ne.s32.totalorder %s40, %s41
      %p52 = scmp.eq.s32.totalorder %s18, 0
      %p53 = por %p51, %p52
      %p54 = scmp.ne.s32.totalorder %s40, %s41
      %p55 = scmp.eq.s32.totalorder %s19, 15
      %p56 = por %p54, %p55
      %p58 = scmp.ne.s32.totalorder %s41, %s57
      %p59 = scmp.eq.s32.totalorder %s19, 0
      %p60 = por %p58, %p59
      %s62 = sadd.s32 %s61, 1
      %p65 = scmp.eq.s32.totalorder %s13, 15
      %p66 = scmp.ne.s32.totalorder %s61, %s63
      %p67 = scmp.eq.s32.totalorder %s13, 0
      %p68 = por %p66, %p67
      %p69 = scmp.ne.s32.totalorder %s61, %s63
      %p70 = scmp.eq.s32.totalorder %s18, 15
      %p71 = por %p69, %p70
      %p72 = scmp.ne.s32.totalorder %s63, %s64
      %p73 = scmp.eq.s32.totalorder %s18, 0
      %p74 = por %p72, %p73
      %p75 = scmp.ne.s32.totalorder %s63, %s64
      %p76 = scmp.eq.s32.totalorder %s19, 15
      %p77 = por %p75, %p76
      %p79 = scmp.ne.s32.totalorder %s64, %s78
      %p80 = scmp.eq.s32.totalorder %s19, 0
      %p81 = por %p79, %p80
      %s83 = sadd.s32 %s82, 1
      %p86 = scmp.eq.s32.totalorder %s13, 15
      %p87 = scmp.ne.s32.totalorder %s82, %s84
      %p88 = scmp.eq.s32.totalorder %s13, 0
      %p89 = por %p87, %p88
      %p90 = scmp.ne.s32.totalorder %s82, %s84
      %p91 = scmp.eq.s32.totalorder %s18, 15
      %p92 = por %p90, %p91
      %p93 = scmp.ne.s32.totalorder %s84, %s85
      %p94 = scmp.eq.s32.totalorder %s18, 0
      %p95 = por %p93, %p94
      %p96 = scmp.ne.s32.totalorder %s84, %s85
      %p97 = scmp.eq.s32.totalorder %s19, 15
      %p98 = por %p96, %p97
      %p100 = scmp.ne.s32.totalorder %s85, %s99
      %p101 = scmp.eq.s32.totalorder %s19, 0
      %p102 = por %p100, %p101
      %s104 = sadd.s32 %s103, 1
      %p107 = scmp.eq.s32.totalorder %s13, 15
      %p108 = scmp.ne.s32.totalorder %s103, %s105
      %p109 = scmp.eq.s32.totalorder %s13, 0
      %p110 = por %p108, %p109
      %p111 = scmp.ne.s32.totalorder %s103, %s105
      %p112 = scmp.eq.s32.totalorder %s18, 15
      %p113 = por %p111, %p112
      %p114 = scmp.ne.s32.totalorder %s105, %s106
      %p115 = scmp.eq.s32.totalorder %s18, 0
      %p116 = por %p114, %p115
      %p117 = scmp.ne.s32.totalorder %s105, %s106
      %p118 = scmp.eq.s32.totalorder %s19, 15
      %p119 = por %p117, %p118
      %p121 = scmp.ne.s32.totalorder %s106, %s120
      %p122 = scmp.eq.s32.totalorder %s19, 0
      %p123 = por %p121, %p122
      %s124 = ssub.s32 %s21, %s28
      %s125 = ssub.s32 %s20, %s32
      %s126 = sor.u32 %s124, %s125
      %p127 = scmp.eq.s32.totalorder %s126, 0
      %s129 = sadd.s32 %s128, 1
      %s130 = scalar_select %p127, %s128, %s129
      %p133 = pneg %p127
      %p134 = scmp.eq.s32.totalorder %s13, 15
      %p135 = por %p133, %p134
      %p136 = scmp.ne.s32.totalorder %s128, %s131
      %p137 = scmp.eq.s32.totalorder %s13, 0
      %p138 = por %p136, %p137
      %p139 = scmp.ne.s32.totalorder %s128, %s131
      %p140 = scmp.eq.s32.totalorder %s18, 15
      %p141 = por %p139, %p140
      %p142 = scmp.ne.s32.totalorder %s131, %s132
      %p143 = scmp.eq.s32.totalorder %s18, 0
      %p144 = por %p142, %p143
      %p145 = scmp.ne.s32.totalorder %s131, %s132
      %p146 = scmp.eq.s32.totalorder %s19, 15
      %p147 = por %p145, %p146
      %p149 = scmp.ne.s32.totalorder %s132, %s148
      %p150 = scmp.eq.s32.totalorder %s19, 0
      %p151 = por %p149, %p150
      %p152 = scmp.le.s32.totalorder 1, %s13
      %p153 = scmp.lt.s32.totalorder %s13, 17
      %p154 = pnand %p152, %p153
      %p155 = pneg %p154
      // Predicated region
      $region9: #{tpu_custom_call.1} parent=5 // pred_check
        _
      $region10: #{tpu_custom_call.1} parent=5 // pred_check_branch
        %157 = sbr.rel (%p154) target = $region12
      $region11: #{tpu_custom_call.1} parent=5 // pred_region
        %s158 = ssub.s32 %s13, 1
        // Predicated region
        $region13: #{tpu_custom_call.1} parent=11 // pred_check
          %p159 = pneg %p74
        $region14: #{tpu_custom_call.1} parent=11 // pred_check_branch
          %161 = sbr.rel (%p159) target = $region16
        $region15: #{tpu_custom_call.1} parent=11 // pred_region
          _
        $region16: #{tpu_custom_call.1} parent=11 // pred_fallthru
          _
        // Predicated region
        $region17: #{tpu_custom_call.1} parent=11 // pred_check
          %p162 = pneg %p95
        $region18: #{tpu_custom_call.1} parent=11 // pred_check_branch
          %164 = sbr.rel (%p162) target = $region20
        $region19: #{tpu_custom_call.1} parent=11 // pred_region
          _
        $region20: #{tpu_custom_call.1} parent=11 // pred_fallthru
          _
        // Predicated region
        $region21: #{tpu_custom_call.1} parent=11 // pred_check
          %p165 = pneg %p116
        $region22: #{tpu_custom_call.1} parent=11 // pred_check_branch
          %167 = sbr.rel (%p165) target = $region24
        $region23: #{tpu_custom_call.1} parent=11 // pred_region
          _
        $region24: #{tpu_custom_call.1} parent=11 // pred_fallthru
          _
      $region12: #{tpu_custom_call.1} parent=5 // pred_fallthru
        _
      %p168 = scmp.lt.s32.totalorder %s13, 16
      // Predicated region
      $region25: #{tpu_custom_call.1} parent=5 // pred_check
        %p169 = pneg %p168
      $region26: #{tpu_custom_call.1} parent=5 // pred_check_branch
        %171 = sbr.rel (%p169) target = $region28
      $region27: #{tpu_custom_call.1} parent=5 // pred_region
        // Predicated region
        $region29: #{tpu_custom_call.1} parent=27 // pred_check
          %p172 = pneg %p47
        $region30: #{tpu_custom_call.1} parent=27 // pred_check_branch
          %174 = sbr.rel (%p172) target = $region32
        $region31: #{tpu_custom_call.1} parent=27 // pred_region
          %p175 = scmp.lt.s32.totalorder %s21, 7
          %s176 = scalar_select %p175, %s21, 7
          %p177 = scmp.lt.s32.totalorder %s20, 1
          %s178 = scalar_select %p177, %s20, 1
          %s179 = smul.addr %s178, 36
          %s180 = smul.addr %s176, 72
          %s181 = sadd.s32 %s179, %s180
          %s182 = smul.addr %s181, 8
          %s183 = scalar_lea.vmem %s0, %s182
        $region32: #{tpu_custom_call.1} parent=27 // pred_fallthru
          _
      $region28: #{tpu_custom_call.1} parent=5 // pred_fallthru
        _
      %p184 = scmp.le.s32.totalorder 1, %s13
      %p185 = scmp.lt.s32.totalorder %s13, 17
      %p186 = pnand %p184, %p185
      %p187 = pneg %p186
      // Predicated region
      $region33: #{tpu_custom_call.1} parent=5 // pred_check
        _
      $region34: #{tpu_custom_call.1} parent=5 // pred_check_branch
        %189 = sbr.rel (%p186) target = $region36
      $region35: #{tpu_custom_call.1} parent=5 // pred_region
        %s190 = ssub.s32 %s13, 1
        %p191 = scmp.lt.s32.totalorder %s23, 7
        %s192 = scalar_select %p191, %s23, 7
        %p193 = scmp.lt.s32.totalorder %s22, 1
        %s194 = scalar_select %p193, %s22, 1
        %s195 = smul.addr %s194, 36
        %s196 = smul.addr %s192, 72
        %s197 = sadd.s32 %s195, %s196
        %s198 = smul.addr %s197, 8
        %s199 = scalar_lea.vmem %s0, %s198
        %p200 = pneg %p53
        %p201 = pneg %p50
        %p202 = pneg %p74
        %p203 = pneg %p71
        %p204 = pneg %p95
        %p205 = pneg %p92
        %p206 = pneg %p116
        %p207 = pneg %p113
        %p208 = pneg %p144
        %p209 = pneg %p141
        %s210 = sand.u32 %s131, 1
        %s211 = scalar_lea.sflag [#allocation5], %s210
        %s212 = sand.u32 %s131, 1
        %s213 = smul.addr %s212, 256
        %s214 = scalar_lea.vmem [#allocation4], %s213
        %p215 = scmp.lt.s32.totalorder %s23, 7
        %s216 = scalar_select %p215, %s23, 7
        %p217 = scmp.lt.s32.totalorder %s22, 1
        %s218 = scalar_select %p217, %s22, 1
        %s219 = smul.addr %s218, 36
        %s220 = smul.addr %s216, 72
        %s221 = sadd.s32 %s219, %s220
        %s222 = smul.addr %s221, 8
        %s223 = scalar_lea.vmem %s0, %s222
        %p224 = scmp.eq.s32.totalorder %s23, 0
        // Predicated region
        $region37: #{tpu_custom_call.1} parent=35 // pred_check
          %p225 = pneg %p224
        $region38: #{tpu_custom_call.1} parent=35 // pred_check_branch
          %227 = sbr.rel (%p225) target = $region40
        $region39: #{tpu_custom_call.1} parent=35 // pred_region
          %228 = vst [vmem:[#allocation2] sm:$0xff] 0.0
          %229 = vst [vmem:[#allocation2 + $0x8] sm:$0xff] 0.0
          %230 = vst [vmem:[#allocation2 + $0x10] sm:$0xff] 0.0
          %231 = vst [vmem:[#allocation2 + $0x18] sm:$0xff] 0.0
          %232 = vst [vmem:[#allocation2 + $0x20] sm:$0xff] 0.0
          %233 = vst [vmem:[#allocation2 + $0x28] sm:$0xff] 0.0
          %234 = vst [vmem:[#allocation2 + $0x30] sm:$0xff] 0.0
          %235 = vst [vmem:[#allocation2 + $0x38] sm:$0xff] 0.0
          %236 = vst [vmem:[#allocation2 + $0x40] sm:$0xff] 0.0
          %237 = vst [vmem:[#allocation2 + $0x48] sm:$0xff] 0.0
          %238 = vst [vmem:[#allocation2 + $0x50] sm:$0xff] 0.0
          %239 = vst [vmem:[#allocation2 + $0x58] sm:$0xff] 0.0
          %240 = vst [vmem:[#allocation2 + $0x60] sm:$0xff] 0.0
          %241 = vst [vmem:[#allocation2 + $0x68] sm:$0xff] 0.0
          %242 = vst [vmem:[#allocation2 + $0x70] sm:$0xff] 0.0
          %243 = vst [vmem:[#allocation2 + $0x78] sm:$0xff] 0.0
          %244 = vst [vmem:[#allocation2 + $0x80] sm:$0xff] 0.0
          %245 = vst [vmem:[#allocation2 + $0x88] sm:$0xff] 0.0
          %246 = vst [vmem:[#allocation2 + $0x90] sm:$0xff] 0.0
          %247 = vst [vmem:[#allocation2 + $0x98] sm:$0xff] 0.0
          %248 = vst [vmem:[#allocation2 + $0xa0] sm:$0xff] 0.0
          %249 = vst [vmem:[#allocation2 + $0xa8] sm:$0xff] 0.0
          %250 = vst [vmem:[#allocation2 + $0xb0] sm:$0xff] 0.0
          %251 = vst [vmem:[#allocation2 + $0xb8] sm:$0xff] 0.0
          %252 = vst [vmem:[#allocation2 + $0xc0] sm:$0xff] 0.0
          %253 = vst [vmem:[#allocation2 + $0xc8] sm:$0xff] 0.0
          %254 = vst [vmem:[#allocation2 + $0xd0] sm:$0xff] 0.0
          %255 = vst [vmem:[#allocation2 + $0xd8] sm:$0xff] 0.0
          %256 = vst [vmem:[#allocation2 + $0xe0] sm:$0xff] 0.0
          %257 = vst [vmem:[#allocation2 + $0xe8] sm:$0xff] 0.0
          %258 = vst [vmem:[#allocation2 + $0xf0] sm:$0xff] 0.0
          %259 = vst [vmem:[#allocation2 + $0xf8] sm:$0xff] 0.0
          %260 = vst [vmem:[#allocation2 + $0x100] sm:$0xff] 0.0
          %261 = vst [vmem:[#allocation2 + $0x108] sm:$0xff] 0.0
          %262 = vst [vmem:[#allocation2 + $0x110] sm:$0xff] 0.0
          %263 = vst [vmem:[#allocation2 + $0x118] sm:$0xff] 0.0
          %264 = vst [vmem:[#allocation3] sm:$0xff] 0.0
          %265 = vst [vmem:[#allocation3 + $0x8] sm:$0xff] 0.0
          %266 = vst [vmem:[#allocation3 + $0x10] sm:$0xff] 0.0
          %267 = vst [vmem:[#allocation3 + $0x18] sm:$0xff] 0.0
          %268 = vst [vmem:[#allocation3 + $0x20] sm:$0xff] 0.0
          %269 = vst [vmem:[#allocation3 + $0x28] sm:$0xff] 0.0
          %270 = vst [vmem:[#allocation3 + $0x30] sm:$0xff] 0.0
          %271 = vst [vmem:[#allocation3 + $0x38] sm:$0xff] 0.0
          %272 = vst [vmem:[#allocation3 + $0x40] sm:$0xff] 0.0
          %273 = vst [vmem:[#allocation3 + $0x48] sm:$0xff] 0.0
          %274 = vst [vmem:[#allocation3 + $0x50] sm:$0xff] 0.0
          %275 = vst [vmem:[#allocation3 + $0x58] sm:$0xff] 0.0
          %276 = vst [vmem:[#allocation3 + $0x60] sm:$0xff] 0.0
          %277 = vst [vmem:[#allocation3 + $0x68] sm:$0xff] 0.0
          %278 = vst [vmem:[#allocation3 + $0x70] sm:$0xff] 0.0
          %279 = vst [vmem:[#allocation3 + $0x78] sm:$0xff] 0.0
          %280 = vst [vmem:[#allocation3 + $0x80] sm:$0xff] 0.0
          %281 = vst [vmem:[#allocation3 + $0x88] sm:$0xff] 0.0
          %282 = vst [vmem:[#allocation3 + $0x90] sm:$0xff] 0.0
          %283 = vst [vmem:[#allocation3 + $0x98] sm:$0xff] 0.0
          %284 = vst [vmem:[#allocation3 + $0xa0] sm:$0xff] 0.0
          %285 = vst [vmem:[#allocation3 + $0xa8] sm:$0xff] 0.0
          %286 = vst [vmem:[#allocation3 + $0xb0] sm:$0xff] 0.0
          %287 = vst [vmem:[#allocation3 + $0xb8] sm:$0xff] 0.0
          %288 = vst [vmem:[#allocation3 + $0xc0] sm:$0xff] 0.0
          %289 = vst [vmem:[#allocation3 + $0xc8] sm:$0xff] 0.0
          %290 = vst [vmem:[#allocation3 + $0xd0] sm:$0xff] 0.0
          %291 = vst [vmem:[#allocation3 + $0xd8] sm:$0xff] 0.0
          %292 = vst [vmem:[#allocation3 + $0xe0] sm:$0xff] 0.0
          %293 = vst [vmem:[#allocation3 + $0xe8] sm:$0xff] 0.0
          %294 = vst [vmem:[#allocation3 + $0xf0] sm:$0xff] 0.0
          %295 = vst [vmem:[#allocation3 + $0xf8] sm:$0xff] 0.0
        $region40: #{tpu_custom_call.1} parent=35 // pred_fallthru
          _
        %v296 = vld [vmem:[%s223] sm:$0xff]
        %v297 = vld [vmem:[%s223 + $0x8] sm:$0xff]
        %v298 = vld [vmem:[%s223 + $0x10] sm:$0xff]
        %v299 = vld [vmem:[%s223 + $0x18] sm:$0xff]
        %v300 = vld [vmem:[%s223 + $0x20] sm:$0xff]
        %v301 = vld [vmem:[%s223 + $0x28] sm:$0xff]
        %v302 = vld [vmem:[%s223 + $0x30] sm:$0xff]
        %v303 = vld [vmem:[%s223 + $0x38] sm:$0xff]
        %v304 = vld [vmem:[%s223 + $0x40] sm:$0xff]
        %v305 = vld [vmem:[%s223 + $0x48] sm:$0xff]
        %v306 = vld [vmem:[%s223 + $0x50] sm:$0xff]
        %v307 = vld [vmem:[%s223 + $0x58] sm:$0xff]
        %v308 = vld [vmem:[%s223 + $0x60] sm:$0xff]
        %v309 = vld [vmem:[%s223 + $0x68] sm:$0xff]
        %v310 = vld [vmem:[%s223 + $0x70] sm:$0xff]
        %v311 = vld [vmem:[%s223 + $0x78] sm:$0xff]
        %v312 = vld [vmem:[%s223 + $0x80] sm:$0xff]
        %v313 = vld [vmem:[%s223 + $0x88] sm:$0xff]
        %v314 = vld [vmem:[%s223 + $0x90] sm:$0xff]
        %v315 = vld [vmem:[%s223 + $0x98] sm:$0xff]
        %v316 = vld [vmem:[%s223 + $0xa0] sm:$0xff]
        %v317 = vld [vmem:[%s223 + $0xa8] sm:$0xff]
        %v318 = vld [vmem:[%s223 + $0xb0] sm:$0xff]
        %v319 = vld [vmem:[%s223 + $0xb8] sm:$0xff]
        %v320 = vld [vmem:[%s223 + $0xc0] sm:$0xff]
        %v321 = vld [vmem:[%s223 + $0xc8] sm:$0xff]
        %v322 = vld [vmem:[%s223 + $0xd0] sm:$0xff]
        %v323 = vld [vmem:[%s223 + $0xd8] sm:$0xff]
        %v324 = vld [vmem:[%s223 + $0xe0] sm:$0xff]
        %v325 = vld [vmem:[%s223 + $0xe8] sm:$0xff]
        %v326 = vld [vmem:[%s223 + $0xf0] sm:$0xff]
        %v327 = vld [vmem:[%s223 + $0xf8] sm:$0xff]
        %v328 = vld [vmem:[%s223 + $0x100] sm:$0xff]
        %v329 = vld [vmem:[%s223 + $0x108] sm:$0xff]
        %v330 = vld [vmem:[%s223 + $0x110] sm:$0xff]
        %v331 = vld [vmem:[%s223 + $0x118] sm:$0xff]
        %v332 = vld [vmem:[#allocation2] sm:$0xff]
        %v333 = vld [vmem:[#allocation2 + $0x8] sm:$0xff]
        %v334 = vld [vmem:[#allocation2 + $0x10] sm:$0xff]
        %v335 = vld [vmem:[#allocation2 + $0x18] sm:$0xff]
        %v336 = vld [vmem:[#allocation2 + $0x20] sm:$0xff]
        %v337 = vld [vmem:[#allocation2 + $0x28] sm:$0xff]
        %v338 = vld [vmem:[#allocation2 + $0x30] sm:$0xff]
        %v339 = vld [vmem:[#allocation2 + $0x38] sm:$0xff]
        %v340 = vld [vmem:[#allocation2 + $0x40] sm:$0xff]
        %v341 = vld [vmem:[#allocation2 + $0x48] sm:$0xff]
        %v342 = vld [vmem:[#allocation2 + $0x50] sm:$0xff]
        %v343 = vld [vmem:[#allocation2 + $0x58] sm:$0xff]
        %v344 = vld [vmem:[#allocation2 + $0x60] sm:$0xff]
        %v345 = vld [vmem:[#allocation2 + $0x68] sm:$0xff]
        %v346 = vld [vmem:[#allocation2 + $0x70] sm:$0xff]
        %v347 = vld [vmem:[#allocation2 + $0x78] sm:$0xff]
        %v348 = vld [vmem:[#allocation2 + $0x80] sm:$0xff]
        %v349 = vld [vmem:[#allocation2 + $0x88] sm:$0xff]
        %v350 = vld [vmem:[#allocation2 + $0x90] sm:$0xff]
        %v351 = vld [vmem:[#allocation2 + $0x98] sm:$0xff]
        %v352 = vld [vmem:[#allocation2 + $0xa0] sm:$0xff]
        %v353 = vld [vmem:[#allocation2 + $0xa8] sm:$0xff]
        %v354 = vld [vmem:[#allocation2 + $0xb0] sm:$0xff]
        %v355 = vld [vmem:[#allocation2 + $0xb8] sm:$0xff]
        %v356 = vld [vmem:[#allocation2 + $0xc0] sm:$0xff]
        %v357 = vld [vmem:[#allocation2 + $0xc8] sm:$0xff]
        %v358 = vld [vmem:[#allocation2 + $0xd0] sm:$0xff]
        %v359 = vld [vmem:[#allocation2 + $0xd8] sm:$0xff]
        %v360 = vld [vmem:[#allocation2 + $0xe0] sm:$0xff]
        %v361 = vld [vmem:[#allocation2 + $0xe8] sm:$0xff]
        %v362 = vld [vmem:[#allocation2 + $0xf0] sm:$0xff]
        %v363 = vld [vmem:[#allocation2 + $0xf8] sm:$0xff]
        %v364 = vld [vmem:[#allocation2 + $0x100] sm:$0xff]
        %v365 = vld [vmem:[#allocation2 + $0x108] sm:$0xff]
        %v366 = vld [vmem:[#allocation2 + $0x110] sm:$0xff]
        %v367 = vld [vmem:[#allocation2 + $0x118] sm:$0xff]
        %v368 = vld [vmem:[%s1] sm:$0xff]
        %v369 = vld [vmem:[%s1 + $0x8] sm:$0xff]
        %v370 = vld [vmem:[%s1 + $0x10] sm:$0xff]
        %v371 = vld [vmem:[%s1 + $0x18] sm:$0xff]
        %v372 = vld [vmem:[%s1 + $0x20] sm:$0xff]
        %v373 = vld [vmem:[%s1 + $0x28] sm:$0xff]
        %v374 = vld [vmem:[%s1 + $0x30] sm:$0xff]
        %v375 = vld [vmem:[%s1 + $0x38] sm:$0xff]
        %v376 = vld [vmem:[%s1 + $0x40] sm:$0xff]
        %v377 = vld [vmem:[%s2] sm:$0xff]
        %v378 = vld [vmem:[%s2 + $0x8] sm:$0xff]
        %v379 = vld [vmem:[%s2 + $0x10] sm:$0xff]
        %v380 = vld [vmem:[%s2 + $0x18] sm:$0xff]
        %v381 = vld [vmem:[%s2 + $0x20] sm:$0xff]
        %v382 = vld [vmem:[%s2 + $0x28] sm:$0xff]
        %v383 = vld [vmem:[%s2 + $0x30] sm:$0xff]
        %v384 = vld [vmem:[%s2 + $0x38] sm:$0xff]
        %v385 = vld [vmem:[%s2 + $0x40] sm:$0xff]
        %v386 = vld [vmem:[%s2 + $0x48] sm:$0xff]
        %v387 = vld [vmem:[%s2 + $0x50] sm:$0xff]
        %v388 = vld [vmem:[%s2 + $0x58] sm:$0xff]
        %v389 = vld [vmem:[%s2 + $0x60] sm:$0xff]
        %v390 = vld [vmem:[%s2 + $0x68] sm:$0xff]
        %v391 = vld [vmem:[%s2 + $0x70] sm:$0xff]
        %v392 = vld [vmem:[%s2 + $0x78] sm:$0xff]
        %v393 = vld [vmem:[%s2 + $0x80] sm:$0xff]
        %v394 = vld [vmem:[%s2 + $0x88] sm:$0xff]
        %v395 = vld [vmem:[%s2 + $0x90] sm:$0xff]
        %v396 = vld [vmem:[%s2 + $0x98] sm:$0xff]
        %v397 = vld [vmem:[%s2 + $0xa0] sm:$0xff]
        %v398 = vld [vmem:[%s2 + $0xa8] sm:$0xff]
        %v399 = vld [vmem:[%s2 + $0xb0] sm:$0xff]
        %v400 = vld [vmem:[%s2 + $0xb8] sm:$0xff]
        %v401 = vld [vmem:[%s2 + $0xc0] sm:$0xff]
        %v402 = vld [vmem:[%s2 + $0xc8] sm:$0xff]
        %v403 = vld [vmem:[%s2 + $0xd0] sm:$0xff]
        %v404 = vld [vmem:[%s2 + $0xd8] sm:$0xff]
        %v405 = vld [vmem:[%s2 + $0xe0] sm:$0xff]
        %v406 = vld [vmem:[%s2 + $0xe8] sm:$0xff]
        %v407 = vld [vmem:[%s2 + $0xf0] sm:$0xff]
        %v408 = vld [vmem:[%s2 + $0xf8] sm:$0xff]
        %v409 = vld [vmem:[%s2 + $0x100] sm:$0xff]
        %v410 = vld [vmem:[%s2 + $0x108] sm:$0xff]
        %v411 = vld [vmem:[%s2 + $0x110] sm:$0xff]
        %v412 = vld [vmem:[%s2 + $0x118] sm:$0xff]
        %v413 = vld [vmem:[%s2 + $0x120] sm:$0xff]
        %v414 = vld [vmem:[%s2 + $0x128] sm:$0xff]
        %v415 = vld [vmem:[%s2 + $0x130] sm:$0xff]
        %v416 = vld [vmem:[%s2 + $0x138] sm:$0xff]
        %v417 = vld [vmem:[%s2 + $0x140] sm:$0xff]
        %v418 = vld [vmem:[%s2 + $0x148] sm:$0xff]
        %v419 = vld [vmem:[%s2 + $0x150] sm:$0xff]
        %v420 = vld [vmem:[%s2 + $0x158] sm:$0xff]
        %v421 = vld [vmem:[%s2 + $0x160] sm:$0xff]
        %v422 = vld [vmem:[%s2 + $0x168] sm:$0xff]
        %v423 = vld [vmem:[%s2 + $0x170] sm:$0xff]
        %v424 = vld [vmem:[%s2 + $0x178] sm:$0xff]
        %v425 = vld [vmem:[%s2 + $0x180] sm:$0xff]
        %v426 = vld [vmem:[%s2 + $0x188] sm:$0xff]
        %v427 = vld [vmem:[%s2 + $0x190] sm:$0xff]
        %v428 = vld [vmem:[%s2 + $0x198] sm:$0xff]
        %v429 = vld [vmem:[%s2 + $0x1a0] sm:$0xff]
        %v430 = vld [vmem:[%s2 + $0x1a8] sm:$0xff]
        %v431 = vld [vmem:[%s2 + $0x1b0] sm:$0xff]
        %v432 = vld [vmem:[%s2 + $0x1b8] sm:$0xff]
        %v433 = vld [vmem:[%s2 + $0x1c0] sm:$0xff]
        %v434 = vld [vmem:[%s2 + $0x1c8] sm:$0xff]
        %v435 = vld [vmem:[%s2 + $0x1d0] sm:$0xff]
        %v436 = vld [vmem:[%s2 + $0x1d8] sm:$0xff]
        %v437 = vld [vmem:[%s2 + $0x1e0] sm:$0xff]
        %v438 = vld [vmem:[%s2 + $0x1e8] sm:$0xff]
        %v439 = vld [vmem:[%s2 + $0x1f0] sm:$0xff]
        %v440 = vld [vmem:[%s2 + $0x1f8] sm:$0xff]
        %v441 = vld [vmem:[%s2 + $0x200] sm:$0xff]
        %v442 = vld [vmem:[%s2 + $0x208] sm:$0xff]
        %v443 = vld [vmem:[%s2 + $0x210] sm:$0xff]
        %v444 = vld [vmem:[%s2 + $0x218] sm:$0xff]
        %v445 = vld [vmem:[%s2 + $0x220] sm:$0xff]
        %v446 = vld [vmem:[%s2 + $0x228] sm:$0xff]
        %v447 = vld [vmem:[%s2 + $0x230] sm:$0xff]
        %v448 = vld [vmem:[%s2 + $0x238] sm:$0xff]
        %v449 = vld [vmem:[%s2 + $0x240] sm:$0xff]
        %v450 = vld [vmem:[%s2 + $0x248] sm:$0xff]
        %v451 = vld [vmem:[%s2 + $0x250] sm:$0xff]
        %v452 = vld [vmem:[%s2 + $0x258] sm:$0xff]
        %v453 = vld [vmem:[%s2 + $0x260] sm:$0xff]
        %v454 = vld [vmem:[%s2 + $0x268] sm:$0xff]
        %v455 = vld [vmem:[%s2 + $0x270] sm:$0xff]
        %v456 = vld [vmem:[%s2 + $0x278] sm:$0xff]
        %v457 = vld [vmem:[%s2 + $0x280] sm:$0xff]
        %v458 = vld [vmem:[%s2 + $0x288] sm:$0xff]
        %v459 = vld [vmem:[%s2 + $0x290] sm:$0xff]
        %v460 = vld [vmem:[%s2 + $0x298] sm:$0xff]
        %v461 = vld [vmem:[%s2 + $0x2a0] sm:$0xff]
        %v462 = vld [vmem:[%s2 + $0x2a8] sm:$0xff]
        %v463 = vld [vmem:[%s2 + $0x2b0] sm:$0xff]
        %v464 = vld [vmem:[%s2 + $0x2b8] sm:$0xff]
        %v465 = vld [vmem:[%s2 + $0x2c0] sm:$0xff]
        %v466 = vld [vmem:[%s2 + $0x2c8] sm:$0xff]
        %v467 = vld [vmem:[%s2 + $0x2d0] sm:$0xff]
        %v468 = vld [vmem:[%s2 + $0x2d8] sm:$0xff]
        %v469 = vld [vmem:[%s2 + $0x2e0] sm:$0xff]
        %v470 = vld [vmem:[%s2 + $0x2e8] sm:$0xff]
        %v471 = vld [vmem:[%s2 + $0x2f0] sm:$0xff]
        %v472 = vld [vmem:[%s2 + $0x2f8] sm:$0xff]
        %v473 = vld [vmem:[%s2 + $0x300] sm:$0xff]
        %v474 = vld [vmem:[%s2 + $0x308] sm:$0xff]
        %v475 = vld [vmem:[%s2 + $0x310] sm:$0xff]
        %v476 = vld [vmem:[%s2 + $0x318] sm:$0xff]
        %v477 = vld [vmem:[%s2 + $0x320] sm:$0xff]
        %v478 = vld [vmem:[%s2 + $0x328] sm:$0xff]
        %v479 = vld [vmem:[%s2 + $0x330] sm:$0xff]
        %v480 = vld [vmem:[%s2 + $0x338] sm:$0xff]
        %v481 = vld [vmem:[%s2 + $0x340] sm:$0xff]
        %v482 = vld [vmem:[%s2 + $0x348] sm:$0xff]
        %v483 = vld [vmem:[%s2 + $0x350] sm:$0xff]
        %v484 = vld [vmem:[%s2 + $0x358] sm:$0xff]
        %v485 = vld [vmem:[%s2 + $0x360] sm:$0xff]
        %v486 = vld [vmem:[%s2 + $0x368] sm:$0xff]
        %v487 = vld [vmem:[%s2 + $0x370] sm:$0xff]
        %v488 = vld [vmem:[%s2 + $0x378] sm:$0xff]
        %v489 = vld [vmem:[%s2 + $0x380] sm:$0xff]
        %v490 = vld [vmem:[%s2 + $0x388] sm:$0xff]
        %v491 = vld [vmem:[%s2 + $0x390] sm:$0xff]
        %v492 = vld [vmem:[%s2 + $0x398] sm:$0xff]
        %v493 = vld [vmem:[%s2 + $0x3a0] sm:$0xff]
        %v494 = vld [vmem:[%s2 + $0x3a8] sm:$0xff]
        %v495 = vld [vmem:[%s2 + $0x3b0] sm:$0xff]
        %v496 = vld [vmem:[%s2 + $0x3b8] sm:$0xff]
        %v497 = vld [vmem:[%s2 + $0x3c0] sm:$0xff]
        %v498 = vld [vmem:[%s2 + $0x3c8] sm:$0xff]
        %v499 = vld [vmem:[%s2 + $0x3d0] sm:$0xff]
        %v500 = vld [vmem:[%s2 + $0x3d8] sm:$0xff]
        %v501 = vld [vmem:[%s2 + $0x3e0] sm:$0xff]
        %v502 = vld [vmem:[%s2 + $0x3e8] sm:$0xff]
        %v503 = vld [vmem:[%s2 + $0x3f0] sm:$0xff]
        %v504 = vld [vmem:[%s2 + $0x3f8] sm:$0xff]
        %v505 = vld [vmem:[%s2 + $0x400] sm:$0xff]
        %v506 = vld [vmem:[%s2 + $0x408] sm:$0xff]
        %v507 = vld [vmem:[%s2 + $0x410] sm:$0xff]
        %v508 = vld [vmem:[%s2 + $0x418] sm:$0xff]
        %v509 = vld [vmem:[%s2 + $0x420] sm:$0xff]
        %v510 = vld [vmem:[%s2 + $0x428] sm:$0xff]
        %v511 = vld [vmem:[%s2 + $0x430] sm:$0xff]
        %v512 = vld [vmem:[%s2 + $0x438] sm:$0xff]
        %v513 = vld [vmem:[%s2 + $0x440] sm:$0xff]
        %v514 = vld [vmem:[%s2 + $0x448] sm:$0xff]
        %v515 = vld [vmem:[%s2 + $0x450] sm:$0xff]
        %v516 = vld [vmem:[%s2 + $0x458] sm:$0xff]
        %v517 = vld [vmem:[%s2 + $0x460] sm:$0xff]
        %v518 = vld [vmem:[%s2 + $0x468] sm:$0xff]
        %v519 = vld [vmem:[%s2 + $0x470] sm:$0xff]
        %v520 = vld [vmem:[%s2 + $0x478] sm:$0xff]
        %521 = vmatprep.subr.mxu0 %v378
        %522 = vmatpush1.msra.mxu0 %v377
        %523 = vmatprep.subr.mxu0 %v387
        %524 = vmatpush1.msra.mxu0 %v386
        %525 = vmatprep.subr.mxu0 %v396
        %526 = vmatpush1.msra.mxu0 %v395
        %527 = vmatprep.subr.mxu0 %v405
        %528 = vmatpush1.msra.mxu0 %v404
        %529 = vmatprep.subr.mxu0 %v414
        %530 = vmatpush1.msra.mxu0 %v413
        %531 = vmatprep.subr.mxu0 %v423
        %532 = vmatpush1.msra.mxu0 %v422
        %533 = vmatprep.subr.mxu0 %v432
        %534 = vmatpush1.msra.mxu0 %v431
        %535 = vmatprep.subr.mxu0 %v441
        %536 = vmatpush1.msra.mxu0 %v440
        %537 = vmatprep.subr.mxu0 %v450
        %538 = vmatpush1.msra.mxu0 %v449
        %539 = vmatprep.subr.mxu0 %v459
        %540 = vmatpush1.msra.mxu0 %v458
        %541 = vmatprep.subr.mxu0 %v468
        %542 = vmatpush1.msra.mxu0 %v467
        %543 = vmatprep.subr.mxu0 %v477
        %544 = vmatpush1.msra.mxu0 %v476
        %545 = vmatprep.subr.mxu0 %v486
        %546 = vmatpush1.msra.mxu0 %v485
        %547 = vmatprep.subr.mxu0 %v495
        %548 = vmatpush1.msra.mxu0 %v494
        %549 = vmatprep.subr.mxu0 %v504
        %550 = vmatpush1.msra.mxu0 %v503
        %551 = vmatprep.subr.mxu0 %v513
        %552 = vmatpush1.msra.mxu0 %v512
        %553 = vmatprep.subr.mxu0 0.0
        %554 = vmatpush1.msra.mxu0 0.0
        %555 = vmatprep.subr.mxu0 0.0
        %556 = vmatpush1.msra.mxu0 0.0
        %557 = vmatprep.subr.mxu0 0.0
        %558 = vmatpush1.msra.mxu0 0.0
        %559 = vmatprep.subr.mxu0 0.0
        %560 = vmatpush1.msra.mxu0 0.0
        %561 = vmatprep.subr.mxu0 0.0
        %562 = vmatpush1.msra.mxu0 0.0
        %563 = vmatprep.subr.mxu0 0.0
        %564 = vmatpush1.msra.mxu0 0.0
        %565 = vmatprep.subr.mxu0 0.0
        %566 = vmatpush1.msra.mxu0 0.0
        %567 = vmatprep.subr.mxu0 0.0
        %568 = vmatpush1.msra.mxu0 0.0
        %569 = vmatprep.subr.mxu0 0.0
        %570 = vmatpush1.msra.mxu0 0.0
        %571 = vmatprep.subr.mxu0 0.0
        %572 = vmatpush1.msra.mxu0 0.0
        %573 = vmatprep.subr.mxu0 0.0
        %574 = vmatpush1.msra.mxu0 0.0
        %575 = vmatprep.subr.mxu0 0.0
        %576 = vmatpush1.msra.mxu0 0.0
        %577 = vmatprep.subr.mxu0 0.0
        %578 = vmatpush1.msra.mxu0 0.0
        %579 = vmatprep.subr.mxu0 0.0
        %580 = vmatpush1.msra.mxu0 0.0
        %581 = vmatprep.subr.mxu0 0.0
        %582 = vmatpush1.msra.mxu0 0.0
        %583 = vmatprep.subr.mxu0 0.0
        %584 = vmatpush1.msra.mxu0 0.0
        %585 = vmatprep.mubr.f32.mxu0 0.0
        %586 = vmatmul.mubr.f32.gmra.mrb[0].mxu0 %v332
        %v587 = vpop.f32.mrb[0].mxu0
        %v588 = vadd.f32 0.0, %v587
        %v589 = vpop.f32.mrb[0].mxu0
        %v590 = vadd.f32 0.0, %v589
        %591 = vmatprep.mubr.f32.mxu0 0.0
        %592 = vmatmul.mubr.f32.gmra.mrb[0].mxu0 %v333
        %v593 = vpop.f32.mrb[0].mxu0
        %v594 = vadd.f32 0.0, %v593
        %v595 = vpop.f32.mrb[0].mxu0
        %v596 = vadd.f32 0.0, %v595
        %597 = vmatprep.mubr.f32.mxu0 0.0
        %598 = vmatmul.mubr.f32.gmra.mrb[0].mxu0 %v334
        %v599 = vpop.f32.mrb[0].mxu0
        %v600 = vadd.f32 0.0, %v599
        %v601 = vpop.f32.mrb[0].mxu0
        %v602 = vadd.f32 0.0, %v601
        %603 = vmatprep.mubr.f32.mxu0 0.0
        %604 = vmatmul.mubr.f32.gmra.mrb[0].mxu0 %v335
        %v605 = vpop.f32.mrb[0].mxu0
        %v606 = vadd.f32 0.0, %v605
        %v607 = vpop.f32.mrb[0].mxu0
        %v608 = vadd.f32 0.0, %v607
        %609 = vmatprep.mubr.f32.mxu0 0.0
        %610 = vmatmul.mubr.f32.gmra.mrb[0].mxu0 %v336
        %v611 = vpop.f32.mrb[0].mxu0
        %v612 = vadd.f32 0.0, %v611
        %v613 = vpop.f32.mrb[0].mxu0
        %v614 = vadd.f32 0.0, %v613
        %615 = vmatprep.mubr.f32.mxu0 0.0
        %616 = vmatmul.mubr.f32.gmra.mrb[0].mxu0 %v337
        %v617 = vpop.f32.mrb[0].mxu0
        %v618 = vadd.f32 0.0, %v617
        %v619 = vpop.f32.mrb[0].mxu0
        %v620 = vadd.f32 0.0, %v619
        %621 = vmatprep.mubr.f32.mxu0 0.0
        %622 = vmatmul.mubr.f32.gmra.mrb[0].mxu0 %v338
        %v623 = vpop.f32.mrb[0].mxu0
        %v624 = vadd.f32 0.0, %v623
        %v625 = vpop.f32.mrb[0].mxu0
        %v626 = vadd.f32 0.0, %v625
        %627 = vmatprep.mubr.f32.mxu0 0.0
        %628 = vmatmul.mubr.f32.gmra.mrb[0].mxu0 %v339
        %v629 = vpop.f32.mrb[0].mxu0
        %v630 = vadd.f32 0.0, %v629
        %v631 = vpop.f32.mrb[0].mxu0
        %v632 = vadd.f32 0.0, %v631
        %633 = vmatprep.mubr.f32.mxu0 0.0
        %634 = vmatmul.mubr.f32.gmra.mrb[0].mxu0 %v340
        %v635 = vpop.f32.mrb[0].mxu0
        %v636 = vadd.f32 0.0, %v635
        %v637 = vpop.f32.mrb[0].mxu0
        %v638 = vadd.f32 0.0, %v637
        %639 = vmatprep.mubr.f32.mxu0 0.0
        %640 = vmatmul.mubr.f32.gmra.mrb[0].mxu0 %v341
        %v641 = vpop.f32.mrb[0].mxu0
        %v642 = vadd.f32 0.0, %v641
        %v643 = vpop.f32.mrb[0].mxu0
        %v644 = vadd.f32 0.0, %v643
        %645 = vmatprep.mubr.f32.mxu0 0.0
        %646 = vmatmul.mubr.f32.gmra.mrb[0].mxu0 %v342
        %v647 = vpop.f32.mrb[0].mxu0
        %v648 = vadd.f32 0.0, %v647
        %v649 = vpop.f32.mrb[0].mxu0
        %v650 = vadd.f32 0.0, %v649
        %651 = vmatprep.mubr.f32.mxu0 0.0
        %652 = vmatmul.mubr.f32.gmra.mrb[0].mxu0 %v343
        %v653 = vpop.f32.mrb[0].mxu0
        %v654 = vadd.f32 0.0, %v653
        %v655 = vpop.f32.mrb[0].mxu0
        %v656 = vadd.f32 0.0, %v655
        %657 = vmatprep.mubr.f32.mxu0 0.0
        %658 = vmatmul.mubr.f32.gmra.mrb[0].mxu0 %v344
        %v659 = vpop.f32.mrb[0].mxu0
        %v660 = vadd.f32 0.0, %v659
        %v661 = vpop.f32.mrb[0].mxu0
        %v662 = vadd.f32 0.0, %v661
        %663 = vmatprep.mubr.f32.mxu0 0.0
        %664 = vmatmul.mubr.f32.gmra.mrb[0].mxu0 %v345
        %v665 = vpop.f32.mrb[0].mxu0
        %v666 = vadd.f32 0.0, %v665
        %v667 = vpop.f32.mrb[0].mxu0
        %v668 = vadd.f32 0.0, %v667
        %669 = vmatprep.mubr.f32.mxu0 0.0
        %670 = vmatmul.mubr.f32.gmra.mrb[0].mxu0 %v346
        %v671 = vpop.f32.mrb[0].mxu0
        %v672 = vadd.f32 0.0, %v671
        %v673 = vpop.f32.mrb[0].mxu0
        %v674 = vadd.f32 0.0, %v673
        %675 = vmatprep.mubr.f32.mxu0 0.0
        %676 = vmatmul.mubr.f32.gmra.mrb[0].mxu0 %v347
        %v677 = vpop.f32.mrb[0].mxu0
        %v678 = vadd.f32 0.0, %v677
        %v679 = vpop.f32.mrb[0].mxu0
        %v680 = vadd.f32 0.0, %v679
        %681 = vmatprep.mubr.f32.mxu0 0.0
        %682 = vmatmul.mubr.f32.gmra.mrb[0].mxu0 %v348
        %v683 = vpop.f32.mrb[0].mxu0
        %v684 = vadd.f32 0.0, %v683
        %v685 = vpop.f32.mrb[0].mxu0
        %v686 = vadd.f32 0.0, %v685
        %687 = vmatprep.mubr.f32.mxu0 0.0
        %688 = vmatmul.mubr.f32.gmra.mrb[0].mxu0 %v349
        %v689 = vpop.f32.mrb[0].mxu0
        %v690 = vadd.f32 0.0, %v689
        %v691 = vpop.f32.mrb[0].mxu0
        %v692 = vadd.f32 0.0, %v691
        %693 = vmatprep.mubr.f32.mxu0 0.0
        %694 = vmatmul.mubr.f32.gmra.mrb[0].mxu0 %v350
        %v695 = vpop.f32.mrb[0].mxu0
        %v696 = vadd.f32 0.0, %v695
        %v697 = vpop.f32.mrb[0].mxu0
        %v698 = vadd.f32 0.0, %v697
        %699 = vmatprep.mubr.f32.mxu0 0.0
        %700 = vmatmul.mubr.f32.gmra.mrb[0].mxu0 %v351
        %v701 = vpop.f32.mrb[0].mxu0
        %v702 = vadd.f32 0.0, %v701
        %v703 = vpop.f32.mrb[0].mxu0
        %v704 = vadd.f32 0.0, %v703
        %705 = vmatprep.mubr.f32.mxu0 0.0
        %706 = vmatmul.mubr.f32.gmra.mrb[0].mxu0 %v352
        %v707 = vpop.f32.mrb[0].mxu0
        %v708 = vadd.f32 0.0, %v707
        %v709 = vpop.f32.mrb[0].mxu0
        %v710 = vadd.f32 0.0, %v709
        %711 = vmatprep.mubr.f32.mxu0 0.0
        %712 = vmatmul.mubr.f32.gmra.mrb[0].mxu0 %v353
        %v713 = vpop.f32.mrb[0].mxu0
        %v714 = vadd.f32 0.0, %v713
        %v715 = vpop.f32.mrb[0].mxu0
        %v716 = vadd.f32 0.0, %v715
        %717 = vmatprep.mubr.f32.mxu0 0.0
        %718 = vmatmul.mubr.f32.gmra.mrb[0].mxu0 %v354
        %v719 = vpop.f32.mrb[0].mxu0
        %v720 = vadd.f32 0.0, %v719
        %v721 = vpop.f32.mrb[0].mxu0
        %v722 = vadd.f32 0.0, %v721
        %723 = vmatprep.mubr.f32.mxu0 0.0
        %724 = vmatmul.mubr.f32.gmra.mrb[0].mxu0 %v355
        %v725 = vpop.f32.mrb[0].mxu0
        %v726 = vadd.f32 0.0, %v725
        %v727 = vpop.f32.mrb[0].mxu0
        %v728 = vadd.f32 0.0, %v727
        %729 = vmatprep.mubr.f32.mxu0 0.0
        %730 = vmatmul.mubr.f32.gmra.mrb[0].mxu0 %v356
        %v731 = vpop.f32.mrb[0].mxu0
        %v732 = vadd.f32 0.0, %v731
        %v733 = vpop.f32.mrb[0].mxu0
        %v734 = vadd.f32 0.0, %v733
        %735 = vmatprep.mubr.f32.mxu0 0.0
        %736 = vmatmul.mubr.f32.gmra.mrb[0].mxu0 %v357
        %v737 = vpop.f32.mrb[0].mxu0
        %v738 = vadd.f32 0.0, %v737
        %v739 = vpop.f32.mrb[0].mxu0
        %v740 = vadd.f32 0.0, %v739
        %741 = vmatprep.mubr.f32.mxu0 0.0
        %742 = vmatmul.mubr.f32.gmra.mrb[0].mxu0 %v358
        %v743 = vpop.f32.mrb[0].mxu0
        %v744 = vadd.f32 0.0, %v743
        %v745 = vpop.f32.mrb[0].mxu0
        %v746 = vadd.f32 0.0, %v745
        %747 = vmatprep.mubr.f32.mxu0 0.0
        %748 = vmatmul.mubr.f32.gmra.mrb[0].mxu0 %v359
        %v749 = vpop.f32.mrb[0].mxu0
        %v750 = vadd.f32 0.0, %v749
        %v751 = vpop.f32.mrb[0].mxu0
        %v752 = vadd.f32 0.0, %v751
        %753 = vmatprep.mubr.f32.mxu0 0.0
        %754 = vmatmul.mubr.f32.gmra.mrb[0].mxu0 %v360
        %v755 = vpop.f32.mrb[0].mxu0
        %v756 = vadd.f32 0.0, %v755
        %v757 = vpop.f32.mrb[0].mxu0
        %v758 = vadd.f32 0.0, %v757
        %759 = vmatprep.mubr.f32.mxu0 0.0
        %760 = vmatmul.mubr.f32.gmra.mrb[0].mxu0 %v361
        %v761 = vpop.f32.mrb[0].mxu0
        %v762 = vadd.f32 0.0, %v761
        %v763 = vpop.f32.mrb[0].mxu0
        %v764 = vadd.f32 0.0, %v763
        %765 = vmatprep.mubr.f32.mxu0 0.0
        %766 = vmatmul.mubr.f32.gmra.mrb[0].mxu0 %v362
        %v767 = vpop.f32.mrb[0].mxu0
        %v768 = vadd.f32 0.0, %v767
        %v769 = vpop.f32.mrb[0].mxu0
        %v770 = vadd.f32 0.0, %v769
        %771 = vmatprep.mubr.f32.mxu0 0.0
        %772 = vmatmul.mubr.f32.gmra.mrb[0].mxu0 %v363
        %v773 = vpop.f32.mrb[0].mxu0
        %v774 = vadd.f32 0.0, %v773
        %v775 = vpop.f32.mrb[0].mxu0
        %v776 = vadd.f32 0.0, %v775
        %777 = vmatprep.mubr.f32.mxu0 0.0
        %778 = vmatmul.mubr.f32.gmra.mrb[0].mxu0 %v364
        %v779 = vpop.f32.mrb[0].mxu0
        %v780 = vpop.f32.mrb[0].mxu0
        %781 = vmatprep.mubr.f32.mxu0 0.0
        %782 = vmatmul.mubr.f32.gmra.mrb[0].mxu0 %v365
        %v783 = vpop.f32.mrb[0].mxu0
        %v784 = vpop.f32.mrb[0].mxu0
        %785 = vmatprep.mubr.f32.mxu0 0.0
        %786 = vmatmul.mubr.f32.gmra.mrb[0].mxu0 %v366
        %v787 = vpop.f32.mrb[0].mxu0
        %v788 = vpop.f32.mrb[0].mxu0
        %789 = vmatprep.mubr.f32.mxu0 0.0
        %790 = vmatmul.mubr.f32.gmra.mrb[0].mxu0 %v367
        %v791 = vpop.f32.mrb[0].mxu0
        %v792 = vpop.f32.mrb[0].mxu0
        %793 = vdwg.mxu0
        %794 = vmatprep.subr.mxu0 %v380
        %795 = vmatpush1.msra.mxu0 %v379
        %796 = vmatprep.subr.mxu0 %v389
        %797 = vmatpush1.msra.mxu0 %v388
        %798 = vmatprep.subr.mxu0 %v398
        %799 = vmatpush1.msra.mxu0 %v397
        %800 = vmatprep.subr.mxu0 %v407
        %801 = vmatpush1.msra.mxu0 %v406
        %802 = vmatprep.subr.mxu0 %v416
        %803 = vmatpush1.msra.mxu0 %v415
        %804 = vmatprep.subr.mxu0 %v425
        %805 = vmatpush1.msra.mxu0 %v424
        %806 = vmatprep.subr.mxu0 %v434
        %807 = vmatpush1.msra.mxu0 %v433
        %808 = vmatprep.subr.mxu0 %v443
        %809 = vmatpush1.msra.mxu0 %v442
        %810 = vmatprep.subr.mxu0 %v452
        %811 = vmatpush1.msra.mxu0 %v451
        %812 = vmatprep.subr.mxu0 %v461
        %813 = vmatpush1.msra.mxu0 %v460
        %814 = vmatprep.subr.mxu0 %v470
        %815 = vmatpush1.msra.mxu0 %v469
        %816 = vmatprep.subr.mxu0 %v479
        %817 = vmatpush1.msra.mxu0 %v478
        %818 = vmatprep.subr.mxu0 %v488
        %819 = vmatpush1.msra.mxu0 %v487
        %820 = vmatprep.subr.mxu0 %v497
        %821 = vmatpush1.msra.mxu0 %v496
        %822 = vmatprep.subr.mxu0 %v506
        %823 = vmatpush1.msra.mxu0 %v505
        %824 = vmatprep.subr.mxu0 %v515
        %825 = vmatpush1.msra.mxu0 %v514
        %826 = vmatprep.subr.mxu0 0.0
        %827 = vmatpush1.msra.mxu0 0.0
        %828 = vmatprep.subr.mxu0 0.0
        %829 = vmatpush1.msra.mxu0 0.0
        %830 = vmatprep.subr.mxu0 0.0
        %831 = vmatpush1.msra.mxu0 0.0
        %832 = vmatprep.subr.mxu0 0.0
        %833 = vmatpush1.msra.mxu0 0.0
        %834 = vmatprep.subr.mxu0 0.0
        %835 = vmatpush1.msra.mxu0 0.0
        %836 = vmatprep.subr.mxu0 0.0
        %837 = vmatpush1.msra.mxu0 0.0
        %838 = vmatprep.subr.mxu0 0.0
        %839 = vmatpush1.msra.mxu0 0.0
        %840 = vmatprep.subr.mxu0 0.0
        %841 = vmatpush1.msra.mxu0 0.0
        %842 = vmatprep.subr.mxu0 0.0
        %843 = vmatpush1.msra.mxu0 0.0
        %844 = vmatprep.subr.mxu0 0.0
        %845 = vmatpush1.msra.mxu0 0.0
        %846 = vmatprep.subr.mxu0 0.0
        %847 = vmatpush1.msra.mxu0 0.0
        %848 = vmatprep.subr.mxu0 0.0
        %849 = vmatpush1.msra.mxu0 0.0
        %850 = vmatprep.subr.mxu0 0.0
        %851 = vmatpush1.msra.mxu0 0.0
        %852 = vmatprep.subr.mxu0 0.0
        %853 = vmatpush1.msra.mxu0 0.0
        %854 = vmatprep.subr.mxu0 0.0
        %855 = vmatpush1.msra.mxu0 0.0
        %856 = vmatprep.subr.mxu0 0.0
        %857 = vmatpush1.msra.mxu0 0.0
        %858 = vmatprep.mubr.f32.mxu0 0.0
        %859 = vmatmul.mubr.f32.gmra.mrb[0].mxu0 %v332
        %v860 = vpop.f32.mrb[0].mxu0
        %v861 = vadd.f32 0.0, %v860
        %v862 = vpop.f32.mrb[0].mxu0
        %863 = vmatprep.mubr.f32.mxu0 0.0
        %864 = vmatmul.mubr.f32.gmra.mrb[0].mxu0 %v333
        %v865 = vpop.f32.mrb[0].mxu0
        %v866 = vadd.f32 0.0, %v865
        %v867 = vpop.f32.mrb[0].mxu0
        %868 = vmatprep.mubr.f32.mxu0 0.0
        %869 = vmatmul.mubr.f32.gmra.mrb[0].mxu0 %v334
        %v870 = vpop.f32.mrb[0].mxu0
        %v871 = vadd.f32 0.0, %v870
        %v872 = vpop.f32.mrb[0].mxu0
        %v873 = vadd.f32 0.0, %v872
        %874 = vmatprep.mubr.f32.mxu0 0.0
        %875 = vmatmul.mubr.f32.gmra.mrb[0].mxu0 %v335
        %v876 = vpop.f32.mrb[0].mxu0
        %v877 = vadd.f32 0.0, %v876
        %v878 = vpop.f32.mrb[0].mxu0
        %v879 = vadd.f32 0.0, %v878
        %880 = vmatprep.mubr.f32.mxu0 0.0
        %881 = vmatmul.mubr.f32.gmra.mrb[0].mxu0 %v336
        %v882 = vpop.f32.mrb[0].mxu0
        %v883 = vadd.f32 0.0, %v882
        %v884 = vpop.f32.mrb[0].mxu0
        %v885 = vadd.f32 0.0, %v884
        %886 = vmatprep.mubr.f32.mxu0 0.0
        %887 = vmatmul.mubr.f32.gmra.mrb[0].mxu0 %v337
        %v888 = vpop.f32.mrb[0].mxu0
        %v889 = vadd.f32 0.0, %v888
        %v890 = vpop.f32.mrb[0].mxu0
        %v891 = vadd.f32 0.0, %v890
        %892 = vmatprep.mubr.f32.mxu0 0.0
        %893 = vmatmul.mubr.f32.gmra.mrb[0].mxu0 %v338
        %v894 = vpop.f32.mrb[0].mxu0
        %v895 = vadd.f32 0.0, %v894
        %v896 = vpop.f32.mrb[0].mxu0
        %v897 = vadd.f32 0.0, %v896
        %898 = vmatprep.mubr.f32.mxu0 0.0
        %899 = vmatmul.mubr.f32.gmra.mrb[0].mxu0 %v339
        %v900 = vpop.f32.mrb[0].mxu0
        %v901 = vadd.f32 0.0, %v900
        %v902 = vpop.f32.mrb[0].mxu0
        %v903 = vadd.f32 0.0, %v902
        %904 = vmatprep.mubr.f32.mxu0 0.0
        %905 = vmatmul.mubr.f32.gmra.mrb[0].mxu0 %v340
        %v906 = vpop.f32.mrb[0].mxu0
        %v907 = vadd.f32 0.0, %v906
        %v908 = vpop.f32.mrb[0].mxu0
        %v909 = vadd.f32 0.0, %v908
        %910 = vmatprep.mubr.f32.mxu0 0.0
        %911 = vmatmul.mubr.f32.gmra.mrb[0].mxu0 %v341
        %v912 = vpop.f32.mrb[0].mxu0
        %v913 = vadd.f32 0.0, %v912
        %v914 = vpop.f32.mrb[0].mxu0
        %v915 = vadd.f32 0.0, %v914
        %916 = vmatprep.mubr.f32.mxu0 0.0
        %917 = vmatmul.mubr.f32.gmra.mrb[0].mxu0 %v342
        %v918 = vpop.f32.mrb[0].mxu0
        %v919 = vadd.f32 0.0, %v918
        %v920 = vpop.f32.mrb[0].mxu0
        %v921 = vadd.f32 0.0, %v920
        %922 = vmatprep.mubr.f32.mxu0 0.0
        %923 = vmatmul.mubr.f32.gmra.mrb[0].mxu0 %v343
        %v924 = vpop.f32.mrb[0].mxu0
        %v925 = vadd.f32 0.0, %v924
        %v926 = vpop.f32.mrb[0].mxu0
        %v927 = vadd.f32 0.0, %v926
        %928 = vmatprep.mubr.f32.mxu0 0.0
        %929 = vmatmul.mubr.f32.gmra.mrb[0].mxu0 %v344
        %v930 = vpop.f32.mrb[0].mxu0
        %v931 = vadd.f32 0.0, %v930
        %v932 = vpop.f32.mrb[0].mxu0
        %v933 = vadd.f32 0.0, %v932
        %934 = vmatprep.mubr.f32.mxu0 0.0
        %935 = vmatmul.mubr.f32.gmra.mrb[0].mxu0 %v345
        %v936 = vpop.f32.mrb[0].mxu0
        %v937 = vadd.f32 0.0, %v936
        %v938 = vpop.f32.mrb[0].mxu0
        %v939 = vadd.f32 0.0, %v938
        %940 = vmatprep.mubr.f32.mxu0 0.0
        %941 = vmatmul.mubr.f32.gmra.mrb[0].mxu0 %v346
        %v942 = vpop.f32.mrb[0].mxu0
        %v943 = vadd.f32 0.0, %v942
        %v944 = vpop.f32.mrb[0].mxu0
        %v945 = vadd.f32 0.0, %v944
        %946 = vmatprep.mubr.f32.mxu0 0.0
        %947 = vmatmul.mubr.f32.gmra.mrb[0].mxu0 %v347
        %v948 = vpop.f32.mrb[0].mxu0
        %v949 = vadd.f32 0.0, %v948
        %v950 = vpop.f32.mrb[0].mxu0
        %v951 = vadd.f32 0.0, %v950
        %952 = vmatprep.mubr.f32.mxu0 0.0
        %953 = vmatmul.mubr.f32.gmra.mrb[0].mxu0 %v348
        %v954 = vpop.f32.mrb[0].mxu0
        %v955 = vadd.f32 0.0, %v954
        %v956 = vpop.f32.mrb[0].mxu0
        %v957 = vadd.f32 0.0, %v956
        %958 = vmatprep.mubr.f32.mxu0 0.0
        %959 = vmatmul.mubr.f32.gmra.mrb[0].mxu0 %v349
        %v960 = vpop.f32.mrb[0].mxu0
        %v961 = vadd.f32 0.0, %v960
        %v962 = vpop.f32.mrb[0].mxu0
        %v963 = vadd.f32 0.0, %v962
        %964 = vmatprep.mubr.f32.mxu0 0.0
        %965 = vmatmul.mubr.f32.gmra.mrb[0].mxu0 %v350
        %v966 = vpop.f32.mrb[0].mxu0
        %v967 = vadd.f32 0.0, %v966
        %v968 = vpop.f32.mrb[0].mxu0
        %v969 = vadd.f32 0.0, %v968
        %970 = vmatprep.mubr.f32.mxu0 0.0
        %971 = vmatmul.mubr.f32.gmra.mrb[0].mxu0 %v351
        %v972 = vpop.f32.mrb[0].mxu0
        %v973 = vadd.f32 0.0, %v972
        %v974 = vpop.f32.mrb[0].mxu0
        %v975 = vadd.f32 0.0, %v974
        %976 = vmatprep.mubr.f32.mxu0 0.0
        %977 = vmatmul.mubr.f32.gmra.mrb[0].mxu0 %v352
        %v978 = vpop.f32.mrb[0].mxu0
        %v979 = vadd.f32 0.0, %v978
        %v980 = vpop.f32.mrb[0].mxu0
        %v981 = vadd.f32 0.0, %v980
        %982 = vmatprep.mubr.f32.mxu0 0.0
        %983 = vmatmul.mubr.f32.gmra.mrb[0].mxu0 %v353
        %v984 = vpop.f32.mrb[0].mxu0
        %v985 = vadd.f32 0.0, %v984
        %v986 = vpop.f32.mrb[0].mxu0
        %v987 = vadd.f32 0.0, %v986
        %988 = vmatprep.mubr.f32.mxu0 0.0
        %989 = vmatmul.mubr.f32.gmra.mrb[0].mxu0 %v354
        %v990 = vpop.f32.mrb[0].mxu0
        %v991 = vadd.f32 0.0, %v990
        %v992 = vpop.f32.mrb[0].mxu0
        %v993 = vadd.f32 0.0, %v992
        %994 = vmatprep.mubr.f32.mxu0 0.0
        %995 = vmatmul.mubr.f32.gmra.mrb[0].mxu0 %v355
        %v996 = vpop.f32.mrb[0].mxu0
        %v997 = vadd.f32 0.0, %v996
        %v998 = vpop.f32.mrb[0].mxu0
        %v999 = vadd.f32 0.0, %v998
        %1000 = vmatprep.mubr.f32.mxu0 0.0
        %1001 = vmatmul.mubr.f32.gmra.mrb[0].mxu0 %v356
        %v1002 = vpop.f32.mrb[0].mxu0
        %v1003 = vadd.f32 0.0, %v1002
        %v1004 = vpop.f32.mrb[0].mxu0
        %v1005 = vadd.f32 0.0, %v1004
        %1006 = vmatprep.mubr.f32.mxu0 0.0
        %1007 = vmatmul.mubr.f32.gmra.mrb[0].mxu0 %v357
        %v1008 = vpop.f32.mrb[0].mxu0
        %v1009 = vadd.f32 0.0, %v1008
        %v1010 = vpop.f32.mrb[0].mxu0
        %v1011 = vadd.f32 0.0, %v1010
        %1012 = vmatprep.mubr.f32.mxu0 0.0
        %1013 = vmatmul.mubr.f32.gmra.mrb[0].mxu0 %v358
        %v1014 = vpop.f32.mrb[0].mxu0
        %v1015 = vadd.f32 0.0, %v1014
        %v1016 = vpop.f32.mrb[0].mxu0
        %v1017 = vadd.f32 0.0, %v1016
        %1018 = vmatprep.mubr.f32.mxu0 0.0
        %1019 = vmatmul.mubr.f32.gmra.mrb[0].mxu0 %v359
        %v1020 = vpop.f32.mrb[0].mxu0
        %v1021 = vadd.f32 0.0, %v1020
        %v1022 = vpop.f32.mrb[0].mxu0
        %v1023 = vadd.f32 0.0, %v1022
        %1024 = vmatprep.mubr.f32.mxu0 0.0
        %1025 = vmatmul.mubr.f32.gmra.mrb[0].mxu0 %v360
        %v1026 = vpop.f32.mrb[0].mxu0
        %v1027 = vadd.f32 0.0, %v1026
        %v1028 = vpop.f32.mrb[0].mxu0
        %v1029 = vadd.f32 0.0, %v1028
        %1030 = vmatprep.mubr.f32.mxu0 0.0
        %1031 = vmatmul.mubr.f32.gmra.mrb[0].mxu0 %v361
        %v1032 = vpop.f32.mrb[0].mxu0
        %v1033 = vadd.f32 0.0, %v1032
        %v1034 = vpop.f32.mrb[0].mxu0
        %v1035 = vadd.f32 0.0, %v1034
        %1036 = vmatprep.mubr.f32.mxu0 0.0
        %1037 = vmatmul.mubr.f32.gmra.mrb[0].mxu0 %v362
        %v1038 = vpop.f32.mrb[0].mxu0
        %v1039 = vadd.f32 0.0, %v1038
        %v1040 = vpop.f32.mrb[0].mxu0
        %v1041 = vadd.f32 0.0, %v1040
        %1042 = vmatprep.mubr.f32.mxu0 0.0
        %1043 = vmatmul.mubr.f32.gmra.mrb[0].mxu0 %v363
        %v1044 = vpop.f32.mrb[0].mxu0
        %v1045 = vadd.f32 0.0, %v1044
        %v1046 = vpop.f32.mrb[0].mxu0
        %v1047 = vadd.f32 0.0, %v1046
        %1048 = vmatprep.mubr.f32.mxu0 0.0
        %1049 = vmatmul.mubr.f32.gmra.mrb[0].mxu0 %v364
        %v1050 = vpop.f32.mrb[0].mxu0
        %v1051 = vpop.f32.mrb[0].mxu0
        %v1052 = vadd.f32 0.0, %v1051
        %1053 = vmatprep.mubr.f32.mxu0 0.0
        %1054 = vmatmul.mubr.f32.gmra.mrb[0].mxu0 %v365
        %v1055 = vpop.f32.mrb[0].mxu0
        %v1056 = vpop.f32.mrb[0].mxu0
        %v1057 = vadd.f32 0.0, %v1056
        %1058 = vmatprep.mubr.f32.mxu0 0.0
        %1059 = vmatmul.mubr.f32.gmra.mrb[0].mxu0 %v366
        %v1060 = vpop.f32.mrb[0].mxu0
        %v1061 = vpop.f32.mrb[0].mxu0
        %1062 = vmatprep.mubr.f32.mxu0 0.0
        %1063 = vmatmul.mubr.f32.gmra.mrb[0].mxu0 %v367
        %v1064 = vpop.f32.mrb[0].mxu0
        %v1065 = vpop.f32.mrb[0].mxu0
        %1066 = vdwg.mxu0
        %1067 = vmatprep.subr.mxu0 %v382
        %1068 = vmatpush1.msra.mxu0 %v381
        %1069 = vmatprep.subr.mxu0 %v391
        %1070 = vmatpush1.msra.mxu0 %v390
        %1071 = vmatprep.subr.mxu0 %v400
        %1072 = vmatpush1.msra.mxu0 %v399
        %1073 = vmatprep.subr.mxu0 %v409
        %1074 = vmatpush1.msra.mxu0 %v408
        %1075 = vmatprep.subr.mxu0 %v418
        %1076 = vmatpush1.msra.mxu0 %v417
        %1077 = vmatprep.subr.mxu0 %v427
        %1078 = vmatpush1.msra.mxu0 %v426
        %1079 = vmatprep.subr.mxu0 %v436
        %1080 = vmatpush1.msra.mxu0 %v435
        %1081 = vmatprep.subr.mxu0 %v445
        %1082 = vmatpush1.msra.mxu0 %v444
        %1083 = vmatprep.subr.mxu0 %v454
        %1084 = vmatpush1.msra.mxu0 %v453
        %1085 = vmatprep.subr.mxu0 %v463
        %1086 = vmatpush1.msra.mxu0 %v462
        %1087 = vmatprep.subr.mxu0 %v472
        %1088 = vmatpush1.msra.mxu0 %v471
        %1089 = vmatprep.subr.mxu0 %v481
        %1090 = vmatpush1.msra.mxu0 %v480
        %1091 = vmatprep.subr.mxu0 %v490
        %1092 = vmatpush1.msra.mxu0 %v489
        %1093 = vmatprep.subr.mxu0 %v499
        %1094 = vmatpush1.msra.mxu0 %v498
        %1095 = vmatprep.subr.mxu0 %v508
        %1096 = vmatpush1.msra.mxu0 %v507
        %1097 = vmatprep.subr.mxu0 %v517
        %1098 = vmatpush1.msra.mxu0 %v516
        %1099 = vmatprep.subr.mxu0 0.0
        %1100 = vmatpush1.msra.mxu0 0.0
        %1101 = vmatprep.subr.mxu0 0.0
        %1102 = vmatpush1.msra.mxu0 0.0
        %1103 = vmatprep.subr.mxu0 0.0
        %1104 = vmatpush1.msra.mxu0 0.0
        %1105 = vmatprep.subr.mxu0 0.0
        %1106 = vmatpush1.msra.mxu0 0.0
        %1107 = vmatprep.subr.mxu0 0.0
        %1108 = vmatpush1.msra.mxu0 0.0
        %1109 = vmatprep.subr.mxu0 0.0
        %1110 = vmatpush1.msra.mxu0 0.0
        %1111 = vmatprep.subr.mxu0 0.0
        %1112 = vmatpush1.msra.mxu0 0.0
        %1113 = vmatprep.subr.mxu0 0.0
        %1114 = vmatpush1.msra.mxu0 0.0
        %1115 = vmatprep.subr.mxu0 0.0
        %1116 = vmatpush1.msra.mxu0 0.0
        %1117 = vmatprep.subr.mxu0 0.0
        %1118 = vmatpush1.msra.mxu0 0.0
        %1119 = vmatprep.subr.mxu0 0.0
        %1120 = vmatpush1.msra.mxu0 0.0
        %1121 = vmatprep.subr.mxu0 0.0
        %1122 = vmatpush1.msra.mxu0 0.0
        %1123 = vmatprep.subr.mxu0 0.0
        %1124 = vmatpush1.msra.mxu0 0.0
        %1125 = vmatprep.subr.mxu0 0.0
        %1126 = vmatpush1.msra.mxu0 0.0
        %1127 = vmatprep.subr.mxu0 0.0
        %1128 = vmatpush1.msra.mxu0 0.0
        %1129 = vmatprep.subr.mxu0 0.0
        %1130 = vmatpush1.msra.mxu0 0.0
        %1131 = vmatprep.mubr.f32.mxu0 0.0
        %1132 = vmatmul.mubr.f32.gmra.mrb[0].mxu0 %v332
        %v1133 = vpop.f32.mrb[0].mxu0
        %v1134 = vpop.f32.mrb[0].mxu0
        %1135 = vmatprep.mubr.f32.mxu0 0.0
        %1136 = vmatmul.mubr.f32.gmra.mrb[0].mxu0 %v333
        %v1137 = vpop.f32.mrb[0].mxu0
        %v1138 = vpop.f32.mrb[0].mxu0
        %1139 = vmatprep.mubr.f32.mxu0 0.0
        %1140 = vmatmul.mubr.f32.gmra.mrb[0].mxu0 %v334
        %v1141 = vpop.f32.mrb[0].mxu0
        %v1142 = vadd.f32 0.0, %v1141
        %v1143 = vpop.f32.mrb[0].mxu0
        %v1144 = vadd.f32 0.0, %v1143
        %1145 = vmatprep.mubr.f32.mxu0 0.0
        %1146 = vmatmul.mubr.f32.gmra.mrb[0].mxu0 %v335
        %v1147 = vpop.f32.mrb[0].mxu0
        %v1148 = vadd.f32 0.0, %v1147
        %v1149 = vpop.f32.mrb[0].mxu0
        %v1150 = vadd.f32 0.0, %v1149
        %1151 = vmatprep.mubr.f32.mxu0 0.0
        %1152 = vmatmul.mubr.f32.gmra.mrb[0].mxu0 %v336
        %v1153 = vpop.f32.mrb[0].mxu0
        %v1154 = vadd.f32 0.0, %v1153
        %v1155 = vpop.f32.mrb[0].mxu0
        %v1156 = vadd.f32 0.0, %v1155
        %1157 = vmatprep.mubr.f32.mxu0 0.0
        %1158 = vmatmul.mubr.f32.gmra.mrb[0].mxu0 %v337
        %v1159 = vpop.f32.mrb[0].mxu0
        %v1160 = vadd.f32 0.0, %v1159
        %v1161 = vpop.f32.mrb[0].mxu0
        %v1162 = vadd.f32 0.0, %v1161
        %1163 = vmatprep.mubr.f32.mxu0 0.0
        %1164 = vmatmul.mubr.f32.gmra.mrb[0].mxu0 %v338
        %v1165 = vpop.f32.mrb[0].mxu0
        %v1166 = vadd.f32 0.0, %v1165
        %v1167 = vpop.f32.mrb[0].mxu0
        %v1168 = vadd.f32 0.0, %v1167
        %1169 = vmatprep.mubr.f32.mxu0 0.0
        %1170 = vmatmul.mubr.f32.gmra.mrb[0].mxu0 %v339
        %v1171 = vpop.f32.mrb[0].mxu0
        %v1172 = vadd.f32 0.0, %v1171
        %v1173 = vpop.f32.mrb[0].mxu0
        %v1174 = vadd.f32 0.0, %v1173
        %1175 = vmatprep.mubr.f32.mxu0 0.0
        %1176 = vmatmul.mubr.f32.gmra.mrb[0].mxu0 %v340
        %v1177 = vpop.f32.mrb[0].mxu0
        %v1178 = vadd.f32 0.0, %v1177
        %v1179 = vpop.f32.mrb[0].mxu0
        %v1180 = vadd.f32 0.0, %v1179
        %1181 = vmatprep.mubr.f32.mxu0 0.0
        %1182 = vmatmul.mubr.f32.gmra.mrb[0].mxu0 %v341
        %v1183 = vpop.f32.mrb[0].mxu0
        %v1184 = vadd.f32 0.0, %v1183
        %v1185 = vpop.f32.mrb[0].mxu0
        %v1186 = vadd.f32 0.0, %v1185
        %1187 = vmatprep.mubr.f32.mxu0 0.0
        %1188 = vmatmul.mubr.f32.gmra.mrb[0].mxu0 %v342
        %v1189 = vpop.f32.mrb[0].mxu0
        %v1190 = vadd.f32 0.0, %v1189
        %v1191 = vpop.f32.mrb[0].mxu0
        %v1192 = vadd.f32 0.0, %v1191
        %1193 = vmatprep.mubr.f32.mxu0 0.0
        %1194 = vmatmul.mubr.f32.gmra.mrb[0].mxu0 %v343
        %v1195 = vpop.f32.mrb[0].mxu0
        %v1196 = vadd.f32 0.0, %v1195
        %v1197 = vpop.f32.mrb[0].mxu0
        %v1198 = vadd.f32 0.0, %v1197
        %1199 = vmatprep.mubr.f32.mxu0 0.0
        %1200 = vmatmul.mubr.f32.gmra.mrb[0].mxu0 %v344
        %v1201 = vpop.f32.mrb[0].mxu0
        %v1202 = vadd.f32 0.0, %v1201
        %v1203 = vpop.f32.mrb[0].mxu0
        %v1204 = vadd.f32 0.0, %v1203
        %1205 = vmatprep.mubr.f32.mxu0 0.0
        %1206 = vmatmul.mubr.f32.gmra.mrb[0].mxu0 %v345
        %v1207 = vpop.f32.mrb[0].mxu0
        %v1208 = vadd.f32 0.0, %v1207
        %v1209 = vpop.f32.mrb[0].mxu0
        %v1210 = vadd.f32 0.0, %v1209
        %1211 = vmatprep.mubr.f32.mxu0 0.0
        %1212 = vmatmul.mubr.f32.gmra.mrb[0].mxu0 %v346
        %v1213 = vpop.f32.mrb[0].mxu0
        %v1214 = vadd.f32 0.0, %v1213
        %v1215 = vpop.f32.mrb[0].mxu0
        %v1216 = vadd.f32 0.0, %v1215
        %1217 = vmatprep.mubr.f32.mxu0 0.0
        %1218 = vmatmul.mubr.f32.gmra.mrb[0].mxu0 %v347
        %v1219 = vpop.f32.mrb[0].mxu0
        %v1220 = vadd.f32 0.0, %v1219
        %v1221 = vpop.f32.mrb[0].mxu0
        %v1222 = vadd.f32 0.0, %v1221
        %1223 = vmatprep.mubr.f32.mxu0 0.0
        %1224 = vmatmul.mubr.f32.gmra.mrb[0].mxu0 %v348
        %v1225 = vpop.f32.mrb[0].mxu0
        %v1226 = vadd.f32 0.0, %v1225
        %v1227 = vpop.f32.mrb[0].mxu0
        %v1228 = vadd.f32 0.0, %v1227
        %1229 = vmatprep.mubr.f32.mxu0 0.0
        %1230 = vmatmul.mubr.f32.gmra.mrb[0].mxu0 %v349
        %v1231 = vpop.f32.mrb[0].mxu0
        %v1232 = vadd.f32 0.0, %v1231
        %v1233 = vpop.f32.mrb[0].mxu0
        %v1234 = vadd.f32 0.0, %v1233
        %1235 = vmatprep.mubr.f32.mxu0 0.0
        %1236 = vmatmul.mubr.f32.gmra.mrb[0].mxu0 %v350
        %v1237 = vpop.f32.mrb[0].mxu0
        %v1238 = vadd.f32 0.0, %v1237
        %v1239 = vpop.f32.mrb[0].mxu0
        %v1240 = vadd.f32 0.0, %v1239
        %1241 = vmatprep.mubr.f32.mxu0 0.0
        %1242 = vmatmul.mubr.f32.gmra.mrb[0].mxu0 %v351
        %v1243 = vpop.f32.mrb[0].mxu0
        %v1244 = vadd.f32 0.0, %v1243
        %v1245 = vpop.f32.mrb[0].mxu0
        %v1246 = vadd.f32 0.0, %v1245
        %1247 = vmatprep.mubr.f32.mxu0 0.0
        %1248 = vmatmul.mubr.f32.gmra.mrb[0].mxu0 %v352
        %v1249 = vpop.f32.mrb[0].mxu0
        %v1250 = vadd.f32 0.0, %v1249
        %v1251 = vpop.f32.mrb[0].mxu0
        %v1252 = vadd.f32 0.0, %v1251
        %1253 = vmatprep.mubr.f32.mxu0 0.0
        %1254 = vmatmul.mubr.f32.gmra.mrb[0].mxu0 %v353
        %v1255 = vpop.f32.mrb[0].mxu0
        %v1256 = vadd.f32 0.0, %v1255
        %v1257 = vpop.f32.mrb[0].mxu0
        %v1258 = vadd.f32 0.0, %v1257
        %1259 = vmatprep.mubr.f32.mxu0 0.0
        %1260 = vmatmul.mubr.f32.gmra.mrb[0].mxu0 %v354
        %v1261 = vpop.f32.mrb[0].mxu0
        %v1262 = vadd.f32 0.0, %v1261
        %v1263 = vpop.f32.mrb[0].mxu0
        %v1264 = vadd.f32 0.0, %v1263
        %1265 = vmatprep.mubr.f32.mxu0 0.0
        %1266 = vmatmul.mubr.f32.gmra.mrb[0].mxu0 %v355
        %v1267 = vpop.f32.mrb[0].mxu0
        %v1268 = vadd.f32 0.0, %v1267
        %v1269 = vpop.f32.mrb[0].mxu0
        %v1270 = vadd.f32 0.0, %v1269
        %1271 = vmatprep.mubr.f32.mxu0 0.0
        %1272 = vmatmul.mubr.f32.gmra.mrb[0].mxu0 %v356
        %v1273 = vpop.f32.mrb[0].mxu0
        %v1274 = vadd.f32 0.0, %v1273
        %v1275 = vpop.f32.mrb[0].mxu0
        %v1276 = vadd.f32 0.0, %v1275
        %1277 = vmatprep.mubr.f32.mxu0 0.0
        %1278 = vmatmul.mubr.f32.gmra.mrb[0].mxu0 %v357
        %v1279 = vpop.f32.mrb[0].mxu0
        %v1280 = vadd.f32 0.0, %v1279
        %v1281 = vpop.f32.mrb[0].mxu0
        %v1282 = vadd.f32 0.0, %v1281
        %1283 = vmatprep.mubr.f32.mxu0 0.0
        %1284 = vmatmul.mubr.f32.gmra.mrb[0].mxu0 %v358
        %v1285 = vpop.f32.mrb[0].mxu0
        %v1286 = vadd.f32 0.0, %v1285
        %v1287 = vpop.f32.mrb[0].mxu0
        %v1288 = vadd.f32 0.0, %v1287
        %1289 = vmatprep.mubr.f32.mxu0 0.0
        %1290 = vmatmul.mubr.f32.gmra.mrb[0].mxu0 %v359
        %v1291 = vpop.f32.mrb[0].mxu0
        %v1292 = vadd.f32 0.0, %v1291
        %v1293 = vpop.f32.mrb[0].mxu0
        %v1294 = vadd.f32 0.0, %v1293
        %1295 = vmatprep.mubr.f32.mxu0 0.0
        %1296 = vmatmul.mubr.f32.gmra.mrb[0].mxu0 %v360
        %v1297 = vpop.f32.mrb[0].mxu0
        %v1298 = vadd.f32 0.0, %v1297
        %v1299 = vpop.f32.mrb[0].mxu0
        %v1300 = vadd.f32 0.0, %v1299
        %1301 = vmatprep.mubr.f32.mxu0 0.0
        %1302 = vmatmul.mubr.f32.gmra.mrb[0].mxu0 %v361
        %v1303 = vpop.f32.mrb[0].mxu0
        %v1304 = vadd.f32 0.0, %v1303
        %v1305 = vpop.f32.mrb[0].mxu0
        %v1306 = vadd.f32 0.0, %v1305
        %1307 = vmatprep.mubr.f32.mxu0 0.0
        %1308 = vmatmul.mubr.f32.gmra.mrb[0].mxu0 %v362
        %v1309 = vpop.f32.mrb[0].mxu0
        %v1310 = vadd.f32 0.0, %v1309
        %v1311 = vpop.f32.mrb[0].mxu0
        %v1312 = vadd.f32 0.0, %v1311
        %1313 = vmatprep.mubr.f32.mxu0 0.0
        %1314 = vmatmul.mubr.f32.gmra.mrb[0].mxu0 %v363
        %v1315 = vpop.f32.mrb[0].mxu0
        %v1316 = vadd.f32 0.0, %v1315
        %v1317 = vpop.f32.mrb[0].mxu0
        %v1318 = vadd.f32 0.0, %v1317
        %1319 = vmatprep.mubr.f32.mxu0 0.0
        %1320 = vmatmul.mubr.f32.gmra.mrb[0].mxu0 %v364
        %v1321 = vpop.f32.mrb[0].mxu0
        %v1322 = vadd.f32 0.0, %v1321
        %v1323 = vpop.f32.mrb[0].mxu0
        %v1324 = vadd.f32 0.0, %v1323
        %1325 = vmatprep.mubr.f32.mxu0 0.0
        %1326 = vmatmul.mubr.f32.gmra.mrb[0].mxu0 %v365
        %v1327 = vpop.f32.mrb[0].mxu0
        %v1328 = vadd.f32 0.0, %v1327
        %v1329 = vpop.f32.mrb[0].mxu0
        %v1330 = vadd.f32 0.0, %v1329
        %1331 = vmatprep.mubr.f32.mxu0 0.0
        %1332 = vmatmul.mubr.f32.gmra.mrb[0].mxu0 %v366
        %v1333 = vpop.f32.mrb[0].mxu0
        %v1334 = vpop.f32.mrb[0].mxu0
        %1335 = vmatprep.mubr.f32.mxu0 0.0
        %1336 = vmatmul.mubr.f32.gmra.mrb[0].mxu0 %v367
        %v1337 = vpop.f32.mrb[0].mxu0
        %v1338 = vpop.f32.mrb[0].mxu0
        %1339 = vdwg.mxu0
        %1340 = vmatprep.subr.mxu0 %v384
        %1341 = vmatpush1.msra.mxu0 %v383
        %1342 = vmatprep.subr.mxu0 %v393
        %1343 = vmatpush1.msra.mxu0 %v392
        %1344 = vmatprep.subr.mxu0 %v402
        %1345 = vmatpush1.msra.mxu0 %v401
        %1346 = vmatprep.subr.mxu0 %v411
        %1347 = vmatpush1.msra.mxu0 %v410
        %1348 = vmatprep.subr.mxu0 %v420
        %1349 = vmatpush1.msra.mxu0 %v419
        %1350 = vmatprep.subr.mxu0 %v429
        %1351 = vmatpush1.msra.mxu0 %v428
        %1352 = vmatprep.subr.mxu0 %v438
        %1353 = vmatpush1.msra.mxu0 %v437
        %1354 = vmatprep.subr.mxu0 %v447
        %1355 = vmatpush1.msra.mxu0 %v446
        %1356 = vmatprep.subr.mxu0 %v456
        %1357 = vmatpush1.msra.mxu0 %v455
        %1358 = vmatprep.subr.mxu0 %v465
        %1359 = vmatpush1.msra.mxu0 %v464
        %1360 = vmatprep.subr.mxu0 %v474
        %1361 = vmatpush1.msra.mxu0 %v473
        %1362 = vmatprep.subr.mxu0 %v483
        %1363 = vmatpush1.msra.mxu0 %v482
        %1364 = vmatprep.subr.mxu0 %v492
        %1365 = vmatpush1.msra.mxu0 %v491
        %1366 = vmatprep.subr.mxu0 %v501
        %1367 = vmatpush1.msra.mxu0 %v500
        %1368 = vmatprep.subr.mxu0 %v510
        %1369 = vmatpush1.msra.mxu0 %v509
        %1370 = vmatprep.subr.mxu0 %v519
        %1371 = vmatpush1.msra.mxu0 %v518
        %1372 = vmatprep.subr.mxu0 0.0
        %1373 = vmatpush1.msra.mxu0 0.0
        %1374 = vmatprep.subr.mxu0 0.0
        %1375 = vmatpush1.msra.mxu0 0.0
        %1376 = vmatprep.subr.mxu0 0.0
        %1377 = vmatpush1.msra.mxu0 0.0
        %1378 = vmatprep.subr.mxu0 0.0
        %1379 = vmatpush1.msra.mxu0 0.0
        %1380 = vmatprep.subr.mxu0 0.0
        %1381 = vmatpush1.msra.mxu0 0.0
        %1382 = vmatprep.subr.mxu0 0.0
        %1383 = vmatpush1.msra.mxu0 0.0
        %1384 = vmatprep.subr.mxu0 0.0
        %1385 = vmatpush1.msra.mxu0 0.0
        %1386 = vmatprep.subr.mxu0 0.0
        %1387 = vmatpush1.msra.mxu0 0.0
        %1388 = vmatprep.subr.mxu0 0.0
        %1389 = vmatpush1.msra.mxu0 0.0
        %1390 = vmatprep.subr.mxu0 0.0
        %1391 = vmatpush1.msra.mxu0 0.0
        %1392 = vmatprep.subr.mxu0 0.0
        %1393 = vmatpush1.msra.mxu0 0.0
        %1394 = vmatprep.subr.mxu0 0.0
        %1395 = vmatpush1.msra.mxu0 0.0
        %1396 = vmatprep.subr.mxu0 0.0
        %1397 = vmatpush1.msra.mxu0 0.0
        %1398 = vmatprep.subr.mxu0 0.0
        %1399 = vmatpush1.msra.mxu0 0.0
        %1400 = vmatprep.subr.mxu0 0.0
        %1401 = vmatpush1.msra.mxu0 0.0
        %1402 = vmatprep.subr.mxu0 0.0
        %1403 = vmatpush1.msra.mxu0 0.0
        %1404 = vmatprep.mubr.f32.mxu0 0.0
        %1405 = vmatmul.mubr.f32.gmra.mrb[0].mxu0 %v332
        %v1406 = vpop.f32.mrb[0].mxu0
        %v1407 = vpop.f32.mrb[0].mxu0
        %1408 = vmatprep.mubr.f32.mxu0 0.0
        %1409 = vmatmul.mubr.f32.gmra.mrb[0].mxu0 %v333
        %v1410 = vpop.f32.mrb[0].mxu0
        %v1411 = vpop.f32.mrb[0].mxu0
        %1412 = vmatprep.mubr.f32.mxu0 0.0
        %1413 = vmatmul.mubr.f32.gmra.mrb[0].mxu0 %v334
        %v1414 = vpop.f32.mrb[0].mxu0
        %v1415 = vpop.f32.mrb[0].mxu0
        %1416 = vmatprep.mubr.f32.mxu0 0.0
        %1417 = vmatmul.mubr.f32.gmra.mrb[0].mxu0 %v335
        %v1418 = vpop.f32.mrb[0].mxu0
        %v1419 = vpop.f32.mrb[0].mxu0
        %1420 = vmatprep.mubr.f32.mxu0 0.0
        %1421 = vmatmul.mubr.f32.gmra.mrb[0].mxu0 %v336
        %v1422 = vpop.f32.mrb[0].mxu0
        %v1423 = vadd.f32 0.0, %v1422
        %v1424 = vpop.f32.mrb[0].mxu0
        %v1425 = vadd.f32 0.0, %v1424
        %1426 = vmatprep.mubr.f32.mxu0 0.0
        %1427 = vmatmul.mubr.f32.gmra.mrb[0].mxu0 %v337
        %v1428 = vpop.f32.mrb[0].mxu0
        %v1429 = vadd.f32 0.0, %v1428
        %v1430 = vpop.f32.mrb[0].mxu0
        %v1431 = vadd.f32 0.0, %v1430
        %1432 = vmatprep.mubr.f32.mxu0 0.0
        %1433 = vmatmul.mubr.f32.gmra.mrb[0].mxu0 %v338
        %v1434 = vpop.f32.mrb[0].mxu0
        %v1435 = vadd.f32 0.0, %v1434
        %v1436 = vpop.f32.mrb[0].mxu0
        %v1437 = vadd.f32 0.0, %v1436
        %1438 = vmatprep.mubr.f32.mxu0 0.0
        %1439 = vmatmul.mubr.f32.gmra.mrb[0].mxu0 %v339
        %v1440 = vpop.f32.mrb[0].mxu0
        %v1441 = vadd.f32 0.0, %v1440
        %v1442 = vpop.f32.mrb[0].mxu0
        %v1443 = vadd.f32 0.0, %v1442
        %1444 = vmatprep.mubr.f32.mxu0 0.0
        %1445 = vmatmul.mubr.f32.gmra.mrb[0].mxu0 %v340
        %v1446 = vpop.f32.mrb[0].mxu0
        %v1447 = vadd.f32 0.0, %v1446
        %v1448 = vpop.f32.mrb[0].mxu0
        %v1449 = vadd.f32 0.0, %v1448
        %1450 = vmatprep.mubr.f32.mxu0 0.0
        %1451 = vmatmul.mubr.f32.gmra.mrb[0].mxu0 %v341
        %v1452 = vpop.f32.mrb[0].mxu0
        %v1453 = vadd.f32 0.0, %v1452
        %v1454 = vpop.f32.mrb[0].mxu0
        %v1455 = vadd.f32 0.0, %v1454
        %1456 = vmatprep.mubr.f32.mxu0 0.0
        %1457 = vmatmul.mubr.f32.gmra.mrb[0].mxu0 %v342
        %v1458 = vpop.f32.mrb[0].mxu0
        %v1459 = vadd.f32 0.0, %v1458
        %v1460 = vpop.f32.mrb[0].mxu0
        %v1461 = vadd.f32 0.0, %v1460
        %1462 = vmatprep.mubr.f32.mxu0 0.0
        %1463 = vmatmul.mubr.f32.gmra.mrb[0].mxu0 %v343
        %v1464 = vpop.f32.mrb[0].mxu0
        %v1465 = vadd.f32 0.0, %v1464
        %v1466 = vpop.f32.mrb[0].mxu0
        %v1467 = vadd.f32 0.0, %v1466
        %1468 = vmatprep.mubr.f32.mxu0 0.0
        %1469 = vmatmul.mubr.f32.gmra.mrb[0].mxu0 %v344
        %v1470 = vpop.f32.mrb[0].mxu0
        %v1471 = vadd.f32 0.0, %v1470
        %v1472 = vpop.f32.mrb[0].mxu0
        %v1473 = vadd.f32 0.0, %v1472
        %1474 = vmatprep.mubr.f32.mxu0 0.0
        %1475 = vmatmul.mubr.f32.gmra.mrb[0].mxu0 %v345
        %v1476 = vpop.f32.mrb[0].mxu0
        %v1477 = vadd.f32 0.0, %v1476
        %v1478 = vpop.f32.mrb[0].mxu0
        %v1479 = vadd.f32 0.0, %v1478
        %1480 = vmatprep.mubr.f32.mxu0 0.0
        %1481 = vmatmul.mubr.f32.gmra.mrb[0].mxu0 %v346
        %v1482 = vpop.f32.mrb[0].mxu0
        %v1483 = vadd.f32 0.0, %v1482
        %v1484 = vpop.f32.mrb[0].mxu0
        %v1485 = vadd.f32 0.0, %v1484
        %1486 = vmatprep.mubr.f32.mxu0 0.0
        %1487 = vmatmul.mubr.f32.gmra.mrb[0].mxu0 %v347
        %v1488 = vpop.f32.mrb[0].mxu0
        %v1489 = vadd.f32 0.0, %v1488
        %v1490 = vpop.f32.mrb[0].mxu0
        %v1491 = vadd.f32 0.0, %v1490
        %1492 = vmatprep.mubr.f32.mxu0 0.0
        %1493 = vmatmul.mubr.f32.gmra.mrb[0].mxu0 %v348
        %v1494 = vpop.f32.mrb[0].mxu0
        %v1495 = vadd.f32 0.0, %v1494
        %v1496 = vpop.f32.mrb[0].mxu0
        %v1497 = vadd.f32 0.0, %v1496
        %1498 = vmatprep.mubr.f32.mxu0 0.0
        %1499 = vmatmul.mubr.f32.gmra.mrb[0].mxu0 %v349
        %v1500 = vpop.f32.mrb[0].mxu0
        %v1501 = vadd.f32 0.0, %v1500
        %v1502 = vpop.f32.mrb[0].mxu0
        %v1503 = vadd.f32 0.0, %v1502
        %1504 = vmatprep.mubr.f32.mxu0 0.0
        %1505 = vmatmul.mubr.f32.gmra.mrb[0].mxu0 %v350
        %v1506 = vpop.f32.mrb[0].mxu0
        %v1507 = vadd.f32 0.0, %v1506
        %v1508 = vpop.f32.mrb[0].mxu0
        %v1509 = vadd.f32 0.0, %v1508
        %1510 = vmatprep.mubr.f32.mxu0 0.0
        %1511 = vmatmul.mubr.f32.gmra.mrb[0].mxu0 %v351
        %v1512 = vpop.f32.mrb[0].mxu0
        %v1513 = vadd.f32 0.0, %v1512
        %v1514 = vpop.f32.mrb[0].mxu0
        %v1515 = vadd.f32 0.0, %v1514
        %1516 = vmatprep.mubr.f32.mxu0 0.0
        %1517 = vmatmul.mubr.f32.gmra.mrb[0].mxu0 %v352
        %v1518 = vpop.f32.mrb[0].mxu0
        %v1519 = vadd.f32 0.0, %v1518
        %v1520 = vpop.f32.mrb[0].mxu0
        %v1521 = vadd.f32 0.0, %v1520
        %1522 = vmatprep.mubr.f32.mxu0 0.0
        %1523 = vmatmul.mubr.f32.gmra.mrb[0].mxu0 %v353
        %v1524 = vpop.f32.mrb[0].mxu0
        %v1525 = vadd.f32 0.0, %v1524
        %v1526 = vpop.f32.mrb[0].mxu0
        %v1527 = vadd.f32 0.0, %v1526
        %1528 = vmatprep.mubr.f32.mxu0 0.0
        %1529 = vmatmul.mubr.f32.gmra.mrb[0].mxu0 %v354
        %v1530 = vpop.f32.mrb[0].mxu0
        %v1531 = vadd.f32 0.0, %v1530
        %v1532 = vpop.f32.mrb[0].mxu0
        %v1533 = vadd.f32 0.0, %v1532
        %1534 = vmatprep.mubr.f32.mxu0 0.0
        %1535 = vmatmul.mubr.f32.gmra.mrb[0].mxu0 %v355
        %v1536 = vpop.f32.mrb[0].mxu0
        %v1537 = vadd.f32 0.0, %v1536
        %v1538 = vpop.f32.mrb[0].mxu0
        %v1539 = vadd.f32 0.0, %v1538
        %1540 = vmatprep.mubr.f32.mxu0 0.0
        %1541 = vmatmul.mubr.f32.gmra.mrb[0].mxu0 %v356
        %v1542 = vpop.f32.mrb[0].mxu0
        %v1543 = vadd.f32 0.0, %v1542
        %v1544 = vpop.f32.mrb[0].mxu0
        %v1545 = vadd.f32 0.0, %v1544
        %1546 = vmatprep.mubr.f32.mxu0 0.0
        %1547 = vmatmul.mubr.f32.gmra.mrb[0].mxu0 %v357
        %v1548 = vpop.f32.mrb[0].mxu0
        %v1549 = vadd.f32 0.0, %v1548
        %v1550 = vpop.f32.mrb[0].mxu0
        %v1551 = vadd.f32 0.0, %v1550
        %1552 = vmatprep.mubr.f32.mxu0 0.0
        %1553 = vmatmul.mubr.f32.gmra.mrb[0].mxu0 %v358
        %v1554 = vpop.f32.mrb[0].mxu0
        %v1555 = vadd.f32 0.0, %v1554
        %v1556 = vpop.f32.mrb[0].mxu0
        %v1557 = vadd.f32 0.0, %v1556
        %1558 = vmatprep.mubr.f32.mxu0 0.0
        %1559 = vmatmul.mubr.f32.gmra.mrb[0].mxu0 %v359
        %v1560 = vpop.f32.mrb[0].mxu0
        %v1561 = vadd.f32 0.0, %v1560
        %v1562 = vpop.f32.mrb[0].mxu0
        %v1563 = vadd.f32 0.0, %v1562
        %1564 = vmatprep.mubr.f32.mxu0 0.0
        %1565 = vmatmul.mubr.f32.gmra.mrb[0].mxu0 %v360
        %v1566 = vpop.f32.mrb[0].mxu0
        %v1567 = vadd.f32 0.0, %v1566
        %v1568 = vpop.f32.mrb[0].mxu0
        %v1569 = vadd.f32 0.0, %v1568
        %1570 = vmatprep.mubr.f32.mxu0 0.0
        %1571 = vmatmul.mubr.f32.gmra.mrb[0].mxu0 %v361
        %v1572 = vpop.f32.mrb[0].mxu0
        %v1573 = vadd.f32 0.0, %v1572
        %v1574 = vpop.f32.mrb[0].mxu0
        %v1575 = vadd.f32 0.0, %v1574
        %1576 = vmatprep.mubr.f32.mxu0 0.0
        %1577 = vmatmul.mubr.f32.gmra.mrb[0].mxu0 %v362
        %v1578 = vpop.f32.mrb[0].mxu0
        %v1579 = vadd.f32 0.0, %v1578
        %v1580 = vpop.f32.mrb[0].mxu0
        %v1581 = vadd.f32 0.0, %v1580
        %1582 = vmatprep.mubr.f32.mxu0 0.0
        %1583 = vmatmul.mubr.f32.gmra.mrb[0].mxu0 %v363
        %v1584 = vpop.f32.mrb[0].mxu0
        %v1585 = vadd.f32 0.0, %v1584
        %v1586 = vpop.f32.mrb[0].mxu0
        %v1587 = vadd.f32 0.0, %v1586
        %1588 = vmatprep.mubr.f32.mxu0 0.0
        %1589 = vmatmul.mubr.f32.gmra.mrb[0].mxu0 %v364
        %v1590 = vpop.f32.mrb[0].mxu0
        %v1591 = vadd.f32 0.0, %v1590
        %v1592 = vpop.f32.mrb[0].mxu0
        %v1593 = vadd.f32 0.0, %v1592
        %1594 = vmatprep.mubr.f32.mxu0 0.0
        %1595 = vmatmul.mubr.f32.gmra.mrb[0].mxu0 %v365
        %v1596 = vpop.f32.mrb[0].mxu0
        %v1597 = vadd.f32 0.0, %v1596
        %v1598 = vpop.f32.mrb[0].mxu0
        %v1599 = vadd.f32 0.0, %v1598
        %1600 = vmatprep.mubr.f32.mxu0 0.0
        %1601 = vmatmul.mubr.f32.gmra.mrb[0].mxu0 %v366
        %v1602 = vpop.f32.mrb[0].mxu0
        %v1603 = vadd.f32 0.0, %v1602
        %v1604 = vpop.f32.mrb[0].mxu0
        %v1605 = vadd.f32 0.0, %v1604
        %1606 = vmatprep.mubr.f32.mxu0 0.0
        %1607 = vmatmul.mubr.f32.gmra.mrb[0].mxu0 %v367
        %v1608 = vpop.f32.mrb[0].mxu0
        %v1609 = vadd.f32 0.0, %v1608
        %v1610 = vpop.f32.mrb[0].mxu0
        %v1611 = vadd.f32 0.0, %v1610
        %1612 = vdwg.mxu0
        %1613 = vmatprep.subr.mxu0 0.0
        %1614 = vmatpush1.msra.mxu0 %v385
        %1615 = vmatprep.subr.mxu0 0.0
        %1616 = vmatpush1.msra.mxu0 %v394
        %1617 = vmatprep.subr.mxu0 0.0
        %1618 = vmatpush1.msra.mxu0 %v403
        %1619 = vmatprep.subr.mxu0 0.0
        %1620 = vmatpush1.msra.mxu0 %v412
        %1621 = vmatprep.subr.mxu0 0.0
        %1622 = vmatpush1.msra.mxu0 %v421
        %1623 = vmatprep.subr.mxu0 0.0
        %1624 = vmatpush1.msra.mxu0 %v430
        %1625 = vmatprep.subr.mxu0 0.0
        %1626 = vmatpush1.msra.mxu0 %v439
        %1627 = vmatprep.subr.mxu0 0.0
        %1628 = vmatpush1.msra.mxu0 %v448
        %1629 = vmatprep.subr.mxu0 0.0
        %1630 = vmatpush1.msra.mxu0 %v457
        %1631 = vmatprep.subr.mxu0 0.0
        %1632 = vmatpush1.msra.mxu0 %v466
        %1633 = vmatprep.subr.mxu0 0.0
        %1634 = vmatpush1.msra.mxu0 %v475
        %1635 = vmatprep.subr.mxu0 0.0
        %1636 = vmatpush1.msra.mxu0 %v484
        %1637 = vmatprep.subr.mxu0 0.0
        %1638 = vmatpush1.msra.mxu0 %v493
        %1639 = vmatprep.subr.mxu0 0.0
        %1640 = vmatpush1.msra.mxu0 %v502
        %1641 = vmatprep.subr.mxu0 0.0
        %1642 = vmatpush1.msra.mxu0 %v511
        %1643 = vmatprep.subr.mxu0 0.0
        %1644 = vmatpush1.msra.mxu0 %v520
        %1645 = vmatprep.subr.mxu0 0.0
        %1646 = vmatpush1.msra.mxu0 0.0
        %1647 = vmatprep.subr.mxu0 0.0
        %1648 = vmatpush1.msra.mxu0 0.0
        %1649 = vmatprep.subr.mxu0 0.0
        %1650 = vmatpush1.msra.mxu0 0.0
        %1651 = vmatprep.subr.mxu0 0.0
        %1652 = vmatpush1.msra.mxu0 0.0
        %1653 = vmatprep.subr.mxu0 0.0
        %1654 = vmatpush1.msra.mxu0 0.0
        %1655 = vmatprep.subr.mxu0 0.0
        %1656 = vmatpush1.msra.mxu0 0.0
        %1657 = vmatprep.subr.mxu0 0.0
        %1658 = vmatpush1.msra.mxu0 0.0
        %1659 = vmatprep.subr.mxu0 0.0
        %1660 = vmatpush1.msra.mxu0 0.0
        %1661 = vmatprep.subr.mxu0 0.0
        %1662 = vmatpush1.msra.mxu0 0.0
        %1663 = vmatprep.subr.mxu0 0.0
        %1664 = vmatpush1.msra.mxu0 0.0
        %1665 = vmatprep.subr.mxu0 0.0
        %1666 = vmatpush1.msra.mxu0 0.0
        %1667 = vmatprep.subr.mxu0 0.0
        %1668 = vmatpush1.msra.mxu0 0.0
        %1669 = vmatprep.subr.mxu0 0.0
        %1670 = vmatpush1.msra.mxu0 0.0
        %1671 = vmatprep.subr.mxu0 0.0
        %1672 = vmatpush1.msra.mxu0 0.0
        %1673 = vmatprep.subr.mxu0 0.0
        %1674 = vmatpush1.msra.mxu0 0.0
        %1675 = vmatprep.subr.mxu0 0.0
        %1676 = vmatpush1.msra.mxu0 0.0
        %1677 = vmatprep.mubr.f32.mxu0 0.0
        %1678 = vmatmul.mubr.f32.gmra.mrb[0].mxu0 %v332
        %v1679 = vpop.f32.mrb[0].mxu0
        %v1680 = vpop.f32.mrb[0].mxu0
        %1681 = vmatprep.mubr.f32.mxu0 0.0
        %1682 = vmatmul.mubr.f32.gmra.mrb[0].mxu0 %v333
        %v1683 = vpop.f32.mrb[0].mxu0
        %v1684 = vpop.f32.mrb[0].mxu0
        %1685 = vmatprep.mubr.f32.mxu0 0.0
        %1686 = vmatmul.mubr.f32.gmra.mrb[0].mxu0 %v334
        %v1687 = vpop.f32.mrb[0].mxu0
        %v1688 = vpop.f32.mrb[0].mxu0
        %1689 = vmatprep.mubr.f32.mxu0 0.0
        %1690 = vmatmul.mubr.f32.gmra.mrb[0].mxu0 %v335
        %v1691 = vpop.f32.mrb[0].mxu0
        %v1692 = vpop.f32.mrb[0].mxu0
        %1693 = vmatprep.mubr.f32.mxu0 0.0
        %1694 = vmatmul.mubr.f32.gmra.mrb[0].mxu0 %v336
        %v1695 = vpop.f32.mrb[0].mxu0
        %v1696 = vadd.f32 0.0, %v1695
        %v1697 = vpop.f32.mrb[0].mxu0
        %1698 = vmatprep.mubr.f32.mxu0 0.0
        %1699 = vmatmul.mubr.f32.gmra.mrb[0].mxu0 %v337
        %v1700 = vpop.f32.mrb[0].mxu0
        %v1701 = vadd.f32 0.0, %v1700
        %v1702 = vpop.f32.mrb[0].mxu0
        %1703 = vmatprep.mubr.f32.mxu0 0.0
        %1704 = vmatmul.mubr.f32.gmra.mrb[0].mxu0 %v338
        %v1705 = vpop.f32.mrb[0].mxu0
        %v1706 = vadd.f32 0.0, %v1705
        %v1707 = vpop.f32.mrb[0].mxu0
        %1708 = vmatprep.mubr.f32.mxu0 0.0
        %1709 = vmatmul.mubr.f32.gmra.mrb[0].mxu0 %v339
        %v1710 = vpop.f32.mrb[0].mxu0
        %v1711 = vadd.f32 0.0, %v1710
        %v1712 = vpop.f32.mrb[0].mxu0
        %1713 = vmatprep.mubr.f32.mxu0 0.0
        %1714 = vmatmul.mubr.f32.gmra.mrb[0].mxu0 %v340
        %v1715 = vpop.f32.mrb[0].mxu0
        %v1716 = vadd.f32 0.0, %v1715
        %v1717 = vpop.f32.mrb[0].mxu0
        %1718 = vmatprep.mubr.f32.mxu0 0.0
        %1719 = vmatmul.mubr.f32.gmra.mrb[0].mxu0 %v341
        %v1720 = vpop.f32.mrb[0].mxu0
        %v1721 = vadd.f32 0.0, %v1720
        %v1722 = vpop.f32.mrb[0].mxu0
        %1723 = vmatprep.mubr.f32.mxu0 0.0
        %1724 = vmatmul.mubr.f32.gmra.mrb[0].mxu0 %v342
        %v1725 = vpop.f32.mrb[0].mxu0
        %v1726 = vadd.f32 0.0, %v1725
        %v1727 = vpop.f32.mrb[0].mxu0
        %1728 = vmatprep.mubr.f32.mxu0 0.0
        %1729 = vmatmul.mubr.f32.gmra.mrb[0].mxu0 %v343
        %v1730 = vpop.f32.mrb[0].mxu0
        %v1731 = vadd.f32 0.0, %v1730
        %v1732 = vpop.f32.mrb[0].mxu0
        %1733 = vmatprep.mubr.f32.mxu0 0.0
        %1734 = vmatmul.mubr.f32.gmra.mrb[0].mxu0 %v344
        %v1735 = vpop.f32.mrb[0].mxu0
        %v1736 = vadd.f32 0.0, %v1735
        %v1737 = vpop.f32.mrb[0].mxu0
        %1738 = vmatprep.mubr.f32.mxu0 0.0
        %1739 = vmatmul.mubr.f32.gmra.mrb[0].mxu0 %v345
        %v1740 = vpop.f32.mrb[0].mxu0
        %v1741 = vadd.f32 0.0, %v1740
        %v1742 = vpop.f32.mrb[0].mxu0
        %1743 = vmatprep.mubr.f32.mxu0 0.0
        %1744 = vmatmul.mubr.f32.gmra.mrb[0].mxu0 %v346
        %v1745 = vpop.f32.mrb[0].mxu0
        %v1746 = vadd.f32 0.0, %v1745
        %v1747 = vpop.f32.mrb[0].mxu0
        %1748 = vmatprep.mubr.f32.mxu0 0.0
        %1749 = vmatmul.mubr.f32.gmra.mrb[0].mxu0 %v347
        %v1750 = vpop.f32.mrb[0].mxu0
        %v1751 = vadd.f32 0.0, %v1750
        %v1752 = vpop.f32.mrb[0].mxu0
        %1753 = vmatprep.mubr.f32.mxu0 0.0
        %1754 = vmatmul.mubr.f32.gmra.mrb[0].mxu0 %v348
        %v1755 = vpop.f32.mrb[0].mxu0
        %v1756 = vadd.f32 0.0, %v1755
        %v1757 = vpop.f32.mrb[0].mxu0
        %1758 = vmatprep.mubr.f32.mxu0 0.0
        %1759 = vmatmul.mubr.f32.gmra.mrb[0].mxu0 %v349
        %v1760 = vpop.f32.mrb[0].mxu0
        %v1761 = vadd.f32 0.0, %v1760
        %v1762 = vpop.f32.mrb[0].mxu0
        %1763 = vmatprep.mubr.f32.mxu0 0.0
        %1764 = vmatmul.mubr.f32.gmra.mrb[0].mxu0 %v350
        %v1765 = vpop.f32.mrb[0].mxu0
        %v1766 = vadd.f32 0.0, %v1765
        %v1767 = vpop.f32.mrb[0].mxu0
        %1768 = vmatprep.mubr.f32.mxu0 0.0
        %1769 = vmatmul.mubr.f32.gmra.mrb[0].mxu0 %v351
        %v1770 = vpop.f32.mrb[0].mxu0
        %v1771 = vadd.f32 0.0, %v1770
        %v1772 = vpop.f32.mrb[0].mxu0
        %1773 = vmatprep.mubr.f32.mxu0 0.0
        %1774 = vmatmul.mubr.f32.gmra.mrb[0].mxu0 %v352
        %v1775 = vpop.f32.mrb[0].mxu0
        %v1776 = vadd.f32 0.0, %v1775
        %v1777 = vpop.f32.mrb[0].mxu0
        %1778 = vmatprep.mubr.f32.mxu0 0.0
        %1779 = vmatmul.mubr.f32.gmra.mrb[0].mxu0 %v353
        %v1780 = vpop.f32.mrb[0].mxu0
        %v1781 = vadd.f32 0.0, %v1780
        %v1782 = vpop.f32.mrb[0].mxu0
        %1783 = vmatprep.mubr.f32.mxu0 0.0
        %1784 = vmatmul.mubr.f32.gmra.mrb[0].mxu0 %v354
        %v1785 = vpop.f32.mrb[0].mxu0
        %v1786 = vadd.f32 0.0, %v1785
        %v1787 = vpop.f32.mrb[0].mxu0
        %1788 = vmatprep.mubr.f32.mxu0 0.0
        %1789 = vmatmul.mubr.f32.gmra.mrb[0].mxu0 %v355
        %v1790 = vpop.f32.mrb[0].mxu0
        %v1791 = vadd.f32 0.0, %v1790
        %v1792 = vpop.f32.mrb[0].mxu0
        %1793 = vmatprep.mubr.f32.mxu0 0.0
        %1794 = vmatmul.mubr.f32.gmra.mrb[0].mxu0 %v356
        %v1795 = vpop.f32.mrb[0].mxu0
        %v1796 = vadd.f32 0.0, %v1795
        %v1797 = vpop.f32.mrb[0].mxu0
        %1798 = vmatprep.mubr.f32.mxu0 0.0
        %1799 = vmatmul.mubr.f32.gmra.mrb[0].mxu0 %v357
        %v1800 = vpop.f32.mrb[0].mxu0
        %v1801 = vadd.f32 0.0, %v1800
        %v1802 = vpop.f32.mrb[0].mxu0
        %1803 = vmatprep.mubr.f32.mxu0 0.0
        %1804 = vmatmul.mubr.f32.gmra.mrb[0].mxu0 %v358
        %v1805 = vpop.f32.mrb[0].mxu0
        %v1806 = vadd.f32 0.0, %v1805
        %v1807 = vpop.f32.mrb[0].mxu0
        %1808 = vmatprep.mubr.f32.mxu0 0.0
        %1809 = vmatmul.mubr.f32.gmra.mrb[0].mxu0 %v359
        %v1810 = vpop.f32.mrb[0].mxu0
        %v1811 = vadd.f32 0.0, %v1810
        %v1812 = vpop.f32.mrb[0].mxu0
        %1813 = vmatprep.mubr.f32.mxu0 0.0
        %1814 = vmatmul.mubr.f32.gmra.mrb[0].mxu0 %v360
        %v1815 = vpop.f32.mrb[0].mxu0
        %v1816 = vadd.f32 0.0, %v1815
        %v1817 = vpop.f32.mrb[0].mxu0
        %1818 = vmatprep.mubr.f32.mxu0 0.0
        %1819 = vmatmul.mubr.f32.gmra.mrb[0].mxu0 %v361
        %v1820 = vpop.f32.mrb[0].mxu0
        %v1821 = vadd.f32 0.0, %v1820
        %v1822 = vpop.f32.mrb[0].mxu0
        %1823 = vmatprep.mubr.f32.mxu0 0.0
        %1824 = vmatmul.mubr.f32.gmra.mrb[0].mxu0 %v362
        %v1825 = vpop.f32.mrb[0].mxu0
        %v1826 = vadd.f32 0.0, %v1825
        %v1827 = vpop.f32.mrb[0].mxu0
        %1828 = vmatprep.mubr.f32.mxu0 0.0
        %1829 = vmatmul.mubr.f32.gmra.mrb[0].mxu0 %v363
        %v1830 = vpop.f32.mrb[0].mxu0
        %v1831 = vadd.f32 0.0, %v1830
        %v1832 = vpop.f32.mrb[0].mxu0
        %1833 = vmatprep.mubr.f32.mxu0 0.0
        %1834 = vmatmul.mubr.f32.gmra.mrb[0].mxu0 %v364
        %v1835 = vpop.f32.mrb[0].mxu0
        %v1836 = vadd.f32 0.0, %v1835
        %v1837 = vpop.f32.mrb[0].mxu0
        %1838 = vmatprep.mubr.f32.mxu0 0.0
        %1839 = vmatmul.mubr.f32.gmra.mrb[0].mxu0 %v365
        %v1840 = vpop.f32.mrb[0].mxu0
        %v1841 = vadd.f32 0.0, %v1840
        %v1842 = vpop.f32.mrb[0].mxu0
        %1843 = vmatprep.mubr.f32.mxu0 0.0
        %1844 = vmatmul.mubr.f32.gmra.mrb[0].mxu0 %v366
        %v1845 = vpop.f32.mrb[0].mxu0
        %v1846 = vadd.f32 0.0, %v1845
        %v1847 = vpop.f32.mrb[0].mxu0
        %1848 = vmatprep.mubr.f32.mxu0 0.0
        %1849 = vmatmul.mubr.f32.gmra.mrb[0].mxu0 %v367
        %v1850 = vpop.f32.mrb[0].mxu0
        %v1851 = vadd.f32 0.0, %v1850
        %v1852 = vpop.f32.mrb[0].mxu0
        %1853 = vdwg.mxu0
        %vm1854 = vcmask 64512
        %v1856 = vsel %vm1854, %v296, 0
        %v1859 = vsel %vm1854, %v297, 0
        %v1862 = vsel %vm1854, %v298, 0
        %v1865 = vsel %vm1854, %v299, 0
        %v1868 = vsel %vm1854, %v300, 0
        %v1871 = vsel %vm1854, %v301, 0
        %v1874 = vsel %vm1854, %v302, 0
        %v1877 = vsel %vm1854, %v303, 0
        %v1880 = vsel %vm1854, %v304, 0
        %v1883 = vsel %vm1854, %v305, 0
        %v1886 = vsel %vm1854, %v306, 0
        %v1889 = vsel %vm1854, %v307, 0
        %v1892 = vsel %vm1854, %v308, 0
        %v1895 = vsel %vm1854, %v309, 0
        %v1898 = vsel %vm1854, %v310, 0
        %v1901 = vsel %vm1854, %v311, 0
        %v1904 = vsel %vm1854, %v312, 0
        %v1907 = vsel %vm1854, %v313, 0
        %v1910 = vsel %vm1854, %v314, 0
        %v1913 = vsel %vm1854, %v315, 0
        %v1916 = vsel %vm1854, %v316, 0
        %v1919 = vsel %vm1854, %v317, 0
        %v1922 = vsel %vm1854, %v318, 0
        %v1925 = vsel %vm1854, %v319, 0
        %v1928 = vsel %vm1854, %v320, 0
        %v1931 = vsel %vm1854, %v321, 0
        %v1934 = vsel %vm1854, %v322, 0
        %v1937 = vsel %vm1854, %v323, 0
        %v1940 = vsel %vm1854, %v324, 0
        %v1943 = vsel %vm1854, %v325, 0
        %v1946 = vsel %vm1854, %v326, 0
        %v1949 = vsel %vm1854, %v327, 0
        %v1952 = vsel %vm1854, %v328, 0
        %v1955 = vsel %vm1854, %v329, 0
        %v1958 = vsel %vm1854, %v330, 0
        %v1961 = vsel %vm1854, %v331, 0
        %1963 = vmatprep.subr.mxu0 %v369
        %1964 = vmatpush1.msra.mxu0 %v368
        %1965 = vmatprep.subr.mxu0 0.0
        %1966 = vmatpush1.msra.mxu0 0.0
        %1967 = vmatprep.subr.mxu0 0.0
        %1968 = vmatpush1.msra.mxu0 0.0
        %1969 = vmatprep.subr.mxu0 0.0
        %1970 = vmatpush1.msra.mxu0 0.0
        %1971 = vmatprep.subr.mxu0 0.0
        %1972 = vmatpush1.msra.mxu0 0.0
        %1973 = vmatprep.subr.mxu0 0.0
        %1974 = vmatpush1.msra.mxu0 0.0
        %1975 = vmatprep.subr.mxu0 0.0
        %1976 = vmatpush1.msra.mxu0 0.0
        %1977 = vmatprep.subr.mxu0 0.0
        %1978 = vmatpush1.msra.mxu0 0.0
        %1979 = vmatprep.subr.mxu0 0.0
        %1980 = vmatpush1.msra.mxu0 0.0
        %1981 = vmatprep.subr.mxu0 0.0
        %1982 = vmatpush1.msra.mxu0 0.0
        %1983 = vmatprep.subr.mxu0 0.0
        %1984 = vmatpush1.msra.mxu0 0.0
        %1985 = vmatprep.subr.mxu0 0.0
        %1986 = vmatpush1.msra.mxu0 0.0
        %1987 = vmatprep.subr.mxu0 0.0
        %1988 = vmatpush1.msra.mxu0 0.0
        %1989 = vmatprep.subr.mxu0 0.0
        %1990 = vmatpush1.msra.mxu0 0.0
        %1991 = vmatprep.subr.mxu0 0.0
        %1992 = vmatpush1.msra.mxu0 0.0
        %1993 = vmatprep.subr.mxu0 0.0
        %1994 = vmatpush1.msra.mxu0 0.0
        %1995 = vmatprep.subr.mxu0 0.0
        %1996 = vmatpush1.msra.mxu0 0.0
        %1997 = vmatprep.subr.mxu0 0.0
        %1998 = vmatpush1.msra.mxu0 0.0
        %1999 = vmatprep.subr.mxu0 0.0
        %2000 = vmatpush1.msra.mxu0 0.0
        %2001 = vmatprep.subr.mxu0 0.0
        %2002 = vmatpush1.msra.mxu0 0.0
        %2003 = vmatprep.subr.mxu0 0.0
        %2004 = vmatpush1.msra.mxu0 0.0
        %2005 = vmatprep.subr.mxu0 0.0
        %2006 = vmatpush1.msra.mxu0 0.0
        %2007 = vmatprep.subr.mxu0 0.0
        %2008 = vmatpush1.msra.mxu0 0.0
        %2009 = vmatprep.subr.mxu0 0.0
        %2010 = vmatpush1.msra.mxu0 0.0
        %2011 = vmatprep.subr.mxu0 0.0
        %2012 = vmatpush1.msra.mxu0 0.0
        %2013 = vmatprep.subr.mxu0 0.0
        %2014 = vmatpush1.msra.mxu0 0.0
        %2015 = vmatprep.subr.mxu0 0.0
        %2016 = vmatpush1.msra.mxu0 0.0
        %2017 = vmatprep.subr.mxu0 0.0
        %2018 = vmatpush1.msra.mxu0 0.0
        %2019 = vmatprep.subr.mxu0 0.0
        %2020 = vmatpush1.msra.mxu0 0.0
        %2021 = vmatprep.subr.mxu0 0.0
        %2022 = vmatpush1.msra.mxu0 0.0
        %2023 = vmatprep.subr.mxu0 0.0
        %2024 = vmatpush1.msra.mxu0 0.0
        %2025 = vmatprep.subr.mxu0 0.0
        %2026 = vmatpush1.msra.mxu0 0.0
        %2027 = vmatprep.mubr.f32.mxu0 0.0
        %2028 = vmatmul.mubr.f32.gmra.mrb[0].mxu0 %v1856
        %v2029 = vpop.f32.mrb[0].mxu0
        %v2030 = vadd.f32 %v588, %v2029
        %v2031 = vpop.f32.mrb[0].mxu0
        %v2032 = vadd.f32 %v590, %v2031
        %2033 = vmatprep.mubr.f32.mxu0 0.0
        %2034 = vmatmul.mubr.f32.gmra.mrb[0].mxu0 %v1859
        %v2035 = vpop.f32.mrb[0].mxu0
        %v2036 = vadd.f32 %v594, %v2035
        %v2037 = vpop.f32.mrb[0].mxu0
        %v2038 = vadd.f32 %v596, %v2037
        %2039 = vmatprep.mubr.f32.mxu0 0.0
        %2040 = vmatmul.mubr.f32.gmra.mrb[0].mxu0 %v1862
        %v2041 = vpop.f32.mrb[0].mxu0
        %v2042 = vadd.f32 %v600, %v2041
        %v2043 = vpop.f32.mrb[0].mxu0
        %v2044 = vadd.f32 %v602, %v2043
        %2045 = vmatprep.mubr.f32.mxu0 0.0
        %2046 = vmatmul.mubr.f32.gmra.mrb[0].mxu0 %v1865
        %v2047 = vpop.f32.mrb[0].mxu0
        %v2048 = vadd.f32 %v606, %v2047
        %v2049 = vpop.f32.mrb[0].mxu0
        %v2050 = vadd.f32 %v608, %v2049
        %2051 = vmatprep.mubr.f32.mxu0 0.0
        %2052 = vmatmul.mubr.f32.gmra.mrb[0].mxu0 %v1868
        %v2053 = vpop.f32.mrb[0].mxu0
        %v2054 = vadd.f32 %v612, %v2053
        %v2055 = vpop.f32.mrb[0].mxu0
        %v2056 = vadd.f32 %v614, %v2055
        %2057 = vmatprep.mubr.f32.mxu0 0.0
        %2058 = vmatmul.mubr.f32.gmra.mrb[0].mxu0 %v1871
        %v2059 = vpop.f32.mrb[0].mxu0
        %v2060 = vadd.f32 %v618, %v2059
        %v2061 = vpop.f32.mrb[0].mxu0
        %v2062 = vadd.f32 %v620, %v2061
        %2063 = vmatprep.mubr.f32.mxu0 0.0
        %2064 = vmatmul.mubr.f32.gmra.mrb[0].mxu0 %v1874
        %v2065 = vpop.f32.mrb[0].mxu0
        %v2066 = vadd.f32 %v624, %v2065
        %v2067 = vpop.f32.mrb[0].mxu0
        %v2068 = vadd.f32 %v626, %v2067
        %2069 = vmatprep.mubr.f32.mxu0 0.0
        %2070 = vmatmul.mubr.f32.gmra.mrb[0].mxu0 %v1877
        %v2071 = vpop.f32.mrb[0].mxu0
        %v2072 = vadd.f32 %v630, %v2071
        %v2073 = vpop.f32.mrb[0].mxu0
        %v2074 = vadd.f32 %v632, %v2073
        %2075 = vmatprep.mubr.f32.mxu0 0.0
        %2076 = vmatmul.mubr.f32.gmra.mrb[0].mxu0 %v1880
        %v2077 = vpop.f32.mrb[0].mxu0
        %v2078 = vadd.f32 %v636, %v2077
        %v2079 = vpop.f32.mrb[0].mxu0
        %v2080 = vadd.f32 %v638, %v2079
        %2081 = vmatprep.mubr.f32.mxu0 0.0
        %2082 = vmatmul.mubr.f32.gmra.mrb[0].mxu0 %v1883
        %v2083 = vpop.f32.mrb[0].mxu0
        %v2084 = vadd.f32 %v642, %v2083
        %v2085 = vpop.f32.mrb[0].mxu0
        %v2086 = vadd.f32 %v644, %v2085
        %2087 = vmatprep.mubr.f32.mxu0 0.0
        %2088 = vmatmul.mubr.f32.gmra.mrb[0].mxu0 %v1886
        %v2089 = vpop.f32.mrb[0].mxu0
        %v2090 = vadd.f32 %v648, %v2089
        %v2091 = vpop.f32.mrb[0].mxu0
        %v2092 = vadd.f32 %v650, %v2091
        %2093 = vmatprep.mubr.f32.mxu0 0.0
        %2094 = vmatmul.mubr.f32.gmra.mrb[0].mxu0 %v1889
        %v2095 = vpop.f32.mrb[0].mxu0
        %v2096 = vadd.f32 %v654, %v2095
        %v2097 = vpop.f32.mrb[0].mxu0
        %v2098 = vadd.f32 %v656, %v2097
        %2099 = vmatprep.mubr.f32.mxu0 0.0
        %2100 = vmatmul.mubr.f32.gmra.mrb[0].mxu0 %v1892
        %v2101 = vpop.f32.mrb[0].mxu0
        %v2102 = vadd.f32 %v660, %v2101
        %v2103 = vpop.f32.mrb[0].mxu0
        %v2104 = vadd.f32 %v662, %v2103
        %2105 = vmatprep.mubr.f32.mxu0 0.0
        %2106 = vmatmul.mubr.f32.gmra.mrb[0].mxu0 %v1895
        %v2107 = vpop.f32.mrb[0].mxu0
        %v2108 = vadd.f32 %v666, %v2107
        %v2109 = vpop.f32.mrb[0].mxu0
        %v2110 = vadd.f32 %v668, %v2109
        %2111 = vmatprep.mubr.f32.mxu0 0.0
        %2112 = vmatmul.mubr.f32.gmra.mrb[0].mxu0 %v1898
        %v2113 = vpop.f32.mrb[0].mxu0
        %v2114 = vadd.f32 %v672, %v2113
        %v2115 = vpop.f32.mrb[0].mxu0
        %v2116 = vadd.f32 %v674, %v2115
        %2117 = vmatprep.mubr.f32.mxu0 0.0
        %2118 = vmatmul.mubr.f32.gmra.mrb[0].mxu0 %v1901
        %v2119 = vpop.f32.mrb[0].mxu0
        %v2120 = vadd.f32 %v678, %v2119
        %v2121 = vpop.f32.mrb[0].mxu0
        %v2122 = vadd.f32 %v680, %v2121
        %2123 = vmatprep.mubr.f32.mxu0 0.0
        %2124 = vmatmul.mubr.f32.gmra.mrb[0].mxu0 %v1904
        %v2125 = vpop.f32.mrb[0].mxu0
        %v2126 = vadd.f32 %v684, %v2125
        %v2127 = vpop.f32.mrb[0].mxu0
        %v2128 = vadd.f32 %v686, %v2127
        %2129 = vmatprep.mubr.f32.mxu0 0.0
        %2130 = vmatmul.mubr.f32.gmra.mrb[0].mxu0 %v1907
        %v2131 = vpop.f32.mrb[0].mxu0
        %v2132 = vadd.f32 %v690, %v2131
        %v2133 = vpop.f32.mrb[0].mxu0
        %v2134 = vadd.f32 %v692, %v2133
        %2135 = vmatprep.mubr.f32.mxu0 0.0
        %2136 = vmatmul.mubr.f32.gmra.mrb[0].mxu0 %v1910
        %v2137 = vpop.f32.mrb[0].mxu0
        %v2138 = vadd.f32 %v696, %v2137
        %v2139 = vpop.f32.mrb[0].mxu0
        %v2140 = vadd.f32 %v698, %v2139
        %2141 = vmatprep.mubr.f32.mxu0 0.0
        %2142 = vmatmul.mubr.f32.gmra.mrb[0].mxu0 %v1913
        %v2143 = vpop.f32.mrb[0].mxu0
        %v2144 = vadd.f32 %v702, %v2143
        %v2145 = vpop.f32.mrb[0].mxu0
        %v2146 = vadd.f32 %v704, %v2145
        %2147 = vmatprep.mubr.f32.mxu0 0.0
        %2148 = vmatmul.mubr.f32.gmra.mrb[0].mxu0 %v1916
        %v2149 = vpop.f32.mrb[0].mxu0
        %v2150 = vadd.f32 %v708, %v2149
        %v2151 = vpop.f32.mrb[0].mxu0
        %v2152 = vadd.f32 %v710, %v2151
        %2153 = vmatprep.mubr.f32.mxu0 0.0
        %2154 = vmatmul.mubr.f32.gmra.mrb[0].mxu0 %v1919
        %v2155 = vpop.f32.mrb[0].mxu0
        %v2156 = vadd.f32 %v714, %v2155
        %v2157 = vpop.f32.mrb[0].mxu0
        %v2158 = vadd.f32 %v716, %v2157
        %2159 = vmatprep.mubr.f32.mxu0 0.0
        %2160 = vmatmul.mubr.f32.gmra.mrb[0].mxu0 %v1922
        %v2161 = vpop.f32.mrb[0].mxu0
        %v2162 = vadd.f32 %v720, %v2161
        %v2163 = vpop.f32.mrb[0].mxu0
        %v2164 = vadd.f32 %v722, %v2163
        %2165 = vmatprep.mubr.f32.mxu0 0.0
        %2166 = vmatmul.mubr.f32.gmra.mrb[0].mxu0 %v1925
        %v2167 = vpop.f32.mrb[0].mxu0
        %v2168 = vadd.f32 %v726, %v2167
        %v2169 = vpop.f32.mrb[0].mxu0
        %v2170 = vadd.f32 %v728, %v2169
        %2171 = vmatprep.mubr.f32.mxu0 0.0
        %2172 = vmatmul.mubr.f32.gmra.mrb[0].mxu0 %v1928
        %v2173 = vpop.f32.mrb[0].mxu0
        %v2174 = vadd.f32 %v732, %v2173
        %v2175 = vpop.f32.mrb[0].mxu0
        %v2176 = vadd.f32 %v734, %v2175
        %2177 = vmatprep.mubr.f32.mxu0 0.0
        %2178 = vmatmul.mubr.f32.gmra.mrb[0].mxu0 %v1931
        %v2179 = vpop.f32.mrb[0].mxu0
        %v2180 = vadd.f32 %v738, %v2179
        %v2181 = vpop.f32.mrb[0].mxu0
        %v2182 = vadd.f32 %v740, %v2181
        %2183 = vmatprep.mubr.f32.mxu0 0.0
        %2184 = vmatmul.mubr.f32.gmra.mrb[0].mxu0 %v1934
        %v2185 = vpop.f32.mrb[0].mxu0
        %v2186 = vadd.f32 %v744, %v2185
        %v2187 = vpop.f32.mrb[0].mxu0
        %v2188 = vadd.f32 %v746, %v2187
        %2189 = vmatprep.mubr.f32.mxu0 0.0
        %2190 = vmatmul.mubr.f32.gmra.mrb[0].mxu0 %v1937
        %v2191 = vpop.f32.mrb[0].mxu0
        %v2192 = vadd.f32 %v750, %v2191
        %v2193 = vpop.f32.mrb[0].mxu0
        %v2194 = vadd.f32 %v752, %v2193
        %2195 = vmatprep.mubr.f32.mxu0 0.0
        %2196 = vmatmul.mubr.f32.gmra.mrb[0].mxu0 %v1940
        %v2197 = vpop.f32.mrb[0].mxu0
        %v2198 = vadd.f32 %v756, %v2197
        %v2199 = vpop.f32.mrb[0].mxu0
        %v2200 = vadd.f32 %v758, %v2199
        %2201 = vmatprep.mubr.f32.mxu0 0.0
        %2202 = vmatmul.mubr.f32.gmra.mrb[0].mxu0 %v1943
        %v2203 = vpop.f32.mrb[0].mxu0
        %v2204 = vadd.f32 %v762, %v2203
        %v2205 = vpop.f32.mrb[0].mxu0
        %v2206 = vadd.f32 %v764, %v2205
        %2207 = vmatprep.mubr.f32.mxu0 0.0
        %2208 = vmatmul.mubr.f32.gmra.mrb[0].mxu0 %v1946
        %v2209 = vpop.f32.mrb[0].mxu0
        %v2210 = vadd.f32 %v768, %v2209
        %v2211 = vpop.f32.mrb[0].mxu0
        %v2212 = vadd.f32 %v770, %v2211
        %2213 = vmatprep.mubr.f32.mxu0 0.0
        %2214 = vmatmul.mubr.f32.gmra.mrb[0].mxu0 %v1949
        %v2215 = vpop.f32.mrb[0].mxu0
        %v2216 = vadd.f32 %v774, %v2215
        %v2217 = vpop.f32.mrb[0].mxu0
        %v2218 = vadd.f32 %v776, %v2217
        %2219 = vmatprep.mubr.f32.mxu0 0.0
        %2220 = vmatmul.mubr.f32.gmra.mrb[0].mxu0 %v1952
        %v2221 = vpop.f32.mrb[0].mxu0
        %v2222 = vpop.f32.mrb[0].mxu0
        %2223 = vmatprep.mubr.f32.mxu0 0.0
        %2224 = vmatmul.mubr.f32.gmra.mrb[0].mxu0 %v1955
        %v2225 = vpop.f32.mrb[0].mxu0
        %v2226 = vpop.f32.mrb[0].mxu0
        %2227 = vmatprep.mubr.f32.mxu0 0.0
        %2228 = vmatmul.mubr.f32.gmra.mrb[0].mxu0 %v1958
        %v2229 = vpop.f32.mrb[0].mxu0
        %v2230 = vpop.f32.mrb[0].mxu0
        %2231 = vmatprep.mubr.f32.mxu0 0.0
        %2232 = vmatmul.mubr.f32.gmra.mrb[0].mxu0 %v1961
        %v2233 = vpop.f32.mrb[0].mxu0
        %v2234 = vpop.f32.mrb[0].mxu0
        %2235 = vdwg.mxu0
        %2236 = vmatprep.subr.mxu0 %v371
        %2237 = vmatpush1.msra.mxu0 %v370
        %2238 = vmatprep.subr.mxu0 0.0
        %2239 = vmatpush1.msra.mxu0 0.0
        %2240 = vmatprep.subr.mxu0 0.0
        %2241 = vmatpush1.msra.mxu0 0.0
        %2242 = vmatprep.subr.mxu0 0.0
        %2243 = vmatpush1.msra.mxu0 0.0
        %2244 = vmatprep.subr.mxu0 0.0
        %2245 = vmatpush1.msra.mxu0 0.0
        %2246 = vmatprep.subr.mxu0 0.0
        %2247 = vmatpush1.msra.mxu0 0.0
        %2248 = vmatprep.subr.mxu0 0.0
        %2249 = vmatpush1.msra.mxu0 0.0
        %2250 = vmatprep.subr.mxu0 0.0
        %2251 = vmatpush1.msra.mxu0 0.0
        %2252 = vmatprep.subr.mxu0 0.0
        %2253 = vmatpush1.msra.mxu0 0.0
        %2254 = vmatprep.subr.mxu0 0.0
        %2255 = vmatpush1.msra.mxu0 0.0
        %2256 = vmatprep.subr.mxu0 0.0
        %2257 = vmatpush1.msra.mxu0 0.0
        %2258 = vmatprep.subr.mxu0 0.0
        %2259 = vmatpush1.msra.mxu0 0.0
        %2260 = vmatprep.subr.mxu0 0.0
        %2261 = vmatpush1.msra.mxu0 0.0
        %2262 = vmatprep.subr.mxu0 0.0
        %2263 = vmatpush1.msra.mxu0 0.0
        %2264 = vmatprep.subr.mxu0 0.0
        %2265 = vmatpush1.msra.mxu0 0.0
        %2266 = vmatprep.subr.mxu0 0.0
        %2267 = vmatpush1.msra.mxu0 0.0
        %2268 = vmatprep.subr.mxu0 0.0
        %2269 = vmatpush1.msra.mxu0 0.0
        %2270 = vmatprep.subr.mxu0 0.0
        %2271 = vmatpush1.msra.mxu0 0.0
        %2272 = vmatprep.subr.mxu0 0.0
        %2273 = vmatpush1.msra.mxu0 0.0
        %2274 = vmatprep.subr.mxu0 0.0
        %2275 = vmatpush1.msra.mxu0 0.0
        %2276 = vmatprep.subr.mxu0 0.0
        %2277 = vmatpush1.msra.mxu0 0.0
        %2278 = vmatprep.subr.mxu0 0.0
        %2279 = vmatpush1.msra.mxu0 0.0
        %2280 = vmatprep.subr.mxu0 0.0
        %2281 = vmatpush1.msra.mxu0 0.0
        %2282 = vmatprep.subr.mxu0 0.0
        %2283 = vmatpush1.msra.mxu0 0.0
        %2284 = vmatprep.subr.mxu0 0.0
        %2285 = vmatpush1.msra.mxu0 0.0
        %2286 = vmatprep.subr.mxu0 0.0
        %2287 = vmatpush1.msra.mxu0 0.0
        %2288 = vmatprep.subr.mxu0 0.0
        %2289 = vmatpush1.msra.mxu0 0.0
        %2290 = vmatprep.subr.mxu0 0.0
        %2291 = vmatpush1.msra.mxu0 0.0
        %2292 = vmatprep.subr.mxu0 0.0
        %2293 = vmatpush1.msra.mxu0 0.0
        %2294 = vmatprep.subr.mxu0 0.0
        %2295 = vmatpush1.msra.mxu0 0.0
        %2296 = vmatprep.subr.mxu0 0.0
        %2297 = vmatpush1.msra.mxu0 0.0
        %2298 = vmatprep.subr.mxu0 0.0
        %2299 = vmatpush1.msra.mxu0 0.0
        %2300 = vmatprep.mubr.f32.mxu0 0.0
        %2301 = vmatmul.mubr.f32.gmra.mrb[0].mxu0 %v1856
        %v2302 = vpop.f32.mrb[0].mxu0
        %v2303 = vadd.f32 %v861, %v2302
        %v2304 = vpop.f32.mrb[0].mxu0
        %2305 = vmatprep.mubr.f32.mxu0 0.0
        %2306 = vmatmul.mubr.f32.gmra.mrb[0].mxu0 %v1859
        %v2307 = vpop.f32.mrb[0].mxu0
        %v2308 = vadd.f32 %v866, %v2307
        %v2309 = vpop.f32.mrb[0].mxu0
        %2310 = vmatprep.mubr.f32.mxu0 0.0
        %2311 = vmatmul.mubr.f32.gmra.mrb[0].mxu0 %v1862
        %v2312 = vpop.f32.mrb[0].mxu0
        %v2313 = vadd.f32 %v871, %v2312
        %v2314 = vpop.f32.mrb[0].mxu0
        %v2315 = vadd.f32 %v873, %v2314
        %2316 = vmatprep.mubr.f32.mxu0 0.0
        %2317 = vmatmul.mubr.f32.gmra.mrb[0].mxu0 %v1865
        %v2318 = vpop.f32.mrb[0].mxu0
        %v2319 = vadd.f32 %v877, %v2318
        %v2320 = vpop.f32.mrb[0].mxu0
        %v2321 = vadd.f32 %v879, %v2320
        %2322 = vmatprep.mubr.f32.mxu0 0.0
        %2323 = vmatmul.mubr.f32.gmra.mrb[0].mxu0 %v1868
        %v2324 = vpop.f32.mrb[0].mxu0
        %v2325 = vadd.f32 %v883, %v2324
        %v2326 = vpop.f32.mrb[0].mxu0
        %v2327 = vadd.f32 %v885, %v2326
        %2328 = vmatprep.mubr.f32.mxu0 0.0
        %2329 = vmatmul.mubr.f32.gmra.mrb[0].mxu0 %v1871
        %v2330 = vpop.f32.mrb[0].mxu0
        %v2331 = vadd.f32 %v889, %v2330
        %v2332 = vpop.f32.mrb[0].mxu0
        %v2333 = vadd.f32 %v891, %v2332
        %2334 = vmatprep.mubr.f32.mxu0 0.0
        %2335 = vmatmul.mubr.f32.gmra.mrb[0].mxu0 %v1874
        %v2336 = vpop.f32.mrb[0].mxu0
        %v2337 = vadd.f32 %v895, %v2336
        %v2338 = vpop.f32.mrb[0].mxu0
        %v2339 = vadd.f32 %v897, %v2338
        %2340 = vmatprep.mubr.f32.mxu0 0.0
        %2341 = vmatmul.mubr.f32.gmra.mrb[0].mxu0 %v1877
        %v2342 = vpop.f32.mrb[0].mxu0
        %v2343 = vadd.f32 %v901, %v2342
        %v2344 = vpop.f32.mrb[0].mxu0
        %v2345 = vadd.f32 %v903, %v2344
        %2346 = vmatprep.mubr.f32.mxu0 0.0
        %2347 = vmatmul.mubr.f32.gmra.mrb[0].mxu0 %v1880
        %v2348 = vpop.f32.mrb[0].mxu0
        %v2349 = vadd.f32 %v907, %v2348
        %v2350 = vpop.f32.mrb[0].mxu0
        %v2351 = vadd.f32 %v909, %v2350
        %2352 = vmatprep.mubr.f32.mxu0 0.0
        %2353 = vmatmul.mubr.f32.gmra.mrb[0].mxu0 %v1883
        %v2354 = vpop.f32.mrb[0].mxu0
        %v2355 = vadd.f32 %v913, %v2354
        %v2356 = vpop.f32.mrb[0].mxu0
        %v2357 = vadd.f32 %v915, %v2356
        %2358 = vmatprep.mubr.f32.mxu0 0.0
        %2359 = vmatmul.mubr.f32.gmra.mrb[0].mxu0 %v1886
        %v2360 = vpop.f32.mrb[0].mxu0
        %v2361 = vadd.f32 %v919, %v2360
        %v2362 = vpop.f32.mrb[0].mxu0
        %v2363 = vadd.f32 %v921, %v2362
        %2364 = vmatprep.mubr.f32.mxu0 0.0
        %2365 = vmatmul.mubr.f32.gmra.mrb[0].mxu0 %v1889
        %v2366 = vpop.f32.mrb[0].mxu0
        %v2367 = vadd.f32 %v925, %v2366
        %v2368 = vpop.f32.mrb[0].mxu0
        %v2369 = vadd.f32 %v927, %v2368
        %2370 = vmatprep.mubr.f32.mxu0 0.0
        %2371 = vmatmul.mubr.f32.gmra.mrb[0].mxu0 %v1892
        %v2372 = vpop.f32.mrb[0].mxu0
        %v2373 = vadd.f32 %v931, %v2372
        %v2374 = vpop.f32.mrb[0].mxu0
        %v2375 = vadd.f32 %v933, %v2374
        %2376 = vmatprep.mubr.f32.mxu0 0.0
        %2377 = vmatmul.mubr.f32.gmra.mrb[0].mxu0 %v1895
        %v2378 = vpop.f32.mrb[0].mxu0
        %v2379 = vadd.f32 %v937, %v2378
        %v2380 = vpop.f32.mrb[0].mxu0
        %v2381 = vadd.f32 %v939, %v2380
        %2382 = vmatprep.mubr.f32.mxu0 0.0
        %2383 = vmatmul.mubr.f32.gmra.mrb[0].mxu0 %v1898
        %v2384 = vpop.f32.mrb[0].mxu0
        %v2385 = vadd.f32 %v943, %v2384
        %v2386 = vpop.f32.mrb[0].mxu0
        %v2387 = vadd.f32 %v945, %v2386
        %2388 = vmatprep.mubr.f32.mxu0 0.0
        %2389 = vmatmul.mubr.f32.gmra.mrb[0].mxu0 %v1901
        %v2390 = vpop.f32.mrb[0].mxu0
        %v2391 = vadd.f32 %v949, %v2390
        %v2392 = vpop.f32.mrb[0].mxu0
        %v2393 = vadd.f32 %v951, %v2392
        %2394 = vmatprep.mubr.f32.mxu0 0.0
        %2395 = vmatmul.mubr.f32.gmra.mrb[0].mxu0 %v1904
        %v2396 = vpop.f32.mrb[0].mxu0
        %v2397 = vadd.f32 %v955, %v2396
        %v2398 = vpop.f32.mrb[0].mxu0
        %v2399 = vadd.f32 %v957, %v2398
        %2400 = vmatprep.mubr.f32.mxu0 0.0
        %2401 = vmatmul.mubr.f32.gmra.mrb[0].mxu0 %v1907
        %v2402 = vpop.f32.mrb[0].mxu0
        %v2403 = vadd.f32 %v961, %v2402
        %v2404 = vpop.f32.mrb[0].mxu0
        %v2405 = vadd.f32 %v963, %v2404
        %2406 = vmatprep.mubr.f32.mxu0 0.0
        %2407 = vmatmul.mubr.f32.gmra.mrb[0].mxu0 %v1910
        %v2408 = vpop.f32.mrb[0].mxu0
        %v2409 = vadd.f32 %v967, %v2408
        %v2410 = vpop.f32.mrb[0].mxu0
        %v2411 = vadd.f32 %v969, %v2410
        %2412 = vmatprep.mubr.f32.mxu0 0.0
        %2413 = vmatmul.mubr.f32.gmra.mrb[0].mxu0 %v1913
        %v2414 = vpop.f32.mrb[0].mxu0
        %v2415 = vadd.f32 %v973, %v2414
        %v2416 = vpop.f32.mrb[0].mxu0
        %v2417 = vadd.f32 %v975, %v2416
        %2418 = vmatprep.mubr.f32.mxu0 0.0
        %2419 = vmatmul.mubr.f32.gmra.mrb[0].mxu0 %v1916
        %v2420 = vpop.f32.mrb[0].mxu0
        %v2421 = vadd.f32 %v979, %v2420
        %v2422 = vpop.f32.mrb[0].mxu0
        %v2423 = vadd.f32 %v981, %v2422
        %2424 = vmatprep.mubr.f32.mxu0 0.0
        %2425 = vmatmul.mubr.f32.gmra.mrb[0].mxu0 %v1919
        %v2426 = vpop.f32.mrb[0].mxu0
        %v2427 = vadd.f32 %v985, %v2426
        %v2428 = vpop.f32.mrb[0].mxu0
        %v2429 = vadd.f32 %v987, %v2428
        %2430 = vmatprep.mubr.f32.mxu0 0.0
        %2431 = vmatmul.mubr.f32.gmra.mrb[0].mxu0 %v1922
        %v2432 = vpop.f32.mrb[0].mxu0
        %v2433 = vadd.f32 %v991, %v2432
        %v2434 = vpop.f32.mrb[0].mxu0
        %v2435 = vadd.f32 %v993, %v2434
        %2436 = vmatprep.mubr.f32.mxu0 0.0
        %2437 = vmatmul.mubr.f32.gmra.mrb[0].mxu0 %v1925
        %v2438 = vpop.f32.mrb[0].mxu0
        %v2439 = vadd.f32 %v997, %v2438
        %v2440 = vpop.f32.mrb[0].mxu0
        %v2441 = vadd.f32 %v999, %v2440
        %2442 = vmatprep.mubr.f32.mxu0 0.0
        %2443 = vmatmul.mubr.f32.gmra.mrb[0].mxu0 %v1928
        %v2444 = vpop.f32.mrb[0].mxu0
        %v2445 = vadd.f32 %v1003, %v2444
        %v2446 = vpop.f32.mrb[0].mxu0
        %v2447 = vadd.f32 %v1005, %v2446
        %2448 = vmatprep.mubr.f32.mxu0 0.0
        %2449 = vmatmul.mubr.f32.gmra.mrb[0].mxu0 %v1931
        %v2450 = vpop.f32.mrb[0].mxu0
        %v2451 = vadd.f32 %v1009, %v2450
        %v2452 = vpop.f32.mrb[0].mxu0
        %v2453 = vadd.f32 %v1011, %v2452
        %2454 = vmatprep.mubr.f32.mxu0 0.0
        %2455 = vmatmul.mubr.f32.gmra.mrb[0].mxu0 %v1934
        %v2456 = vpop.f32.mrb[0].mxu0
        %v2457 = vadd.f32 %v1015, %v2456
        %v2458 = vpop.f32.mrb[0].mxu0
        %v2459 = vadd.f32 %v1017, %v2458
        %2460 = vmatprep.mubr.f32.mxu0 0.0
        %2461 = vmatmul.mubr.f32.gmra.mrb[0].mxu0 %v1937
        %v2462 = vpop.f32.mrb[0].mxu0
        %v2463 = vadd.f32 %v1021, %v2462
        %v2464 = vpop.f32.mrb[0].mxu0
        %v2465 = vadd.f32 %v1023, %v2464
        %2466 = vmatprep.mubr.f32.mxu0 0.0
        %2467 = vmatmul.mubr.f32.gmra.mrb[0].mxu0 %v1940
        %v2468 = vpop.f32.mrb[0].mxu0
        %v2469 = vadd.f32 %v1027, %v2468
        %v2470 = vpop.f32.mrb[0].mxu0
        %v2471 = vadd.f32 %v1029, %v2470
        %2472 = vmatprep.mubr.f32.mxu0 0.0
        %2473 = vmatmul.mubr.f32.gmra.mrb[0].mxu0 %v1943
        %v2474 = vpop.f32.mrb[0].mxu0
        %v2475 = vadd.f32 %v1033, %v2474
        %v2476 = vpop.f32.mrb[0].mxu0
        %v2477 = vadd.f32 %v1035, %v2476
        %2478 = vmatprep.mubr.f32.mxu0 0.0
        %2479 = vmatmul.mubr.f32.gmra.mrb[0].mxu0 %v1946
        %v2480 = vpop.f32.mrb[0].mxu0
        %v2481 = vadd.f32 %v1039, %v2480
        %v2482 = vpop.f32.mrb[0].mxu0
        %v2483 = vadd.f32 %v1041, %v2482
        %2484 = vmatprep.mubr.f32.mxu0 0.0
        %2485 = vmatmul.mubr.f32.gmra.mrb[0].mxu0 %v1949
        %v2486 = vpop.f32.mrb[0].mxu0
        %v2487 = vadd.f32 %v1045, %v2486
        %v2488 = vpop.f32.mrb[0].mxu0
        %v2489 = vadd.f32 %v1047, %v2488
        %2490 = vmatprep.mubr.f32.mxu0 0.0
        %2491 = vmatmul.mubr.f32.gmra.mrb[0].mxu0 %v1952
        %v2492 = vpop.f32.mrb[0].mxu0
        %v2493 = vpop.f32.mrb[0].mxu0
        %v2494 = vadd.f32 %v1052, %v2493
        %2495 = vmatprep.mubr.f32.mxu0 0.0
        %2496 = vmatmul.mubr.f32.gmra.mrb[0].mxu0 %v1955
        %v2497 = vpop.f32.mrb[0].mxu0
        %v2498 = vpop.f32.mrb[0].mxu0
        %v2499 = vadd.f32 %v1057, %v2498
        %2500 = vmatprep.mubr.f32.mxu0 0.0
        %2501 = vmatmul.mubr.f32.gmra.mrb[0].mxu0 %v1958
        %v2502 = vpop.f32.mrb[0].mxu0
        %v2503 = vpop.f32.mrb[0].mxu0
        %2504 = vmatprep.mubr.f32.mxu0 0.0
        %2505 = vmatmul.mubr.f32.gmra.mrb[0].mxu0 %v1961
        %v2506 = vpop.f32.mrb[0].mxu0
        %v2507 = vpop.f32.mrb[0].mxu0
        %2508 = vdwg.mxu0
        %2509 = vmatprep.subr.mxu0 %v373
        %2510 = vmatpush1.msra.mxu0 %v372
        %2511 = vmatprep.subr.mxu0 0.0
        %2512 = vmatpush1.msra.mxu0 0.0
        %2513 = vmatprep.subr.mxu0 0.0
        %2514 = vmatpush1.msra.mxu0 0.0
        %2515 = vmatprep.subr.mxu0 0.0
        %2516 = vmatpush1.msra.mxu0 0.0
        %2517 = vmatprep.subr.mxu0 0.0
        %2518 = vmatpush1.msra.mxu0 0.0
        %2519 = vmatprep.subr.mxu0 0.0
        %2520 = vmatpush1.msra.mxu0 0.0
        %2521 = vmatprep.subr.mxu0 0.0
        %2522 = vmatpush1.msra.mxu0 0.0
        %2523 = vmatprep.subr.mxu0 0.0
        %2524 = vmatpush1.msra.mxu0 0.0
        %2525 = vmatprep.subr.mxu0 0.0
        %2526 = vmatpush1.msra.mxu0 0.0
        %2527 = vmatprep.subr.mxu0 0.0
        %2528 = vmatpush1.msra.mxu0 0.0
        %2529 = vmatprep.subr.mxu0 0.0
        %2530 = vmatpush1.msra.mxu0 0.0
        %2531 = vmatprep.subr.mxu0 0.0
        %2532 = vmatpush1.msra.mxu0 0.0
        %2533 = vmatprep.subr.mxu0 0.0
        %2534 = vmatpush1.msra.mxu0 0.0
        %2535 = vmatprep.subr.mxu0 0.0
        %2536 = vmatpush1.msra.mxu0 0.0
        %2537 = vmatprep.subr.mxu0 0.0
        %2538 = vmatpush1.msra.mxu0 0.0
        %2539 = vmatprep.subr.mxu0 0.0
        %2540 = vmatpush1.msra.mxu0 0.0
        %2541 = vmatprep.subr.mxu0 0.0
        %2542 = vmatpush1.msra.mxu0 0.0
        %2543 = vmatprep.subr.mxu0 0.0
        %2544 = vmatpush1.msra.mxu0 0.0
        %2545 = vmatprep.subr.mxu0 0.0
        %2546 = vmatpush1.msra.mxu0 0.0
        %2547 = vmatprep.subr.mxu0 0.0
        %2548 = vmatpush1.msra.mxu0 0.0
        %2549 = vmatprep.subr.mxu0 0.0
        %2550 = vmatpush1.msra.mxu0 0.0
        %2551 = vmatprep.subr.mxu0 0.0
        %2552 = vmatpush1.msra.mxu0 0.0
        %2553 = vmatprep.subr.mxu0 0.0
        %2554 = vmatpush1.msra.mxu0 0.0
        %2555 = vmatprep.subr.mxu0 0.0
        %2556 = vmatpush1.msra.mxu0 0.0
        %2557 = vmatprep.subr.mxu0 0.0
        %2558 = vmatpush1.msra.mxu0 0.0
        %2559 = vmatprep.subr.mxu0 0.0
        %2560 = vmatpush1.msra.mxu0 0.0
        %2561 = vmatprep.subr.mxu0 0.0
        %2562 = vmatpush1.msra.mxu0 0.0
        %2563 = vmatprep.subr.mxu0 0.0
        %2564 = vmatpush1.msra.mxu0 0.0
        %2565 = vmatprep.subr.mxu0 0.0
        %2566 = vmatpush1.msra.mxu0 0.0
        %2567 = vmatprep.subr.mxu0 0.0
        %2568 = vmatpush1.msra.mxu0 0.0
        %2569 = vmatprep.subr.mxu0 0.0
        %2570 = vmatpush1.msra.mxu0 0.0
        %2571 = vmatprep.subr.mxu0 0.0
        %2572 = vmatpush1.msra.mxu0 0.0
        %2573 = vmatprep.mubr.f32.mxu0 0.0
        %2574 = vmatmul.mubr.f32.gmra.mrb[0].mxu0 %v1856
        %v2575 = vpop.f32.mrb[0].mxu0
        %v2576 = vpop.f32.mrb[0].mxu0
        %2577 = vmatprep.mubr.f32.mxu0 0.0
        %2578 = vmatmul.mubr.f32.gmra.mrb[0].mxu0 %v1859
        %v2579 = vpop.f32.mrb[0].mxu0
        %v2580 = vpop.f32.mrb[0].mxu0
        %2581 = vmatprep.mubr.f32.mxu0 0.0
        %2582 = vmatmul.mubr.f32.gmra.mrb[0].mxu0 %v1862
        %v2583 = vpop.f32.mrb[0].mxu0
        %v2584 = vadd.f32 %v1142, %v2583
        %v2585 = vpop.f32.mrb[0].mxu0
        %v2586 = vadd.f32 %v1144, %v2585
        %2587 = vmatprep.mubr.f32.mxu0 0.0
        %2588 = vmatmul.mubr.f32.gmra.mrb[0].mxu0 %v1865
        %v2589 = vpop.f32.mrb[0].mxu0
        %v2590 = vadd.f32 %v1148, %v2589
        %v2591 = vpop.f32.mrb[0].mxu0
        %v2592 = vadd.f32 %v1150, %v2591
        %2593 = vmatprep.mubr.f32.mxu0 0.0
        %2594 = vmatmul.mubr.f32.gmra.mrb[0].mxu0 %v1868
        %v2595 = vpop.f32.mrb[0].mxu0
        %v2596 = vadd.f32 %v1154, %v2595
        %v2597 = vpop.f32.mrb[0].mxu0
        %v2598 = vadd.f32 %v1156, %v2597
        %2599 = vmatprep.mubr.f32.mxu0 0.0
        %2600 = vmatmul.mubr.f32.gmra.mrb[0].mxu0 %v1871
        %v2601 = vpop.f32.mrb[0].mxu0
        %v2602 = vadd.f32 %v1160, %v2601
        %v2603 = vpop.f32.mrb[0].mxu0
        %v2604 = vadd.f32 %v1162, %v2603
        %2605 = vmatprep.mubr.f32.mxu0 0.0
        %2606 = vmatmul.mubr.f32.gmra.mrb[0].mxu0 %v1874
        %v2607 = vpop.f32.mrb[0].mxu0
        %v2608 = vadd.f32 %v1166, %v2607
        %v2609 = vpop.f32.mrb[0].mxu0
        %v2610 = vadd.f32 %v1168, %v2609
        %2611 = vmatprep.mubr.f32.mxu0 0.0
        %2612 = vmatmul.mubr.f32.gmra.mrb[0].mxu0 %v1877
        %v2613 = vpop.f32.mrb[0].mxu0
        %v2614 = vadd.f32 %v1172, %v2613
        %v2615 = vpop.f32.mrb[0].mxu0
        %v2616 = vadd.f32 %v1174, %v2615
        %2617 = vmatprep.mubr.f32.mxu0 0.0
        %2618 = vmatmul.mubr.f32.gmra.mrb[0].mxu0 %v1880
        %v2619 = vpop.f32.mrb[0].mxu0
        %v2620 = vadd.f32 %v1178, %v2619
        %v2621 = vpop.f32.mrb[0].mxu0
        %v2622 = vadd.f32 %v1180, %v2621
        %2623 = vmatprep.mubr.f32.mxu0 0.0
        %2624 = vmatmul.mubr.f32.gmra.mrb[0].mxu0 %v1883
        %v2625 = vpop.f32.mrb[0].mxu0
        %v2626 = vadd.f32 %v1184, %v2625
        %v2627 = vpop.f32.mrb[0].mxu0
        %v2628 = vadd.f32 %v1186, %v2627
        %2629 = vmatprep.mubr.f32.mxu0 0.0
        %2630 = vmatmul.mubr.f32.gmra.mrb[0].mxu0 %v1886
        %v2631 = vpop.f32.mrb[0].mxu0
        %v2632 = vadd.f32 %v1190, %v2631
        %v2633 = vpop.f32.mrb[0].mxu0
        %v2634 = vadd.f32 %v1192, %v2633
        %2635 = vmatprep.mubr.f32.mxu0 0.0
        %2636 = vmatmul.mubr.f32.gmra.mrb[0].mxu0 %v1889
        %v2637 = vpop.f32.mrb[0].mxu0
        %v2638 = vadd.f32 %v1196, %v2637
        %v2639 = vpop.f32.mrb[0].mxu0
        %v2640 = vadd.f32 %v1198, %v2639
        %2641 = vmatprep.mubr.f32.mxu0 0.0
        %2642 = vmatmul.mubr.f32.gmra.mrb[0].mxu0 %v1892
        %v2643 = vpop.f32.mrb[0].mxu0
        %v2644 = vadd.f32 %v1202, %v2643
        %v2645 = vpop.f32.mrb[0].mxu0
        %v2646 = vadd.f32 %v1204, %v2645
        %2647 = vmatprep.mubr.f32.mxu0 0.0
        %2648 = vmatmul.mubr.f32.gmra.mrb[0].mxu0 %v1895
        %v2649 = vpop.f32.mrb[0].mxu0
        %v2650 = vadd.f32 %v1208, %v2649
        %v2651 = vpop.f32.mrb[0].mxu0
        %v2652 = vadd.f32 %v1210, %v2651
        %2653 = vmatprep.mubr.f32.mxu0 0.0
        %2654 = vmatmul.mubr.f32.gmra.mrb[0].mxu0 %v1898
        %v2655 = vpop.f32.mrb[0].mxu0
        %v2656 = vadd.f32 %v1214, %v2655
        %v2657 = vpop.f32.mrb[0].mxu0
        %v2658 = vadd.f32 %v1216, %v2657
        %2659 = vmatprep.mubr.f32.mxu0 0.0
        %2660 = vmatmul.mubr.f32.gmra.mrb[0].mxu0 %v1901
        %v2661 = vpop.f32.mrb[0].mxu0
        %v2662 = vadd.f32 %v1220, %v2661
        %v2663 = vpop.f32.mrb[0].mxu0
        %v2664 = vadd.f32 %v1222, %v2663
        %2665 = vmatprep.mubr.f32.mxu0 0.0
        %2666 = vmatmul.mubr.f32.gmra.mrb[0].mxu0 %v1904
        %v2667 = vpop.f32.mrb[0].mxu0
        %v2668 = vadd.f32 %v1226, %v2667
        %v2669 = vpop.f32.mrb[0].mxu0
        %v2670 = vadd.f32 %v1228, %v2669
        %2671 = vmatprep.mubr.f32.mxu0 0.0
        %2672 = vmatmul.mubr.f32.gmra.mrb[0].mxu0 %v1907
        %v2673 = vpop.f32.mrb[0].mxu0
        %v2674 = vadd.f32 %v1232, %v2673
        %v2675 = vpop.f32.mrb[0].mxu0
        %v2676 = vadd.f32 %v1234, %v2675
        %2677 = vmatprep.mubr.f32.mxu0 0.0
        %2678 = vmatmul.mubr.f32.gmra.mrb[0].mxu0 %v1910
        %v2679 = vpop.f32.mrb[0].mxu0
        %v2680 = vadd.f32 %v1238, %v2679
        %v2681 = vpop.f32.mrb[0].mxu0
        %v2682 = vadd.f32 %v1240, %v2681
        %2683 = vmatprep.mubr.f32.mxu0 0.0
        %2684 = vmatmul.mubr.f32.gmra.mrb[0].mxu0 %v1913
        %v2685 = vpop.f32.mrb[0].mxu0
        %v2686 = vadd.f32 %v1244, %v2685
        %v2687 = vpop.f32.mrb[0].mxu0
        %v2688 = vadd.f32 %v1246, %v2687
        %2689 = vmatprep.mubr.f32.mxu0 0.0
        %2690 = vmatmul.mubr.f32.gmra.mrb[0].mxu0 %v1916
        %v2691 = vpop.f32.mrb[0].mxu0
        %v2692 = vadd.f32 %v1250, %v2691
        %v2693 = vpop.f32.mrb[0].mxu0
        %v2694 = vadd.f32 %v1252, %v2693
        %2695 = vmatprep.mubr.f32.mxu0 0.0
        %2696 = vmatmul.mubr.f32.gmra.mrb[0].mxu0 %v1919
        %v2697 = vpop.f32.mrb[0].mxu0
        %v2698 = vadd.f32 %v1256, %v2697
        %v2699 = vpop.f32.mrb[0].mxu0
        %v2700 = vadd.f32 %v1258, %v2699
        %2701 = vmatprep.mubr.f32.mxu0 0.0
        %2702 = vmatmul.mubr.f32.gmra.mrb[0].mxu0 %v1922
        %v2703 = vpop.f32.mrb[0].mxu0
        %v2704 = vadd.f32 %v1262, %v2703
        %v2705 = vpop.f32.mrb[0].mxu0
        %v2706 = vadd.f32 %v1264, %v2705
        %2707 = vmatprep.mubr.f32.mxu0 0.0
        %2708 = vmatmul.mubr.f32.gmra.mrb[0].mxu0 %v1925
        %v2709 = vpop.f32.mrb[0].mxu0
        %v2710 = vadd.f32 %v1268, %v2709
        %v2711 = vpop.f32.mrb[0].mxu0
        %v2712 = vadd.f32 %v1270, %v2711
        %2713 = vmatprep.mubr.f32.mxu0 0.0
        %2714 = vmatmul.mubr.f32.gmra.mrb[0].mxu0 %v1928
        %v2715 = vpop.f32.mrb[0].mxu0
        %v2716 = vadd.f32 %v1274, %v2715
        %v2717 = vpop.f32.mrb[0].mxu0
        %v2718 = vadd.f32 %v1276, %v2717
        %2719 = vmatprep.mubr.f32.mxu0 0.0
        %2720 = vmatmul.mubr.f32.gmra.mrb[0].mxu0 %v1931
        %v2721 = vpop.f32.mrb[0].mxu0
        %v2722 = vadd.f32 %v1280, %v2721
        %v2723 = vpop.f32.mrb[0].mxu0
        %v2724 = vadd.f32 %v1282, %v2723
        %2725 = vmatprep.mubr.f32.mxu0 0.0
        %2726 = vmatmul.mubr.f32.gmra.mrb[0].mxu0 %v1934
        %v2727 = vpop.f32.mrb[0].mxu0
        %v2728 = vadd.f32 %v1286, %v2727
        %v2729 = vpop.f32.mrb[0].mxu0
        %v2730 = vadd.f32 %v1288, %v2729
        %2731 = vmatprep.mubr.f32.mxu0 0.0
        %2732 = vmatmul.mubr.f32.gmra.mrb[0].mxu0 %v1937
        %v2733 = vpop.f32.mrb[0].mxu0
        %v2734 = vadd.f32 %v1292, %v2733
        %v2735 = vpop.f32.mrb[0].mxu0
        %v2736 = vadd.f32 %v1294, %v2735
        %2737 = vmatprep.mubr.f32.mxu0 0.0
        %2738 = vmatmul.mubr.f32.gmra.mrb[0].mxu0 %v1940
        %v2739 = vpop.f32.mrb[0].mxu0
        %v2740 = vadd.f32 %v1298, %v2739
        %v2741 = vpop.f32.mrb[0].mxu0
        %v2742 = vadd.f32 %v1300, %v2741
        %2743 = vmatprep.mubr.f32.mxu0 0.0
        %2744 = vmatmul.mubr.f32.gmra.mrb[0].mxu0 %v1943
        %v2745 = vpop.f32.mrb[0].mxu0
        %v2746 = vadd.f32 %v1304, %v2745
        %v2747 = vpop.f32.mrb[0].mxu0
        %v2748 = vadd.f32 %v1306, %v2747
        %2749 = vmatprep.mubr.f32.mxu0 0.0
        %2750 = vmatmul.mubr.f32.gmra.mrb[0].mxu0 %v1946
        %v2751 = vpop.f32.mrb[0].mxu0
        %v2752 = vadd.f32 %v1310, %v2751
        %v2753 = vpop.f32.mrb[0].mxu0
        %v2754 = vadd.f32 %v1312, %v2753
        %2755 = vmatprep.mubr.f32.mxu0 0.0
        %2756 = vmatmul.mubr.f32.gmra.mrb[0].mxu0 %v1949
        %v2757 = vpop.f32.mrb[0].mxu0
        %v2758 = vadd.f32 %v1316, %v2757
        %v2759 = vpop.f32.mrb[0].mxu0
        %v2760 = vadd.f32 %v1318, %v2759
        %2761 = vmatprep.mubr.f32.mxu0 0.0
        %2762 = vmatmul.mubr.f32.gmra.mrb[0].mxu0 %v1952
        %v2763 = vpop.f32.mrb[0].mxu0
        %v2764 = vadd.f32 %v1322, %v2763
        %v2765 = vpop.f32.mrb[0].mxu0
        %v2766 = vadd.f32 %v1324, %v2765
        %2767 = vmatprep.mubr.f32.mxu0 0.0
        %2768 = vmatmul.mubr.f32.gmra.mrb[0].mxu0 %v1955
        %v2769 = vpop.f32.mrb[0].mxu0
        %v2770 = vadd.f32 %v1328, %v2769
        %v2771 = vpop.f32.mrb[0].mxu0
        %v2772 = vadd.f32 %v1330, %v2771
        %2773 = vmatprep.mubr.f32.mxu0 0.0
        %2774 = vmatmul.mubr.f32.gmra.mrb[0].mxu0 %v1958
        %v2775 = vpop.f32.mrb[0].mxu0
        %v2776 = vpop.f32.mrb[0].mxu0
        %2777 = vmatprep.mubr.f32.mxu0 0.0
        %2778 = vmatmul.mubr.f32.gmra.mrb[0].mxu0 %v1961
        %v2779 = vpop.f32.mrb[0].mxu0
        %v2780 = vpop.f32.mrb[0].mxu0
        %2781 = vdwg.mxu0
        %2782 = vmatprep.subr.mxu0 %v375
        %2783 = vmatpush1.msra.mxu0 %v374
        %2784 = vmatprep.subr.mxu0 0.0
        %2785 = vmatpush1.msra.mxu0 0.0
        %2786 = vmatprep.subr.mxu0 0.0
        %2787 = vmatpush1.msra.mxu0 0.0
        %2788 = vmatprep.subr.mxu0 0.0
        %2789 = vmatpush1.msra.mxu0 0.0
        %2790 = vmatprep.subr.mxu0 0.0
        %2791 = vmatpush1.msra.mxu0 0.0
        %2792 = vmatprep.subr.mxu0 0.0
        %2793 = vmatpush1.msra.mxu0 0.0
        %2794 = vmatprep.subr.mxu0 0.0
        %2795 = vmatpush1.msra.mxu0 0.0
        %2796 = vmatprep.subr.mxu0 0.0
        %2797 = vmatpush1.msra.mxu0 0.0
        %2798 = vmatprep.subr.mxu0 0.0
        %2799 = vmatpush1.msra.mxu0 0.0
        %2800 = vmatprep.subr.mxu0 0.0
        %2801 = vmatpush1.msra.mxu0 0.0
        %2802 = vmatprep.subr.mxu0 0.0
        %2803 = vmatpush1.msra.mxu0 0.0
        %2804 = vmatprep.subr.mxu0 0.0
        %2805 = vmatpush1.msra.mxu0 0.0
        %2806 = vmatprep.subr.mxu0 0.0
        %2807 = vmatpush1.msra.mxu0 0.0
        %2808 = vmatprep.subr.mxu0 0.0
        %2809 = vmatpush1.msra.mxu0 0.0
        %2810 = vmatprep.subr.mxu0 0.0
        %2811 = vmatpush1.msra.mxu0 0.0
        %2812 = vmatprep.subr.mxu0 0.0
        %2813 = vmatpush1.msra.mxu0 0.0
        %2814 = vmatprep.subr.mxu0 0.0
        %2815 = vmatpush1.msra.mxu0 0.0
        %2816 = vmatprep.subr.mxu0 0.0
        %2817 = vmatpush1.msra.mxu0 0.0
        %2818 = vmatprep.subr.mxu0 0.0
        %2819 = vmatpush1.msra.mxu0 0.0
        %2820 = vmatprep.subr.mxu0 0.0
        %2821 = vmatpush1.msra.mxu0 0.0
        %2822 = vmatprep.subr.mxu0 0.0
        %2823 = vmatpush1.msra.mxu0 0.0
        %2824 = vmatprep.subr.mxu0 0.0
        %2825 = vmatpush1.msra.mxu0 0.0
        %2826 = vmatprep.subr.mxu0 0.0
        %2827 = vmatpush1.msra.mxu0 0.0
        %2828 = vmatprep.subr.mxu0 0.0
        %2829 = vmatpush1.msra.mxu0 0.0
        %2830 = vmatprep.subr.mxu0 0.0
        %2831 = vmatpush1.msra.mxu0 0.0
        %2832 = vmatprep.subr.mxu0 0.0
        %2833 = vmatpush1.msra.mxu0 0.0
        %2834 = vmatprep.subr.mxu0 0.0
        %2835 = vmatpush1.msra.mxu0 0.0
        %2836 = vmatprep.subr.mxu0 0.0
        %2837 = vmatpush1.msra.mxu0 0.0
        %2838 = vmatprep.subr.mxu0 0.0
        %2839 = vmatpush1.msra.mxu0 0.0
        %2840 = vmatprep.subr.mxu0 0.0
        %2841 = vmatpush1.msra.mxu0 0.0
        %2842 = vmatprep.subr.mxu0 0.0
        %2843 = vmatpush1.msra.mxu0 0.0
        %2844 = vmatprep.subr.mxu0 0.0
        %2845 = vmatpush1.msra.mxu0 0.0
        %2846 = vmatprep.mubr.f32.mxu0 0.0
        %2847 = vmatmul.mubr.f32.gmra.mrb[0].mxu0 %v1856
        %v2848 = vpop.f32.mrb[0].mxu0
        %v2849 = vpop.f32.mrb[0].mxu0
        %2850 = vmatprep.mubr.f32.mxu0 0.0
        %2851 = vmatmul.mubr.f32.gmra.mrb[0].mxu0 %v1859
        %v2852 = vpop.f32.mrb[0].mxu0
        %v2853 = vpop.f32.mrb[0].mxu0
        %2854 = vmatprep.mubr.f32.mxu0 0.0
        %2855 = vmatmul.mubr.f32.gmra.mrb[0].mxu0 %v1862
        %v2856 = vpop.f32.mrb[0].mxu0
        %v2857 = vpop.f32.mrb[0].mxu0
        %2858 = vmatprep.mubr.f32.mxu0 0.0
        %2859 = vmatmul.mubr.f32.gmra.mrb[0].mxu0 %v1865
        %v2860 = vpop.f32.mrb[0].mxu0
        %v2861 = vpop.f32.mrb[0].mxu0
        %2862 = vmatprep.mubr.f32.mxu0 0.0
        %2863 = vmatmul.mubr.f32.gmra.mrb[0].mxu0 %v1868
        %v2864 = vpop.f32.mrb[0].mxu0
        %v2865 = vadd.f32 %v1423, %v2864
        %v2866 = vpop.f32.mrb[0].mxu0
        %v2867 = vadd.f32 %v1425, %v2866
        %2868 = vmatprep.mubr.f32.mxu0 0.0
        %2869 = vmatmul.mubr.f32.gmra.mrb[0].mxu0 %v1871
        %v2870 = vpop.f32.mrb[0].mxu0
        %v2871 = vadd.f32 %v1429, %v2870
        %v2872 = vpop.f32.mrb[0].mxu0
        %v2873 = vadd.f32 %v1431, %v2872
        %2874 = vmatprep.mubr.f32.mxu0 0.0
        %2875 = vmatmul.mubr.f32.gmra.mrb[0].mxu0 %v1874
        %v2876 = vpop.f32.mrb[0].mxu0
        %v2877 = vadd.f32 %v1435, %v2876
        %v2878 = vpop.f32.mrb[0].mxu0
        %v2879 = vadd.f32 %v1437, %v2878
        %2880 = vmatprep.mubr.f32.mxu0 0.0
        %2881 = vmatmul.mubr.f32.gmra.mrb[0].mxu0 %v1877
        %v2882 = vpop.f32.mrb[0].mxu0
        %v2883 = vadd.f32 %v1441, %v2882
        %v2884 = vpop.f32.mrb[0].mxu0
        %v2885 = vadd.f32 %v1443, %v2884
        %2886 = vmatprep.mubr.f32.mxu0 0.0
        %2887 = vmatmul.mubr.f32.gmra.mrb[0].mxu0 %v1880
        %v2888 = vpop.f32.mrb[0].mxu0
        %v2889 = vadd.f32 %v1447, %v2888
        %v2890 = vpop.f32.mrb[0].mxu0
        %v2891 = vadd.f32 %v1449, %v2890
        %2892 = vmatprep.mubr.f32.mxu0 0.0
        %2893 = vmatmul.mubr.f32.gmra.mrb[0].mxu0 %v1883
        %v2894 = vpop.f32.mrb[0].mxu0
        %v2895 = vadd.f32 %v1453, %v2894
        %v2896 = vpop.f32.mrb[0].mxu0
        %v2897 = vadd.f32 %v1455, %v2896
        %2898 = vmatprep.mubr.f32.mxu0 0.0
        %2899 = vmatmul.mubr.f32.gmra.mrb[0].mxu0 %v1886
        %v2900 = vpop.f32.mrb[0].mxu0
        %v2901 = vadd.f32 %v1459, %v2900
        %v2902 = vpop.f32.mrb[0].mxu0
        %v2903 = vadd.f32 %v1461, %v2902
        %2904 = vmatprep.mubr.f32.mxu0 0.0
        %2905 = vmatmul.mubr.f32.gmra.mrb[0].mxu0 %v1889
        %v2906 = vpop.f32.mrb[0].mxu0
        %v2907 = vadd.f32 %v1465, %v2906
        %v2908 = vpop.f32.mrb[0].mxu0
        %v2909 = vadd.f32 %v1467, %v2908
        %2910 = vmatprep.mubr.f32.mxu0 0.0
        %2911 = vmatmul.mubr.f32.gmra.mrb[0].mxu0 %v1892
        %v2912 = vpop.f32.mrb[0].mxu0
        %v2913 = vadd.f32 %v1471, %v2912
        %v2914 = vpop.f32.mrb[0].mxu0
        %v2915 = vadd.f32 %v1473, %v2914
        %2916 = vmatprep.mubr.f32.mxu0 0.0
        %2917 = vmatmul.mubr.f32.gmra.mrb[0].mxu0 %v1895
        %v2918 = vpop.f32.mrb[0].mxu0
        %v2919 = vadd.f32 %v1477, %v2918
        %v2920 = vpop.f32.mrb[0].mxu0
        %v2921 = vadd.f32 %v1479, %v2920
        %2922 = vmatprep.mubr.f32.mxu0 0.0
        %2923 = vmatmul.mubr.f32.gmra.mrb[0].mxu0 %v1898
        %v2924 = vpop.f32.mrb[0].mxu0
        %v2925 = vadd.f32 %v1483, %v2924
        %v2926 = vpop.f32.mrb[0].mxu0
        %v2927 = vadd.f32 %v1485, %v2926
        %2928 = vmatprep.mubr.f32.mxu0 0.0
        %2929 = vmatmul.mubr.f32.gmra.mrb[0].mxu0 %v1901
        %v2930 = vpop.f32.mrb[0].mxu0
        %v2931 = vadd.f32 %v1489, %v2930
        %v2932 = vpop.f32.mrb[0].mxu0
        %v2933 = vadd.f32 %v1491, %v2932
        %2934 = vmatprep.mubr.f32.mxu0 0.0
        %2935 = vmatmul.mubr.f32.gmra.mrb[0].mxu0 %v1904
        %v2936 = vpop.f32.mrb[0].mxu0
        %v2937 = vadd.f32 %v1495, %v2936
        %v2938 = vpop.f32.mrb[0].mxu0
        %v2939 = vadd.f32 %v1497, %v2938
        %2940 = vmatprep.mubr.f32.mxu0 0.0
        %2941 = vmatmul.mubr.f32.gmra.mrb[0].mxu0 %v1907
        %v2942 = vpop.f32.mrb[0].mxu0
        %v2943 = vadd.f32 %v1501, %v2942
        %v2944 = vpop.f32.mrb[0].mxu0
        %v2945 = vadd.f32 %v1503, %v2944
        %2946 = vmatprep.mubr.f32.mxu0 0.0
        %2947 = vmatmul.mubr.f32.gmra.mrb[0].mxu0 %v1910
        %v2948 = vpop.f32.mrb[0].mxu0
        %v2949 = vadd.f32 %v1507, %v2948
        %v2950 = vpop.f32.mrb[0].mxu0
        %v2951 = vadd.f32 %v1509, %v2950
        %2952 = vmatprep.mubr.f32.mxu0 0.0
        %2953 = vmatmul.mubr.f32.gmra.mrb[0].mxu0 %v1913
        %v2954 = vpop.f32.mrb[0].mxu0
        %v2955 = vadd.f32 %v1513, %v2954
        %v2956 = vpop.f32.mrb[0].mxu0
        %v2957 = vadd.f32 %v1515, %v2956
        %2958 = vmatprep.mubr.f32.mxu0 0.0
        %2959 = vmatmul.mubr.f32.gmra.mrb[0].mxu0 %v1916
        %v2960 = vpop.f32.mrb[0].mxu0
        %v2961 = vadd.f32 %v1519, %v2960
        %v2962 = vpop.f32.mrb[0].mxu0
        %v2963 = vadd.f32 %v1521, %v2962
        %2964 = vmatprep.mubr.f32.mxu0 0.0
        %2965 = vmatmul.mubr.f32.gmra.mrb[0].mxu0 %v1919
        %v2966 = vpop.f32.mrb[0].mxu0
        %v2967 = vadd.f32 %v1525, %v2966
        %v2968 = vpop.f32.mrb[0].mxu0
        %v2969 = vadd.f32 %v1527, %v2968
        %2970 = vmatprep.mubr.f32.mxu0 0.0
        %2971 = vmatmul.mubr.f32.gmra.mrb[0].mxu0 %v1922
        %v2972 = vpop.f32.mrb[0].mxu0
        %v2973 = vadd.f32 %v1531, %v2972
        %v2974 = vpop.f32.mrb[0].mxu0
        %v2975 = vadd.f32 %v1533, %v2974
        %2976 = vmatprep.mubr.f32.mxu0 0.0
        %2977 = vmatmul.mubr.f32.gmra.mrb[0].mxu0 %v1925
        %v2978 = vpop.f32.mrb[0].mxu0
        %v2979 = vadd.f32 %v1537, %v2978
        %v2980 = vpop.f32.mrb[0].mxu0
        %v2981 = vadd.f32 %v1539, %v2980
        %2982 = vmatprep.mubr.f32.mxu0 0.0
        %2983 = vmatmul.mubr.f32.gmra.mrb[0].mxu0 %v1928
        %v2984 = vpop.f32.mrb[0].mxu0
        %v2985 = vadd.f32 %v1543, %v2984
        %v2986 = vpop.f32.mrb[0].mxu0
        %v2987 = vadd.f32 %v1545, %v2986
        %2988 = vmatprep.mubr.f32.mxu0 0.0
        %2989 = vmatmul.mubr.f32.gmra.mrb[0].mxu0 %v1931
        %v2990 = vpop.f32.mrb[0].mxu0
        %v2991 = vadd.f32 %v1549, %v2990
        %v2992 = vpop.f32.mrb[0].mxu0
        %v2993 = vadd.f32 %v1551, %v2992
        %2994 = vmatprep.mubr.f32.mxu0 0.0
        %2995 = vmatmul.mubr.f32.gmra.mrb[0].mxu0 %v1934
        %v2996 = vpop.f32.mrb[0].mxu0
        %v2997 = vadd.f32 %v1555, %v2996
        %v2998 = vpop.f32.mrb[0].mxu0
        %v2999 = vadd.f32 %v1557, %v2998
        %3000 = vmatprep.mubr.f32.mxu0 0.0
        %3001 = vmatmul.mubr.f32.gmra.mrb[0].mxu0 %v1937
        %v3002 = vpop.f32.mrb[0].mxu0
        %v3003 = vadd.f32 %v1561, %v3002
        %v3004 = vpop.f32.mrb[0].mxu0
        %v3005 = vadd.f32 %v1563, %v3004
        %3006 = vmatprep.mubr.f32.mxu0 0.0
        %3007 = vmatmul.mubr.f32.gmra.mrb[0].mxu0 %v1940
        %v3008 = vpop.f32.mrb[0].mxu0
        %v3009 = vadd.f32 %v1567, %v3008
        %v3010 = vpop.f32.mrb[0].mxu0
        %v3011 = vadd.f32 %v1569, %v3010
        %3012 = vmatprep.mubr.f32.mxu0 0.0
        %3013 = vmatmul.mubr.f32.gmra.mrb[0].mxu0 %v1943
        %v3014 = vpop.f32.mrb[0].mxu0
        %v3015 = vadd.f32 %v1573, %v3014
        %v3016 = vpop.f32.mrb[0].mxu0
        %v3017 = vadd.f32 %v1575, %v3016
        %3018 = vmatprep.mubr.f32.mxu0 0.0
        %3019 = vmatmul.mubr.f32.gmra.mrb[0].mxu0 %v1946
        %v3020 = vpop.f32.mrb[0].mxu0
        %v3021 = vadd.f32 %v1579, %v3020
        %v3022 = vpop.f32.mrb[0].mxu0
        %v3023 = vadd.f32 %v1581, %v3022
        %3024 = vmatprep.mubr.f32.mxu0 0.0
        %3025 = vmatmul.mubr.f32.gmra.mrb[0].mxu0 %v1949
        %v3026 = vpop.f32.mrb[0].mxu0
        %v3027 = vadd.f32 %v1585, %v3026
        %v3028 = vpop.f32.mrb[0].mxu0
        %v3029 = vadd.f32 %v1587, %v3028
        %3030 = vmatprep.mubr.f32.mxu0 0.0
        %3031 = vmatmul.mubr.f32.gmra.mrb[0].mxu0 %v1952
        %v3032 = vpop.f32.mrb[0].mxu0
        %v3033 = vadd.f32 %v1591, %v3032
        %v3034 = vpop.f32.mrb[0].mxu0
        %v3035 = vadd.f32 %v1593, %v3034
        %3036 = vmatprep.mubr.f32.mxu0 0.0
        %3037 = vmatmul.mubr.f32.gmra.mrb[0].mxu0 %v1955
        %v3038 = vpop.f32.mrb[0].mxu0
        %v3039 = vadd.f32 %v1597, %v3038
        %v3040 = vpop.f32.mrb[0].mxu0
        %v3041 = vadd.f32 %v1599, %v3040
        %3042 = vmatprep.mubr.f32.mxu0 0.0
        %3043 = vmatmul.mubr.f32.gmra.mrb[0].mxu0 %v1958
        %v3044 = vpop.f32.mrb[0].mxu0
        %v3045 = vadd.f32 %v1603, %v3044
        %v3046 = vpop.f32.mrb[0].mxu0
        %v3047 = vadd.f32 %v1605, %v3046
        %3048 = vmatprep.mubr.f32.mxu0 0.0
        %3049 = vmatmul.mubr.f32.gmra.mrb[0].mxu0 %v1961
        %v3050 = vpop.f32.mrb[0].mxu0
        %v3051 = vadd.f32 %v1609, %v3050
        %v3052 = vpop.f32.mrb[0].mxu0
        %v3053 = vadd.f32 %v1611, %v3052
        %3054 = vdwg.mxu0
        %3055 = vmatprep.subr.mxu0 0.0
        %3056 = vmatpush1.msra.mxu0 %v376
        %3057 = vmatprep.subr.mxu0 0.0
        %3058 = vmatpush1.msra.mxu0 0.0
        %3059 = vmatprep.subr.mxu0 0.0
        %3060 = vmatpush1.msra.mxu0 0.0
        %3061 = vmatprep.subr.mxu0 0.0
        %3062 = vmatpush1.msra.mxu0 0.0
        %3063 = vmatprep.subr.mxu0 0.0
        %3064 = vmatpush1.msra.mxu0 0.0
        %3065 = vmatprep.subr.mxu0 0.0
        %3066 = vmatpush1.msra.mxu0 0.0
        %3067 = vmatprep.subr.mxu0 0.0
        %3068 = vmatpush1.msra.mxu0 0.0
        %3069 = vmatprep.subr.mxu0 0.0
        %3070 = vmatpush1.msra.mxu0 0.0
        %3071 = vmatprep.subr.mxu0 0.0
        %3072 = vmatpush1.msra.mxu0 0.0
        %3073 = vmatprep.subr.mxu0 0.0
        %3074 = vmatpush1.msra.mxu0 0.0
        %3075 = vmatprep.subr.mxu0 0.0
        %3076 = vmatpush1.msra.mxu0 0.0
        %3077 = vmatprep.subr.mxu0 0.0
        %3078 = vmatpush1.msra.mxu0 0.0
        %3079 = vmatprep.subr.mxu0 0.0
        %3080 = vmatpush1.msra.mxu0 0.0
        %3081 = vmatprep.subr.mxu0 0.0
        %3082 = vmatpush1.msra.mxu0 0.0
        %3083 = vmatprep.subr.mxu0 0.0
        %3084 = vmatpush1.msra.mxu0 0.0
        %3085 = vmatprep.subr.mxu0 0.0
        %3086 = vmatpush1.msra.mxu0 0.0
        %3087 = vmatprep.subr.mxu0 0.0
        %3088 = vmatpush1.msra.mxu0 0.0
        %3089 = vmatprep.subr.mxu0 0.0
        %3090 = vmatpush1.msra.mxu0 0.0
        %3091 = vmatprep.subr.mxu0 0.0
        %3092 = vmatpush1.msra.mxu0 0.0
        %3093 = vmatprep.subr.mxu0 0.0
        %3094 = vmatpush1.msra.mxu0 0.0
        %3095 = vmatprep.subr.mxu0 0.0
        %3096 = vmatpush1.msra.mxu0 0.0
        %3097 = vmatprep.subr.mxu0 0.0
        %3098 = vmatpush1.msra.mxu0 0.0
        %3099 = vmatprep.subr.mxu0 0.0
        %3100 = vmatpush1.msra.mxu0 0.0
        %3101 = vmatprep.subr.mxu0 0.0
        %3102 = vmatpush1.msra.mxu0 0.0
        %3103 = vmatprep.subr.mxu0 0.0
        %3104 = vmatpush1.msra.mxu0 0.0
        %3105 = vmatprep.subr.mxu0 0.0
        %3106 = vmatpush1.msra.mxu0 0.0
        %3107 = vmatprep.subr.mxu0 0.0
        %3108 = vmatpush1.msra.mxu0 0.0
        %3109 = vmatprep.subr.mxu0 0.0
        %3110 = vmatpush1.msra.mxu0 0.0
        %3111 = vmatprep.subr.mxu0 0.0
        %3112 = vmatpush1.msra.mxu0 0.0
        %3113 = vmatprep.subr.mxu0 0.0
        %3114 = vmatpush1.msra.mxu0 0.0
        %3115 = vmatprep.subr.mxu0 0.0
        %3116 = vmatpush1.msra.mxu0 0.0
        %3117 = vmatprep.subr.mxu0 0.0
        %3118 = vmatpush1.msra.mxu0 0.0
        %3119 = vmatprep.mubr.f32.mxu0 0.0
        %3120 = vmatmul.mubr.f32.gmra.mrb[0].mxu0 %v1856
        %v3121 = vpop.f32.mrb[0].mxu0
        %v3122 = vpop.f32.mrb[0].mxu0
        %3123 = vmatprep.mubr.f32.mxu0 0.0
        %3124 = vmatmul.mubr.f32.gmra.mrb[0].mxu0 %v1859
        %v3125 = vpop.f32.mrb[0].mxu0
        %v3126 = vpop.f32.mrb[0].mxu0
        %3127 = vmatprep.mubr.f32.mxu0 0.0
        %3128 = vmatmul.mubr.f32.gmra.mrb[0].mxu0 %v1862
        %v3129 = vpop.f32.mrb[0].mxu0
        %v3130 = vpop.f32.mrb[0].mxu0
        %3131 = vmatprep.mubr.f32.mxu0 0.0
        %3132 = vmatmul.mubr.f32.gmra.mrb[0].mxu0 %v1865
        %v3133 = vpop.f32.mrb[0].mxu0
        %v3134 = vpop.f32.mrb[0].mxu0
        %3135 = vmatprep.mubr.f32.mxu0 0.0
        %3136 = vmatmul.mubr.f32.gmra.mrb[0].mxu0 %v1868
        %v3137 = vpop.f32.mrb[0].mxu0
        %v3138 = vadd.f32 %v1696, %v3137
        %v3139 = vpop.f32.mrb[0].mxu0
        %3140 = vmatprep.mubr.f32.mxu0 0.0
        %3141 = vmatmul.mubr.f32.gmra.mrb[0].mxu0 %v1871
        %v3142 = vpop.f32.mrb[0].mxu0
        %v3143 = vadd.f32 %v1701, %v3142
        %v3144 = vpop.f32.mrb[0].mxu0
        %3145 = vmatprep.mubr.f32.mxu0 0.0
        %3146 = vmatmul.mubr.f32.gmra.mrb[0].mxu0 %v1874
        %v3147 = vpop.f32.mrb[0].mxu0
        %v3148 = vadd.f32 %v1706, %v3147
        %v3149 = vpop.f32.mrb[0].mxu0
        %3150 = vmatprep.mubr.f32.mxu0 0.0
        %3151 = vmatmul.mubr.f32.gmra.mrb[0].mxu0 %v1877
        %v3152 = vpop.f32.mrb[0].mxu0
        %v3153 = vadd.f32 %v1711, %v3152
        %v3154 = vpop.f32.mrb[0].mxu0
        %3155 = vmatprep.mubr.f32.mxu0 0.0
        %3156 = vmatmul.mubr.f32.gmra.mrb[0].mxu0 %v1880
        %v3157 = vpop.f32.mrb[0].mxu0
        %v3158 = vadd.f32 %v1716, %v3157
        %v3159 = vpop.f32.mrb[0].mxu0
        %3160 = vmatprep.mubr.f32.mxu0 0.0
        %3161 = vmatmul.mubr.f32.gmra.mrb[0].mxu0 %v1883
        %v3162 = vpop.f32.mrb[0].mxu0
        %v3163 = vadd.f32 %v1721, %v3162
        %v3164 = vpop.f32.mrb[0].mxu0
        %3165 = vmatprep.mubr.f32.mxu0 0.0
        %3166 = vmatmul.mubr.f32.gmra.mrb[0].mxu0 %v1886
        %v3167 = vpop.f32.mrb[0].mxu0
        %v3168 = vadd.f32 %v1726, %v3167
        %v3169 = vpop.f32.mrb[0].mxu0
        %3170 = vmatprep.mubr.f32.mxu0 0.0
        %3171 = vmatmul.mubr.f32.gmra.mrb[0].mxu0 %v1889
        %v3172 = vpop.f32.mrb[0].mxu0
        %v3173 = vadd.f32 %v1731, %v3172
        %v3174 = vpop.f32.mrb[0].mxu0
        %3175 = vmatprep.mubr.f32.mxu0 0.0
        %3176 = vmatmul.mubr.f32.gmra.mrb[0].mxu0 %v1892
        %v3177 = vpop.f32.mrb[0].mxu0
        %v3178 = vadd.f32 %v1736, %v3177
        %v3179 = vpop.f32.mrb[0].mxu0
        %3180 = vmatprep.mubr.f32.mxu0 0.0
        %3181 = vmatmul.mubr.f32.gmra.mrb[0].mxu0 %v1895
        %v3182 = vpop.f32.mrb[0].mxu0
        %v3183 = vadd.f32 %v1741, %v3182
        %v3184 = vpop.f32.mrb[0].mxu0
        %3185 = vmatprep.mubr.f32.mxu0 0.0
        %3186 = vmatmul.mubr.f32.gmra.mrb[0].mxu0 %v1898
        %v3187 = vpop.f32.mrb[0].mxu0
        %v3188 = vadd.f32 %v1746, %v3187
        %v3189 = vpop.f32.mrb[0].mxu0
        %3190 = vmatprep.mubr.f32.mxu0 0.0
        %3191 = vmatmul.mubr.f32.gmra.mrb[0].mxu0 %v1901
        %v3192 = vpop.f32.mrb[0].mxu0
        %v3193 = vadd.f32 %v1751, %v3192
        %v3194 = vpop.f32.mrb[0].mxu0
        %3195 = vmatprep.mubr.f32.mxu0 0.0
        %3196 = vmatmul.mubr.f32.gmra.mrb[0].mxu0 %v1904
        %v3197 = vpop.f32.mrb[0].mxu0
        %v3198 = vadd.f32 %v1756, %v3197
        %v3199 = vpop.f32.mrb[0].mxu0
        %3200 = vmatprep.mubr.f32.mxu0 0.0
        %3201 = vmatmul.mubr.f32.gmra.mrb[0].mxu0 %v1907
        %v3202 = vpop.f32.mrb[0].mxu0
        %v3203 = vadd.f32 %v1761, %v3202
        %v3204 = vpop.f32.mrb[0].mxu0
        %3205 = vmatprep.mubr.f32.mxu0 0.0
        %3206 = vmatmul.mubr.f32.gmra.mrb[0].mxu0 %v1910
        %v3207 = vpop.f32.mrb[0].mxu0
        %v3208 = vadd.f32 %v1766, %v3207
        %v3209 = vpop.f32.mrb[0].mxu0
        %3210 = vmatprep.mubr.f32.mxu0 0.0
        %3211 = vmatmul.mubr.f32.gmra.mrb[0].mxu0 %v1913
        %v3212 = vpop.f32.mrb[0].mxu0
        %v3213 = vadd.f32 %v1771, %v3212
        %v3214 = vpop.f32.mrb[0].mxu0
        %3215 = vmatprep.mubr.f32.mxu0 0.0
        %3216 = vmatmul.mubr.f32.gmra.mrb[0].mxu0 %v1916
        %v3217 = vpop.f32.mrb[0].mxu0
        %v3218 = vadd.f32 %v1776, %v3217
        %v3219 = vpop.f32.mrb[0].mxu0
        %3220 = vmatprep.mubr.f32.mxu0 0.0
        %3221 = vmatmul.mubr.f32.gmra.mrb[0].mxu0 %v1919
        %v3222 = vpop.f32.mrb[0].mxu0
        %v3223 = vadd.f32 %v1781, %v3222
        %v3224 = vpop.f32.mrb[0].mxu0
        %3225 = vmatprep.mubr.f32.mxu0 0.0
        %3226 = vmatmul.mubr.f32.gmra.mrb[0].mxu0 %v1922
        %v3227 = vpop.f32.mrb[0].mxu0
        %v3228 = vadd.f32 %v1786, %v3227
        %v3229 = vpop.f32.mrb[0].mxu0
        %3230 = vmatprep.mubr.f32.mxu0 0.0
        %3231 = vmatmul.mubr.f32.gmra.mrb[0].mxu0 %v1925
        %v3232 = vpop.f32.mrb[0].mxu0
        %v3233 = vadd.f32 %v1791, %v3232
        %v3234 = vpop.f32.mrb[0].mxu0
        %3235 = vmatprep.mubr.f32.mxu0 0.0
        %3236 = vmatmul.mubr.f32.gmra.mrb[0].mxu0 %v1928
        %v3237 = vpop.f32.mrb[0].mxu0
        %v3238 = vadd.f32 %v1796, %v3237
        %v3239 = vpop.f32.mrb[0].mxu0
        %3240 = vmatprep.mubr.f32.mxu0 0.0
        %3241 = vmatmul.mubr.f32.gmra.mrb[0].mxu0 %v1931
        %v3242 = vpop.f32.mrb[0].mxu0
        %v3243 = vadd.f32 %v1801, %v3242
        %v3244 = vpop.f32.mrb[0].mxu0
        %3245 = vmatprep.mubr.f32.mxu0 0.0
        %3246 = vmatmul.mubr.f32.gmra.mrb[0].mxu0 %v1934
        %v3247 = vpop.f32.mrb[0].mxu0
        %v3248 = vadd.f32 %v1806, %v3247
        %v3249 = vpop.f32.mrb[0].mxu0
        %3250 = vmatprep.mubr.f32.mxu0 0.0
        %3251 = vmatmul.mubr.f32.gmra.mrb[0].mxu0 %v1937
        %v3252 = vpop.f32.mrb[0].mxu0
        %v3253 = vadd.f32 %v1811, %v3252
        %v3254 = vpop.f32.mrb[0].mxu0
        %3255 = vmatprep.mubr.f32.mxu0 0.0
        %3256 = vmatmul.mubr.f32.gmra.mrb[0].mxu0 %v1940
        %v3257 = vpop.f32.mrb[0].mxu0
        %v3258 = vadd.f32 %v1816, %v3257
        %v3259 = vpop.f32.mrb[0].mxu0
        %3260 = vmatprep.mubr.f32.mxu0 0.0
        %3261 = vmatmul.mubr.f32.gmra.mrb[0].mxu0 %v1943
        %v3262 = vpop.f32.mrb[0].mxu0
        %v3263 = vadd.f32 %v1821, %v3262
        %v3264 = vpop.f32.mrb[0].mxu0
        %3265 = vmatprep.mubr.f32.mxu0 0.0
        %3266 = vmatmul.mubr.f32.gmra.mrb[0].mxu0 %v1946
        %v3267 = vpop.f32.mrb[0].mxu0
        %v3268 = vadd.f32 %v1826, %v3267
        %v3269 = vpop.f32.mrb[0].mxu0
        %3270 = vmatprep.mubr.f32.mxu0 0.0
        %3271 = vmatmul.mubr.f32.gmra.mrb[0].mxu0 %v1949
        %v3272 = vpop.f32.mrb[0].mxu0
        %v3273 = vadd.f32 %v1831, %v3272
        %v3274 = vpop.f32.mrb[0].mxu0
        %3275 = vmatprep.mubr.f32.mxu0 0.0
        %3276 = vmatmul.mubr.f32.gmra.mrb[0].mxu0 %v1952
        %v3277 = vpop.f32.mrb[0].mxu0
        %v3278 = vadd.f32 %v1836, %v3277
        %v3279 = vpop.f32.mrb[0].mxu0
        %3280 = vmatprep.mubr.f32.mxu0 0.0
        %3281 = vmatmul.mubr.f32.gmra.mrb[0].mxu0 %v1955
        %v3282 = vpop.f32.mrb[0].mxu0
        %v3283 = vadd.f32 %v1841, %v3282
        %v3284 = vpop.f32.mrb[0].mxu0
        %3285 = vmatprep.mubr.f32.mxu0 0.0
        %3286 = vmatmul.mubr.f32.gmra.mrb[0].mxu0 %v1958
        %v3287 = vpop.f32.mrb[0].mxu0
        %v3288 = vadd.f32 %v1846, %v3287
        %v3289 = vpop.f32.mrb[0].mxu0
        %3290 = vmatprep.mubr.f32.mxu0 0.0
        %3291 = vmatmul.mubr.f32.gmra.mrb[0].mxu0 %v1961
        %v3292 = vpop.f32.mrb[0].mxu0
        %v3293 = vadd.f32 %v1851, %v3292
        %v3294 = vpop.f32.mrb[0].mxu0
        %3295 = vdwg.mxu0
        %v3296 = vlaneseq
        %v3297 = vshrl.u32 %v3296, 7
        %v3298 = vadd.s32 %v3297, 8
        %v3299 = vld [vmem:[%s3] sm:$0x1]
        %v3301 = vlaneseq
        %v3302 = vshrl.u32 %v3301, 7
        %v3303 = vsub.s32 0, %v3302
        %v3304 = vrot.slane %v3299, %v3303
        %v3306 = vrot.slane %v2030, 7
        %v3307 = vrot.slane %v2042, 7
        %v3308 = vrot.slane %v2054, 7
        %v3309 = vrot.slane %v2066, 7
        %v3310 = vrot.slane %v2078, 7
        %v3311 = vrot.slane %v2090, 7
        %v3312 = vrot.slane %v2102, 7
        %v3313 = vrot.slane %v2114, 7
        %v3314 = vrot.slane %v2126, 7
        %v3315 = vrot.slane %v2138, 7
        %v3316 = vrot.slane %v2150, 7
        %v3317 = vrot.slane %v2162, 7
        %v3318 = vrot.slane %v2174, 7
        %v3319 = vrot.slane %v2186, 7
        %v3320 = vrot.slane %v2198, 7
        %v3321 = vrot.slane %v2210, 7
        %v3322 = vrot.slane %v2036, 7
        %v3323 = vrot.slane %v2048, 7
        %v3324 = vrot.slane %v2060, 7
        %v3325 = vrot.slane %v2072, 7
        %v3326 = vrot.slane %v2084, 7
        %v3327 = vrot.slane %v2096, 7
        %v3328 = vrot.slane %v2108, 7
        %v3329 = vrot.slane %v2120, 7
        %v3330 = vrot.slane %v2132, 7
        %v3331 = vrot.slane %v2144, 7
        %v3332 = vrot.slane %v2156, 7
        %v3333 = vrot.slane %v2168, 7
        %v3334 = vrot.slane %v2180, 7
        %v3335 = vrot.slane %v2192, 7
        %v3336 = vrot.slane %v2204, 7
        %v3337 = vrot.slane %v2216, 7
        %vm3338 = vcmp.lt.s32.totalorder %v3297, 1
        %v3339 = vsel %vm3338, %v3306, %v3322
        %v3340 = vsel %vm3338, %v3307, %v3323
        %v3341 = vsel %vm3338, %v3308, %v3324
        %v3342 = vsel %vm3338, %v3309, %v3325
        %v3343 = vsel %vm3338, %v3310, %v3326
        %v3344 = vsel %vm3338, %v3311, %v3327
        %v3345 = vsel %vm3338, %v3312, %v3328
        %v3346 = vsel %vm3338, %v3313, %v3329
        %v3347 = vsel %vm3338, %v3314, %v3330
        %v3348 = vsel %vm3338, %v3315, %v3331
        %v3349 = vsel %vm3338, %v3316, %v3332
        %v3350 = vsel %vm3338, %v3317, %v3333
        %v3351 = vsel %vm3338, %v3318, %v3334
        %v3352 = vsel %vm3338, %v3319, %v3335
        %v3353 = vsel %vm3338, %v3320, %v3336
        %v3354 = vsel %vm3338, %v3321, %v3337
        %v3355 = vsel %vm3338, %v3322, %v3306
        %v3356 = vsel %vm3338, %v3323, %v3307
        %v3357 = vsel %vm3338, %v3324, %v3308
        %v3358 = vsel %vm3338, %v3325, %v3309
        %v3359 = vsel %vm3338, %v3326, %v3310
        %v3360 = vsel %vm3338, %v3327, %v3311
        %v3361 = vsel %vm3338, %v3328, %v3312
        %v3362 = vsel %vm3338, %v3329, %v3313
        %v3363 = vsel %vm3338, %v3330, %v3314
        %v3364 = vsel %vm3338, %v3331, %v3315
        %v3365 = vsel %vm3338, %v3332, %v3316
        %v3366 = vsel %vm3338, %v3333, %v3317
        %v3367 = vsel %vm3338, %v3334, %v3318
        %v3368 = vsel %vm3338, %v3335, %v3319
        %v3369 = vsel %vm3338, %v3336, %v3320
        %v3370 = vsel %vm3338, %v3337, %v3321
        %vm3371 = vcmp.gt.s32.totalorder %v3297, 0
        %vm3372 = vcmp.gt.s32.totalorder %v3298, 0
        %v3373 = vsel %vm3371, 1, 0
        %v3374 = vsel %vm3372, 1, 0
        %vm3375 = vcmp.eq.s32.totalorder %v3373, 1
        %vm3376 = vcmp.eq.s32.totalorder %v3374, 1
        %v3377 = vsel %vm3375, %v3355, 0.0
        %v3378 = vsel %vm3376, %v3339, 0.0
        %v3379 = vsel %vm3375, %v3356, 0.0
        %v3380 = vsel %vm3376, %v3340, 0.0
        %v3381 = vsel %vm3375, %v3357, 0.0
        %v3382 = vsel %vm3376, %v3341, 0.0
        %v3383 = vsel %vm3375, %v3358, 0.0
        %v3384 = vsel %vm3376, %v3342, 0.0
        %v3385 = vsel %vm3375, %v3359, 0.0
        %v3386 = vsel %vm3376, %v3343, 0.0
        %v3387 = vsel %vm3375, %v3360, 0.0
        %v3388 = vsel %vm3376, %v3344, 0.0
        %v3389 = vsel %vm3375, %v3361, 0.0
        %v3390 = vsel %vm3376, %v3345, 0.0
        %v3391 = vsel %vm3375, %v3362, 0.0
        %v3392 = vsel %vm3376, %v3346, 0.0
        %v3393 = vsel %vm3375, %v3363, 0.0
        %v3394 = vsel %vm3376, %v3347, 0.0
        %v3395 = vsel %vm3375, %v3364, 0.0
        %v3396 = vsel %vm3376, %v3348, 0.0
        %v3397 = vsel %vm3375, %v3365, 0.0
        %v3398 = vsel %vm3376, %v3349, 0.0
        %v3399 = vsel %vm3375, %v3366, 0.0
        %v3400 = vsel %vm3376, %v3350, 0.0
        %v3401 = vsel %vm3375, %v3367, 0.0
        %v3402 = vsel %vm3376, %v3351, 0.0
        %v3403 = vsel %vm3375, %v3368, 0.0
        %v3404 = vsel %vm3376, %v3352, 0.0
        %v3405 = vsel %vm3375, %v3369, 0.0
        %v3406 = vsel %vm3376, %v3353, 0.0
        %v3407 = vsel %vm3375, %v3370, 0.0
        %v3408 = vsel %vm3376, %v3354, 0.0
        %v3409 = vadd.f32 %v3304, %v3377
        %v3410 = vadd.f32 %v3304, %v3378
        %v3411 = vadd.f32 %v3304, %v3379
        %v3412 = vadd.f32 %v3304, %v3380
        %v3413 = vadd.f32 %v3304, %v3381
        %v3414 = vadd.f32 %v3304, %v3382
        %v3415 = vadd.f32 %v3304, %v3383
        %v3416 = vadd.f32 %v3304, %v3384
        %v3417 = vadd.f32 %v3304, %v3385
        %v3418 = vadd.f32 %v3304, %v3386
        %v3419 = vadd.f32 %v3304, %v3387
        %v3420 = vadd.f32 %v3304, %v3388
        %v3421 = vadd.f32 %v3304, %v3389
        %v3422 = vadd.f32 %v3304, %v3390
        %v3423 = vadd.f32 %v3304, %v3391
        %v3424 = vadd.f32 %v3304, %v3392
        %v3425 = vadd.f32 %v3304, %v3393
        %v3426 = vadd.f32 %v3304, %v3394
        %v3427 = vadd.f32 %v3304, %v3395
        %v3428 = vadd.f32 %v3304, %v3396
        %v3429 = vadd.f32 %v3304, %v3397
        %v3430 = vadd.f32 %v3304, %v3398
        %v3431 = vadd.f32 %v3304, %v3399
        %v3432 = vadd.f32 %v3304, %v3400
        %v3433 = vadd.f32 %v3304, %v3401
        %v3434 = vadd.f32 %v3304, %v3402
        %v3435 = vadd.f32 %v3304, %v3403
        %v3436 = vadd.f32 %v3304, %v3404
        %v3437 = vadd.f32 %v3304, %v3405
        %v3438 = vadd.f32 %v3304, %v3406
        %v3439 = vadd.f32 %v3304, %v3407
        %v3440 = vadd.f32 %v3304, %v3408
        %v3441 = vadd.f32 %v3409, %v2032
        %v3442 = vadd.f32 %v3410, %v2038
        %v3443 = vadd.f32 %v3411, %v2044
        %v3444 = vadd.f32 %v3412, %v2050
        %v3445 = vadd.f32 %v3413, %v2056
        %v3446 = vadd.f32 %v3414, %v2062
        %v3447 = vadd.f32 %v3415, %v2068
        %v3448 = vadd.f32 %v3416, %v2074
        %v3449 = vadd.f32 %v3417, %v2080
        %v3450 = vadd.f32 %v3418, %v2086
        %v3451 = vadd.f32 %v3419, %v2092
        %v3452 = vadd.f32 %v3420, %v2098
        %v3453 = vadd.f32 %v3421, %v2104
        %v3454 = vadd.f32 %v3422, %v2110
        %v3455 = vadd.f32 %v3423, %v2116
        %v3456 = vadd.f32 %v3424, %v2122
        %v3457 = vadd.f32 %v3425, %v2128
        %v3458 = vadd.f32 %v3426, %v2134
        %v3459 = vadd.f32 %v3427, %v2140
        %v3460 = vadd.f32 %v3428, %v2146
        %v3461 = vadd.f32 %v3429, %v2152
        %v3462 = vadd.f32 %v3430, %v2158
        %v3463 = vadd.f32 %v3431, %v2164
        %v3464 = vadd.f32 %v3432, %v2170
        %v3465 = vadd.f32 %v3433, %v2176
        %v3466 = vadd.f32 %v3434, %v2182
        %v3467 = vadd.f32 %v3435, %v2188
        %v3468 = vadd.f32 %v3436, %v2194
        %v3469 = vadd.f32 %v3437, %v2200
        %v3470 = vadd.f32 %v3438, %v2206
        %v3471 = vadd.f32 %v3439, %v2212
        %v3472 = vadd.f32 %v3440, %v2218
        %v3473 = vrot.slane %v2303, 1
        %v3474 = vrot.slane %v2313, 1
        %v3475 = vrot.slane %v2325, 1
        %v3476 = vrot.slane %v2337, 1
        %v3477 = vrot.slane %v2349, 1
        %v3478 = vrot.slane %v2361, 1
        %v3479 = vrot.slane %v2373, 1
        %v3480 = vrot.slane %v2385, 1
        %v3481 = vrot.slane %v2397, 1
        %v3482 = vrot.slane %v2409, 1
        %v3483 = vrot.slane %v2421, 1
        %v3484 = vrot.slane %v2433, 1
        %v3485 = vrot.slane %v2445, 1
        %v3486 = vrot.slane %v2457, 1
        %v3487 = vrot.slane %v2469, 1
        %v3488 = vrot.slane %v2481, 1
        %v3489 = vrot.slane %v2308, 1
        %v3490 = vrot.slane %v2319, 1
        %v3491 = vrot.slane %v2331, 1
        %v3492 = vrot.slane %v2343, 1
        %v3493 = vrot.slane %v2355, 1
        %v3494 = vrot.slane %v2367, 1
        %v3495 = vrot.slane %v2379, 1
        %v3496 = vrot.slane %v2391, 1
        %v3497 = vrot.slane %v2403, 1
        %v3498 = vrot.slane %v2415, 1
        %v3499 = vrot.slane %v2427, 1
        %v3500 = vrot.slane %v2439, 1
        %v3501 = vrot.slane %v2451, 1
        %v3502 = vrot.slane %v2463, 1
        %v3503 = vrot.slane %v2475, 1
        %v3504 = vrot.slane %v2487, 1
        %vm3505 = vcmp.lt.s32.totalorder %v3297, 7
        %v3506 = vsel %vm3505, %v3473, %v3489
        %v3507 = vsel %vm3505, %v3474, %v3490
        %v3508 = vsel %vm3505, %v3475, %v3491
        %v3509 = vsel %vm3505, %v3476, %v3492
        %v3510 = vsel %vm3505, %v3477, %v3493
        %v3511 = vsel %vm3505, %v3478, %v3494
        %v3512 = vsel %vm3505, %v3479, %v3495
        %v3513 = vsel %vm3505, %v3480, %v3496
        %v3514 = vsel %vm3505, %v3481, %v3497
        %v3515 = vsel %vm3505, %v3482, %v3498
        %v3516 = vsel %vm3505, %v3483, %v3499
        %v3517 = vsel %vm3505, %v3484, %v3500
        %v3518 = vsel %vm3505, %v3485, %v3501
        %v3519 = vsel %vm3505, %v3486, %v3502
        %v3520 = vsel %vm3505, %v3487, %v3503
        %v3521 = vsel %vm3505, %v3488, %v3504
        %v3522 = vsel %vm3505, %v3489, %v3473
        %v3523 = vsel %vm3505, %v3490, %v3474
        %v3524 = vsel %vm3505, %v3491, %v3475
        %v3525 = vsel %vm3505, %v3492, %v3476
        %v3526 = vsel %vm3505, %v3493, %v3477
        %v3527 = vsel %vm3505, %v3494, %v3478
        %v3528 = vsel %vm3505, %v3495, %v3479
        %v3529 = vsel %vm3505, %v3496, %v3480
        %v3530 = vsel %vm3505, %v3497, %v3481
        %v3531 = vsel %vm3505, %v3498, %v3482
        %v3532 = vsel %vm3505, %v3499, %v3483
        %v3533 = vsel %vm3505, %v3500, %v3484
        %v3534 = vsel %vm3505, %v3501, %v3485
        %v3535 = vsel %vm3505, %v3502, %v3486
        %v3536 = vsel %vm3505, %v3503, %v3487
        %v3537 = vsel %vm3505, %v3504, %v3488
        %vm3538 = vcmp.lt.s32.totalorder %v3297, 15
        %vm3539 = vcmp.lt.s32.totalorder %v3298, 15
        %v3540 = vsel %vm3538, 1, 0
        %v3541 = vsel %vm3539, 1, 0
        %vm3542 = vcmp.eq.s32.totalorder %v3540, 1
        %vm3543 = vcmp.eq.s32.totalorder %v3541, 1
        %v3544 = vsel %vm3542, %v3506, 0.0
        %v3545 = vsel %vm3543, %v3522, 0.0
        %v3546 = vsel %vm3542, %v3507, 0.0
        %v3547 = vsel %vm3543, %v3523, 0.0
        %v3548 = vsel %vm3542, %v3508, 0.0
        %v3549 = vsel %vm3543, %v3524, 0.0
        %v3550 = vsel %vm3542, %v3509, 0.0
        %v3551 = vsel %vm3543, %v3525, 0.0
        %v3552 = vsel %vm3542, %v3510, 0.0
        %v3553 = vsel %vm3543, %v3526, 0.0
        %v3554 = vsel %vm3542, %v3511, 0.0
        %v3555 = vsel %vm3543, %v3527, 0.0
        %v3556 = vsel %vm3542, %v3512, 0.0
        %v3557 = vsel %vm3543, %v3528, 0.0
        %v3558 = vsel %vm3542, %v3513, 0.0
        %v3559 = vsel %vm3543, %v3529, 0.0
        %v3560 = vsel %vm3542, %v3514, 0.0
        %v3561 = vsel %vm3543, %v3530, 0.0
        %v3562 = vsel %vm3542, %v3515, 0.0
        %v3563 = vsel %vm3543, %v3531, 0.0
        %v3564 = vsel %vm3542, %v3516, 0.0
        %v3565 = vsel %vm3543, %v3532, 0.0
        %v3566 = vsel %vm3542, %v3517, 0.0
        %v3567 = vsel %vm3543, %v3533, 0.0
        %v3568 = vsel %vm3542, %v3518, 0.0
        %v3569 = vsel %vm3543, %v3534, 0.0
        %v3570 = vsel %vm3542, %v3519, 0.0
        %v3571 = vsel %vm3543, %v3535, 0.0
        %v3572 = vsel %vm3542, %v3520, 0.0
        %v3573 = vsel %vm3543, %v3536, 0.0
        %v3574 = vsel %vm3542, %v3521, 0.0
        %v3575 = vsel %vm3543, %v3537, 0.0
        %v3576 = vadd.f32 %v3441, %v3544
        %v3577 = vadd.f32 %v3442, %v3545
        %v3578 = vadd.f32 %v3443, %v3546
        %v3579 = vadd.f32 %v3444, %v3547
        %v3580 = vadd.f32 %v3445, %v3548
        %v3581 = vadd.f32 %v3446, %v3549
        %v3582 = vadd.f32 %v3447, %v3550
        %v3583 = vadd.f32 %v3448, %v3551
        %v3584 = vadd.f32 %v3449, %v3552
        %v3585 = vadd.f32 %v3450, %v3553
        %v3586 = vadd.f32 %v3451, %v3554
        %v3587 = vadd.f32 %v3452, %v3555
        %v3588 = vadd.f32 %v3453, %v3556
        %v3589 = vadd.f32 %v3454, %v3557
        %v3590 = vadd.f32 %v3455, %v3558
        %v3591 = vadd.f32 %v3456, %v3559
        %v3592 = vadd.f32 %v3457, %v3560
        %v3593 = vadd.f32 %v3458, %v3561
        %v3594 = vadd.f32 %v3459, %v3562
        %v3595 = vadd.f32 %v3460, %v3563
        %v3596 = vadd.f32 %v3461, %v3564
        %v3597 = vadd.f32 %v3462, %v3565
        %v3598 = vadd.f32 %v3463, %v3566
        %v3599 = vadd.f32 %v3464, %v3567
        %v3600 = vadd.f32 %v3465, %v3568
        %v3601 = vadd.f32 %v3466, %v3569
        %v3602 = vadd.f32 %v3467, %v3570
        %v3603 = vadd.f32 %v3468, %v3571
        %v3604 = vadd.f32 %v3469, %v3572
        %v3605 = vadd.f32 %v3470, %v3573
        %v3606 = vadd.f32 %v3471, %v3574
        %v3607 = vadd.f32 %v3472, %v3575
        %v3608 = vrot.slane %v2315, 7
        %v3609 = vrot.slane %v2327, 7
        %v3610 = vrot.slane %v2339, 7
        %v3611 = vrot.slane %v2351, 7
        %v3612 = vrot.slane %v2363, 7
        %v3613 = vrot.slane %v2375, 7
        %v3614 = vrot.slane %v2387, 7
        %v3615 = vrot.slane %v2399, 7
        %v3616 = vrot.slane %v2411, 7
        %v3617 = vrot.slane %v2423, 7
        %v3618 = vrot.slane %v2435, 7
        %v3619 = vrot.slane %v2447, 7
        %v3620 = vrot.slane %v2459, 7
        %v3621 = vrot.slane %v2471, 7
        %v3622 = vrot.slane %v2483, 7
        %v3623 = vrot.slane %v2494, 7
        %v3624 = vrot.slane %v2321, 7
        %v3625 = vrot.slane %v2333, 7
        %v3626 = vrot.slane %v2345, 7
        %v3627 = vrot.slane %v2357, 7
        %v3628 = vrot.slane %v2369, 7
        %v3629 = vrot.slane %v2381, 7
        %v3630 = vrot.slane %v2393, 7
        %v3631 = vrot.slane %v2405, 7
        %v3632 = vrot.slane %v2417, 7
        %v3633 = vrot.slane %v2429, 7
        %v3634 = vrot.slane %v2441, 7
        %v3635 = vrot.slane %v2453, 7
        %v3636 = vrot.slane %v2465, 7
        %v3637 = vrot.slane %v2477, 7
        %v3638 = vrot.slane %v2489, 7
        %v3639 = vrot.slane %v2499, 7
        %v3640 = vsel %vm3338, %v3608, %v3624
        %v3641 = vsel %vm3338, %v3609, %v3625
        %v3642 = vsel %vm3338, %v3610, %v3626
        %v3643 = vsel %vm3338, %v3611, %v3627
        %v3644 = vsel %vm3338, %v3612, %v3628
        %v3645 = vsel %vm3338, %v3613, %v3629
        %v3646 = vsel %vm3338, %v3614, %v3630
        %v3647 = vsel %vm3338, %v3615, %v3631
        %v3648 = vsel %vm3338, %v3616, %v3632
        %v3649 = vsel %vm3338, %v3617, %v3633
        %v3650 = vsel %vm3338, %v3618, %v3634
        %v3651 = vsel %vm3338, %v3619, %v3635
        %v3652 = vsel %vm3338, %v3620, %v3636
        %v3653 = vsel %vm3338, %v3621, %v3637
        %v3654 = vsel %vm3338, %v3622, %v3638
        %v3655 = vsel %vm3338, %v3623, %v3639
        %v3656 = vsel %vm3338, %v3624, %v3608
        %v3657 = vsel %vm3338, %v3625, %v3609
        %v3658 = vsel %vm3338, %v3626, %v3610
        %v3659 = vsel %vm3338, %v3627, %v3611
        %v3660 = vsel %vm3338, %v3628, %v3612
        %v3661 = vsel %vm3338, %v3629, %v3613
        %v3662 = vsel %vm3338, %v3630, %v3614
        %v3663 = vsel %vm3338, %v3631, %v3615
        %v3664 = vsel %vm3338, %v3632, %v3616
        %v3665 = vsel %vm3338, %v3633, %v3617
        %v3666 = vsel %vm3338, %v3634, %v3618
        %v3667 = vsel %vm3338, %v3635, %v3619
        %v3668 = vsel %vm3338, %v3636, %v3620
        %v3669 = vsel %vm3338, %v3637, %v3621
        %v3670 = vsel %vm3338, %v3638, %v3622
        %v3671 = vsel %vm3338, %v3639, %v3623
        %v3672 = vsel %vm3375, %v3656, 0.0
        %v3673 = vsel %vm3376, %v3640, 0.0
        %v3674 = vsel %vm3375, %v3657, 0.0
        %v3675 = vsel %vm3376, %v3641, 0.0
        %v3676 = vsel %vm3375, %v3658, 0.0
        %v3677 = vsel %vm3376, %v3642, 0.0
        %v3678 = vsel %vm3375, %v3659, 0.0
        %v3679 = vsel %vm3376, %v3643, 0.0
        %v3680 = vsel %vm3375, %v3660, 0.0
        %v3681 = vsel %vm3376, %v3644, 0.0
        %v3682 = vsel %vm3375, %v3661, 0.0
        %v3683 = vsel %vm3376, %v3645, 0.0
        %v3684 = vsel %vm3375, %v3662, 0.0
        %v3685 = vsel %vm3376, %v3646, 0.0
        %v3686 = vsel %vm3375, %v3663, 0.0
        %v3687 = vsel %vm3376, %v3647, 0.0
        %v3688 = vsel %vm3375, %v3664, 0.0
        %v3689 = vsel %vm3376, %v3648, 0.0
        %v3690 = vsel %vm3375, %v3665, 0.0
        %v3691 = vsel %vm3376, %v3649, 0.0
        %v3692 = vsel %vm3375, %v3666, 0.0
        %v3693 = vsel %vm3376, %v3650, 0.0
        %v3694 = vsel %vm3375, %v3667, 0.0
        %v3695 = vsel %vm3376, %v3651, 0.0
        %v3696 = vsel %vm3375, %v3668, 0.0
        %v3697 = vsel %vm3376, %v3652, 0.0
        %v3698 = vsel %vm3375, %v3669, 0.0
        %v3699 = vsel %vm3376, %v3653, 0.0
        %v3700 = vsel %vm3375, %v3670, 0.0
        %v3701 = vsel %vm3376, %v3654, 0.0
        %v3702 = vsel %vm3375, %v3671, 0.0
        %v3703 = vsel %vm3376, %v3655, 0.0
        %v3704 = vadd.f32 %v3576, %v3672
        %v3705 = vadd.f32 %v3577, %v3673
        %v3706 = vadd.f32 %v3578, %v3674
        %v3707 = vadd.f32 %v3579, %v3675
        %v3708 = vadd.f32 %v3580, %v3676
        %v3709 = vadd.f32 %v3581, %v3677
        %v3710 = vadd.f32 %v3582, %v3678
        %v3711 = vadd.f32 %v3583, %v3679
        %v3712 = vadd.f32 %v3584, %v3680
        %v3713 = vadd.f32 %v3585, %v3681
        %v3714 = vadd.f32 %v3586, %v3682
        %v3715 = vadd.f32 %v3587, %v3683
        %v3716 = vadd.f32 %v3588, %v3684
        %v3717 = vadd.f32 %v3589, %v3685
        %v3718 = vadd.f32 %v3590, %v3686
        %v3719 = vadd.f32 %v3591, %v3687
        %v3720 = vadd.f32 %v3592, %v3688
        %v3721 = vadd.f32 %v3593, %v3689
        %v3722 = vadd.f32 %v3594, %v3690
        %v3723 = vadd.f32 %v3595, %v3691
        %v3724 = vadd.f32 %v3596, %v3692
        %v3725 = vadd.f32 %v3597, %v3693
        %v3726 = vadd.f32 %v3598, %v3694
        %v3727 = vadd.f32 %v3599, %v3695
        %v3728 = vadd.f32 %v3600, %v3696
        %v3729 = vadd.f32 %v3601, %v3697
        %v3730 = vadd.f32 %v3602, %v3698
        %v3731 = vadd.f32 %v3603, %v3699
        %v3732 = vadd.f32 %v3604, %v3700
        %v3733 = vadd.f32 %v3605, %v3701
        %v3734 = vadd.f32 %v3606, %v3702
        %v3735 = vadd.f32 %v3607, %v3703
        %v3736 = vadd.f32 %v3704, %v2584
        %v3737 = vadd.f32 %v3705, %v2590
        %v3738 = vadd.f32 %v3706, %v2596
        %v3739 = vadd.f32 %v3707, %v2602
        %v3740 = vadd.f32 %v3708, %v2608
        %v3741 = vadd.f32 %v3709, %v2614
        %v3742 = vadd.f32 %v3710, %v2620
        %v3743 = vadd.f32 %v3711, %v2626
        %v3744 = vadd.f32 %v3712, %v2632
        %v3745 = vadd.f32 %v3713, %v2638
        %v3746 = vadd.f32 %v3714, %v2644
        %v3747 = vadd.f32 %v3715, %v2650
        %v3748 = vadd.f32 %v3716, %v2656
        %v3749 = vadd.f32 %v3717, %v2662
        %v3750 = vadd.f32 %v3718, %v2668
        %v3751 = vadd.f32 %v3719, %v2674
        %v3752 = vadd.f32 %v3720, %v2680
        %v3753 = vadd.f32 %v3721, %v2686
        %v3754 = vadd.f32 %v3722, %v2692
        %v3755 = vadd.f32 %v3723, %v2698
        %v3756 = vadd.f32 %v3724, %v2704
        %v3757 = vadd.f32 %v3725, %v2710
        %v3758 = vadd.f32 %v3726, %v2716
        %v3759 = vadd.f32 %v3727, %v2722
        %v3760 = vadd.f32 %v3728, %v2728
        %v3761 = vadd.f32 %v3729, %v2734
        %v3762 = vadd.f32 %v3730, %v2740
        %v3763 = vadd.f32 %v3731, %v2746
        %v3764 = vadd.f32 %v3732, %v2752
        %v3765 = vadd.f32 %v3733, %v2758
        %v3766 = vadd.f32 %v3734, %v2764
        %v3767 = vadd.f32 %v3735, %v2770
        %v3768 = vrot.slane %v2586, 1
        %v3769 = vrot.slane %v2598, 1
        %v3770 = vrot.slane %v2610, 1
        %v3771 = vrot.slane %v2622, 1
        %v3772 = vrot.slane %v2634, 1
        %v3773 = vrot.slane %v2646, 1
        %v3774 = vrot.slane %v2658, 1
        %v3775 = vrot.slane %v2670, 1
        %v3776 = vrot.slane %v2682, 1
        %v3777 = vrot.slane %v2694, 1
        %v3778 = vrot.slane %v2706, 1
        %v3779 = vrot.slane %v2718, 1
        %v3780 = vrot.slane %v2730, 1
        %v3781 = vrot.slane %v2742, 1
        %v3782 = vrot.slane %v2754, 1
        %v3783 = vrot.slane %v2766, 1
        %v3784 = vrot.slane %v2592, 1
        %v3785 = vrot.slane %v2604, 1
        %v3786 = vrot.slane %v2616, 1
        %v3787 = vrot.slane %v2628, 1
        %v3788 = vrot.slane %v2640, 1
        %v3789 = vrot.slane %v2652, 1
        %v3790 = vrot.slane %v2664, 1
        %v3791 = vrot.slane %v2676, 1
        %v3792 = vrot.slane %v2688, 1
        %v3793 = vrot.slane %v2700, 1
        %v3794 = vrot.slane %v2712, 1
        %v3795 = vrot.slane %v2724, 1
        %v3796 = vrot.slane %v2736, 1
        %v3797 = vrot.slane %v2748, 1
        %v3798 = vrot.slane %v2760, 1
        %v3799 = vrot.slane %v2772, 1
        %v3800 = vsel %vm3505, %v3768, %v3784
        %v3801 = vsel %vm3505, %v3769, %v3785
        %v3802 = vsel %vm3505, %v3770, %v3786
        %v3803 = vsel %vm3505, %v3771, %v3787
        %v3804 = vsel %vm3505, %v3772, %v3788
        %v3805 = vsel %vm3505, %v3773, %v3789
        %v3806 = vsel %vm3505, %v3774, %v3790
        %v3807 = vsel %vm3505, %v3775, %v3791
        %v3808 = vsel %vm3505, %v3776, %v3792
        %v3809 = vsel %vm3505, %v3777, %v3793
        %v3810 = vsel %vm3505, %v3778, %v3794
        %v3811 = vsel %vm3505, %v3779, %v3795
        %v3812 = vsel %vm3505, %v3780, %v3796
        %v3813 = vsel %vm3505, %v3781, %v3797
        %v3814 = vsel %vm3505, %v3782, %v3798
        %v3815 = vsel %vm3505, %v3783, %v3799
        %v3816 = vsel %vm3505, %v3784, %v3768
        %v3817 = vsel %vm3505, %v3785, %v3769
        %v3818 = vsel %vm3505, %v3786, %v3770
        %v3819 = vsel %vm3505, %v3787, %v3771
        %v3820 = vsel %vm3505, %v3788, %v3772
        %v3821 = vsel %vm3505, %v3789, %v3773
        %v3822 = vsel %vm3505, %v3790, %v3774
        %v3823 = vsel %vm3505, %v3791, %v3775
        %v3824 = vsel %vm3505, %v3792, %v3776
        %v3825 = vsel %vm3505, %v3793, %v3777
        %v3826 = vsel %vm3505, %v3794, %v3778
        %v3827 = vsel %vm3505, %v3795, %v3779
        %v3828 = vsel %vm3505, %v3796, %v3780
        %v3829 = vsel %vm3505, %v3797, %v3781
        %v3830 = vsel %vm3505, %v3798, %v3782
        %v3831 = vsel %vm3505, %v3799, %v3783
        %v3832 = vsel %vm3542, %v3800, 0.0
        %v3833 = vsel %vm3543, %v3816, 0.0
        %v3834 = vsel %vm3542, %v3801, 0.0
        %v3835 = vsel %vm3543, %v3817, 0.0
        %v3836 = vsel %vm3542, %v3802, 0.0
        %v3837 = vsel %vm3543, %v3818, 0.0
        %v3838 = vsel %vm3542, %v3803, 0.0
        %v3839 = vsel %vm3543, %v3819, 0.0
        %v3840 = vsel %vm3542, %v3804, 0.0
        %v3841 = vsel %vm3543, %v3820, 0.0
        %v3842 = vsel %vm3542, %v3805, 0.0
        %v3843 = vsel %vm3543, %v3821, 0.0
        %v3844 = vsel %vm3542, %v3806, 0.0
        %v3845 = vsel %vm3543, %v3822, 0.0
        %v3846 = vsel %vm3542, %v3807, 0.0
        %v3847 = vsel %vm3543, %v3823, 0.0
        %v3848 = vsel %vm3542, %v3808, 0.0
        %v3849 = vsel %vm3543, %v3824, 0.0
        %v3850 = vsel %vm3542, %v3809, 0.0
        %v3851 = vsel %vm3543, %v3825, 0.0
        %v3852 = vsel %vm3542, %v3810, 0.0
        %v3853 = vsel %vm3543, %v3826, 0.0
        %v3854 = vsel %vm3542, %v3811, 0.0
        %v3855 = vsel %vm3543, %v3827, 0.0
        %v3856 = vsel %vm3542, %v3812, 0.0
        %v3857 = vsel %vm3543, %v3828, 0.0
        %v3858 = vsel %vm3542, %v3813, 0.0
        %v3859 = vsel %vm3543, %v3829, 0.0
        %v3860 = vsel %vm3542, %v3814, 0.0
        %v3861 = vsel %vm3543, %v3830, 0.0
        %v3862 = vsel %vm3542, %v3815, 0.0
        %v3863 = vsel %vm3543, %v3831, 0.0
        %v3864 = vadd.f32 %v3736, %v3832
        %v3865 = vadd.f32 %v3737, %v3833
        %v3866 = vadd.f32 %v3738, %v3834
        %v3867 = vadd.f32 %v3739, %v3835
        %v3868 = vadd.f32 %v3740, %v3836
        %v3869 = vadd.f32 %v3741, %v3837
        %v3870 = vadd.f32 %v3742, %v3838
        %v3871 = vadd.f32 %v3743, %v3839
        %v3872 = vadd.f32 %v3744, %v3840
        %v3873 = vadd.f32 %v3745, %v3841
        %v3874 = vadd.f32 %v3746, %v3842
        %v3875 = vadd.f32 %v3747, %v3843
        %v3876 = vadd.f32 %v3748, %v3844
        %v3877 = vadd.f32 %v3749, %v3845
        %v3878 = vadd.f32 %v3750, %v3846
        %v3879 = vadd.f32 %v3751, %v3847
        %v3880 = vadd.f32 %v3752, %v3848
        %v3881 = vadd.f32 %v3753, %v3849
        %v3882 = vadd.f32 %v3754, %v3850
        %v3883 = vadd.f32 %v3755, %v3851
        %v3884 = vadd.f32 %v3756, %v3852
        %v3885 = vadd.f32 %v3757, %v3853
        %v3886 = vadd.f32 %v3758, %v3854
        %v3887 = vadd.f32 %v3759, %v3855
        %v3888 = vadd.f32 %v3760, %v3856
        %v3889 = vadd.f32 %v3761, %v3857
        %v3890 = vadd.f32 %v3762, %v3858
        %v3891 = vadd.f32 %v3763, %v3859
        %v3892 = vadd.f32 %v3764, %v3860
        %v3893 = vadd.f32 %v3765, %v3861
        %v3894 = vadd.f32 %v3766, %v3862
        %v3895 = vadd.f32 %v3767, %v3863
        %v3896 = vrot.slane %v2865, 7
        %v3897 = vrot.slane %v2877, 7
        %v3898 = vrot.slane %v2889, 7
        %v3899 = vrot.slane %v2901, 7
        %v3900 = vrot.slane %v2913, 7
        %v3901 = vrot.slane %v2925, 7
        %v3902 = vrot.slane %v2937, 7
        %v3903 = vrot.slane %v2949, 7
        %v3904 = vrot.slane %v2961, 7
        %v3905 = vrot.slane %v2973, 7
        %v3906 = vrot.slane %v2985, 7
        %v3907 = vrot.slane %v2997, 7
        %v3908 = vrot.slane %v3009, 7
        %v3909 = vrot.slane %v3021, 7
        %v3910 = vrot.slane %v3033, 7
        %v3911 = vrot.slane %v3045, 7
        %v3912 = vrot.slane %v2871, 7
        %v3913 = vrot.slane %v2883, 7
        %v3914 = vrot.slane %v2895, 7
        %v3915 = vrot.slane %v2907, 7
        %v3916 = vrot.slane %v2919, 7
        %v3917 = vrot.slane %v2931, 7
        %v3918 = vrot.slane %v2943, 7
        %v3919 = vrot.slane %v2955, 7
        %v3920 = vrot.slane %v2967, 7
        %v3921 = vrot.slane %v2979, 7
        %v3922 = vrot.slane %v2991, 7
        %v3923 = vrot.slane %v3003, 7
        %v3924 = vrot.slane %v3015, 7
        %v3925 = vrot.slane %v3027, 7
        %v3926 = vrot.slane %v3039, 7
        %v3927 = vrot.slane %v3051, 7
        %v3928 = vsel %vm3338, %v3896, %v3912
        %v3929 = vsel %vm3338, %v3897, %v3913
        %v3930 = vsel %vm3338, %v3898, %v3914
        %v3931 = vsel %vm3338, %v3899, %v3915
        %v3932 = vsel %vm3338, %v3900, %v3916
        %v3933 = vsel %vm3338, %v3901, %v3917
        %v3934 = vsel %vm3338, %v3902, %v3918
        %v3935 = vsel %vm3338, %v3903, %v3919
        %v3936 = vsel %vm3338, %v3904, %v3920
        %v3937 = vsel %vm3338, %v3905, %v3921
        %v3938 = vsel %vm3338, %v3906, %v3922
        %v3939 = vsel %vm3338, %v3907, %v3923
        %v3940 = vsel %vm3338, %v3908, %v3924
        %v3941 = vsel %vm3338, %v3909, %v3925
        %v3942 = vsel %vm3338, %v3910, %v3926
        %v3943 = vsel %vm3338, %v3911, %v3927
        %v3944 = vsel %vm3338, %v3912, %v3896
        %v3945 = vsel %vm3338, %v3913, %v3897
        %v3946 = vsel %vm3338, %v3914, %v3898
        %v3947 = vsel %vm3338, %v3915, %v3899
        %v3948 = vsel %vm3338, %v3916, %v3900
        %v3949 = vsel %vm3338, %v3917, %v3901
        %v3950 = vsel %vm3338, %v3918, %v3902
        %v3951 = vsel %vm3338, %v3919, %v3903
        %v3952 = vsel %vm3338, %v3920, %v3904
        %v3953 = vsel %vm3338, %v3921, %v3905
        %v3954 = vsel %vm3338, %v3922, %v3906
        %v3955 = vsel %vm3338, %v3923, %v3907
        %v3956 = vsel %vm3338, %v3924, %v3908
        %v3957 = vsel %vm3338, %v3925, %v3909
        %v3958 = vsel %vm3338, %v3926, %v3910
        %v3959 = vsel %vm3338, %v3927, %v3911
        %v3960 = vsel %vm3375, %v3944, 0.0
        %v3961 = vsel %vm3376, %v3928, 0.0
        %v3962 = vsel %vm3375, %v3945, 0.0
        %v3963 = vsel %vm3376, %v3929, 0.0
        %v3964 = vsel %vm3375, %v3946, 0.0
        %v3965 = vsel %vm3376, %v3930, 0.0
        %v3966 = vsel %vm3375, %v3947, 0.0
        %v3967 = vsel %vm3376, %v3931, 0.0
        %v3968 = vsel %vm3375, %v3948, 0.0
        %v3969 = vsel %vm3376, %v3932, 0.0
        %v3970 = vsel %vm3375, %v3949, 0.0
        %v3971 = vsel %vm3376, %v3933, 0.0
        %v3972 = vsel %vm3375, %v3950, 0.0
        %v3973 = vsel %vm3376, %v3934, 0.0
        %v3974 = vsel %vm3375, %v3951, 0.0
        %v3975 = vsel %vm3376, %v3935, 0.0
        %v3976 = vsel %vm3375, %v3952, 0.0
        %v3977 = vsel %vm3376, %v3936, 0.0
        %v3978 = vsel %vm3375, %v3953, 0.0
        %v3979 = vsel %vm3376, %v3937, 0.0
        %v3980 = vsel %vm3375, %v3954, 0.0
        %v3981 = vsel %vm3376, %v3938, 0.0
        %v3982 = vsel %vm3375, %v3955, 0.0
        %v3983 = vsel %vm3376, %v3939, 0.0
        %v3984 = vsel %vm3375, %v3956, 0.0
        %v3985 = vsel %vm3376, %v3940, 0.0
        %v3986 = vsel %vm3375, %v3957, 0.0
        %v3987 = vsel %vm3376, %v3941, 0.0
        %v3988 = vsel %vm3375, %v3958, 0.0
        %v3989 = vsel %vm3376, %v3942, 0.0
        %v3990 = vsel %vm3375, %v3959, 0.0
        %v3991 = vsel %vm3376, %v3943, 0.0
        %v3992 = vadd.f32 %v3864, %v3960
        %v3993 = vadd.f32 %v3865, %v3961
        %v3994 = vadd.f32 %v3866, %v3962
        %v3995 = vadd.f32 %v3867, %v3963
        %v3996 = vadd.f32 %v3868, %v3964
        %v3997 = vadd.f32 %v3869, %v3965
        %v3998 = vadd.f32 %v3870, %v3966
        %v3999 = vadd.f32 %v3871, %v3967
        %v4000 = vadd.f32 %v3872, %v3968
        %v4001 = vadd.f32 %v3873, %v3969
        %v4002 = vadd.f32 %v3874, %v3970
        %v4003 = vadd.f32 %v3875, %v3971
        %v4004 = vadd.f32 %v3876, %v3972
        %v4005 = vadd.f32 %v3877, %v3973
        %v4006 = vadd.f32 %v3878, %v3974
        %v4007 = vadd.f32 %v3879, %v3975
        %v4008 = vadd.f32 %v3880, %v3976
        %v4009 = vadd.f32 %v3881, %v3977
        %v4010 = vadd.f32 %v3882, %v3978
        %v4011 = vadd.f32 %v3883, %v3979
        %v4012 = vadd.f32 %v3884, %v3980
        %v4013 = vadd.f32 %v3885, %v3981
        %v4014 = vadd.f32 %v3886, %v3982
        %v4015 = vadd.f32 %v3887, %v3983
        %v4016 = vadd.f32 %v3888, %v3984
        %v4017 = vadd.f32 %v3889, %v3985
        %v4018 = vadd.f32 %v3890, %v3986
        %v4019 = vadd.f32 %v3891, %v3987
        %v4020 = vadd.f32 %v3892, %v3988
        %v4021 = vadd.f32 %v3893, %v3989
        %v4022 = vadd.f32 %v3894, %v3990
        %v4023 = vadd.f32 %v3895, %v3991
        %v4024 = vadd.f32 %v3992, %v2867
        %v4025 = vadd.f32 %v3993, %v2873
        %v4026 = vadd.f32 %v3994, %v2879
        %v4027 = vadd.f32 %v3995, %v2885
        %v4028 = vadd.f32 %v3996, %v2891
        %v4029 = vadd.f32 %v3997, %v2897
        %v4030 = vadd.f32 %v3998, %v2903
        %v4031 = vadd.f32 %v3999, %v2909
        %v4032 = vadd.f32 %v4000, %v2915
        %v4033 = vadd.f32 %v4001, %v2921
        %v4034 = vadd.f32 %v4002, %v2927
        %v4035 = vadd.f32 %v4003, %v2933
        %v4036 = vadd.f32 %v4004, %v2939
        %v4037 = vadd.f32 %v4005, %v2945
        %v4038 = vadd.f32 %v4006, %v2951
        %v4039 = vadd.f32 %v4007, %v2957
        %v4040 = vadd.f32 %v4008, %v2963
        %v4041 = vadd.f32 %v4009, %v2969
        %v4042 = vadd.f32 %v4010, %v2975
        %v4043 = vadd.f32 %v4011, %v2981
        %v4044 = vadd.f32 %v4012, %v2987
        %v4045 = vadd.f32 %v4013, %v2993
        %v4046 = vadd.f32 %v4014, %v2999
        %v4047 = vadd.f32 %v4015, %v3005
        %v4048 = vadd.f32 %v4016, %v3011
        %v4049 = vadd.f32 %v4017, %v3017
        %v4050 = vadd.f32 %v4018, %v3023
        %v4051 = vadd.f32 %v4019, %v3029
        %v4052 = vadd.f32 %v4020, %v3035
        %v4053 = vadd.f32 %v4021, %v3041
        %v4054 = vadd.f32 %v4022, %v3047
        %v4055 = vadd.f32 %v4023, %v3053
        %v4056 = vrot.slane %v3138, 1
        %v4057 = vrot.slane %v3148, 1
        %v4058 = vrot.slane %v3158, 1
        %v4059 = vrot.slane %v3168, 1
        %v4060 = vrot.slane %v3178, 1
        %v4061 = vrot.slane %v3188, 1
        %v4062 = vrot.slane %v3198, 1
        %v4063 = vrot.slane %v3208, 1
        %v4064 = vrot.slane %v3218, 1
        %v4065 = vrot.slane %v3228, 1
        %v4066 = vrot.slane %v3238, 1
        %v4067 = vrot.slane %v3248, 1
        %v4068 = vrot.slane %v3258, 1
        %v4069 = vrot.slane %v3268, 1
        %v4070 = vrot.slane %v3278, 1
        %v4071 = vrot.slane %v3288, 1
        %v4072 = vrot.slane %v3143, 1
        %v4073 = vrot.slane %v3153, 1
        %v4074 = vrot.slane %v3163, 1
        %v4075 = vrot.slane %v3173, 1
        %v4076 = vrot.slane %v3183, 1
        %v4077 = vrot.slane %v3193, 1
        %v4078 = vrot.slane %v3203, 1
        %v4079 = vrot.slane %v3213, 1
        %v4080 = vrot.slane %v3223, 1
        %v4081 = vrot.slane %v3233, 1
        %v4082 = vrot.slane %v3243, 1
        %v4083 = vrot.slane %v3253, 1
        %v4084 = vrot.slane %v3263, 1
        %v4085 = vrot.slane %v3273, 1
        %v4086 = vrot.slane %v3283, 1
        %v4087 = vrot.slane %v3293, 1
        %v4088 = vsel %vm3505, %v4056, %v4072
        %v4089 = vsel %vm3505, %v4057, %v4073
        %v4090 = vsel %vm3505, %v4058, %v4074
        %v4091 = vsel %vm3505, %v4059, %v4075
        %v4092 = vsel %vm3505, %v4060, %v4076
        %v4093 = vsel %vm3505, %v4061, %v4077
        %v4094 = vsel %vm3505, %v4062, %v4078
        %v4095 = vsel %vm3505, %v4063, %v4079
        %v4096 = vsel %vm3505, %v4064, %v4080
        %v4097 = vsel %vm3505, %v4065, %v4081
        %v4098 = vsel %vm3505, %v4066, %v4082
        %v4099 = vsel %vm3505, %v4067, %v4083
        %v4100 = vsel %vm3505, %v4068, %v4084
        %v4101 = vsel %vm3505, %v4069, %v4085
        %v4102 = vsel %vm3505, %v4070, %v4086
        %v4103 = vsel %vm3505, %v4071, %v4087
        %v4104 = vsel %vm3505, %v4072, %v4056
        %v4105 = vsel %vm3505, %v4073, %v4057
        %v4106 = vsel %vm3505, %v4074, %v4058
        %v4107 = vsel %vm3505, %v4075, %v4059
        %v4108 = vsel %vm3505, %v4076, %v4060
        %v4109 = vsel %vm3505, %v4077, %v4061
        %v4110 = vsel %vm3505, %v4078, %v4062
        %v4111 = vsel %vm3505, %v4079, %v4063
        %v4112 = vsel %vm3505, %v4080, %v4064
        %v4113 = vsel %vm3505, %v4081, %v4065
        %v4114 = vsel %vm3505, %v4082, %v4066
        %v4115 = vsel %vm3505, %v4083, %v4067
        %v4116 = vsel %vm3505, %v4084, %v4068
        %v4117 = vsel %vm3505, %v4085, %v4069
        %v4118 = vsel %vm3505, %v4086, %v4070
        %v4119 = vsel %vm3505, %v4087, %v4071
        %v4120 = vsel %vm3542, %v4088, 0.0
        %v4121 = vsel %vm3543, %v4104, 0.0
        %v4122 = vsel %vm3542, %v4089, 0.0
        %v4123 = vsel %vm3543, %v4105, 0.0
        %v4124 = vsel %vm3542, %v4090, 0.0
        %v4125 = vsel %vm3543, %v4106, 0.0
        %v4126 = vsel %vm3542, %v4091, 0.0
        %v4127 = vsel %vm3543, %v4107, 0.0
        %v4128 = vsel %vm3542, %v4092, 0.0
        %v4129 = vsel %vm3543, %v4108, 0.0
        %v4130 = vsel %vm3542, %v4093, 0.0
        %v4131 = vsel %vm3543, %v4109, 0.0
        %v4132 = vsel %vm3542, %v4094, 0.0
        %v4133 = vsel %vm3543, %v4110, 0.0
        %v4134 = vsel %vm3542, %v4095, 0.0
        %v4135 = vsel %vm3543, %v4111, 0.0
        %v4136 = vsel %vm3542, %v4096, 0.0
        %v4137 = vsel %vm3543, %v4112, 0.0
        %v4138 = vsel %vm3542, %v4097, 0.0
        %v4139 = vsel %vm3543, %v4113, 0.0
        %v4140 = vsel %vm3542, %v4098, 0.0
        %v4141 = vsel %vm3543, %v4114, 0.0
        %v4142 = vsel %vm3542, %v4099, 0.0
        %v4143 = vsel %vm3543, %v4115, 0.0
        %v4144 = vsel %vm3542, %v4100, 0.0
        %v4145 = vsel %vm3543, %v4116, 0.0
        %v4146 = vsel %vm3542, %v4101, 0.0
        %v4147 = vsel %vm3543, %v4117, 0.0
        %v4148 = vsel %vm3542, %v4102, 0.0
        %v4149 = vsel %vm3543, %v4118, 0.0
        %v4150 = vsel %vm3542, %v4103, 0.0
        %v4151 = vsel %vm3543, %v4119, 0.0
        %v4152 = vadd.f32 %v4024, %v4120
        %v4153 = vadd.f32 %v4025, %v4121
        %v4154 = vadd.f32 %v4026, %v4122
        %v4155 = vadd.f32 %v4027, %v4123
        %v4156 = vadd.f32 %v4028, %v4124
        %v4157 = vadd.f32 %v4029, %v4125
        %v4158 = vadd.f32 %v4030, %v4126
        %v4159 = vadd.f32 %v4031, %v4127
        %v4160 = vadd.f32 %v4032, %v4128
        %v4161 = vadd.f32 %v4033, %v4129
        %v4162 = vadd.f32 %v4034, %v4130
        %v4163 = vadd.f32 %v4035, %v4131
        %v4164 = vadd.f32 %v4036, %v4132
        %v4165 = vadd.f32 %v4037, %v4133
        %v4166 = vadd.f32 %v4038, %v4134
        %v4167 = vadd.f32 %v4039, %v4135
        %v4168 = vadd.f32 %v4040, %v4136
        %v4169 = vadd.f32 %v4041, %v4137
        %v4170 = vadd.f32 %v4042, %v4138
        %v4171 = vadd.f32 %v4043, %v4139
        %v4172 = vadd.f32 %v4044, %v4140
        %v4173 = vadd.f32 %v4045, %v4141
        %v4174 = vadd.f32 %v4046, %v4142
        %v4175 = vadd.f32 %v4047, %v4143
        %v4176 = vadd.f32 %v4048, %v4144
        %v4177 = vadd.f32 %v4049, %v4145
        %v4178 = vadd.f32 %v4050, %v4146
        %v4179 = vadd.f32 %v4051, %v4147
        %v4180 = vadd.f32 %v4052, %v4148
        %v4181 = vadd.f32 %v4053, %v4149
        %v4182 = vadd.f32 %v4054, %v4150
        %v4183 = vadd.f32 %v4055, %v4151
        %v4184 = vlaneseq
        %v4185 = vand.u32 %v4184, 127
        %vm4186 = vcmp.ge.s32.totalorder %v4185, 96
        %v4187 = vmul.f32 %v4152, 0.5
        %v4188 = vmul.f32 %v4153, 0.5
        %v4189 = vmul.f32 %v4154, 0.5
        %v4190 = vmul.f32 %v4155, 0.5
        %v4191 = vmul.f32 %v4156, 0.5
        %v4192 = vmul.f32 %v4157, 0.5
        %v4193 = vmul.f32 %v4158, 0.5
        %v4194 = vmul.f32 %v4159, 0.5
        %v4195 = vmul.f32 %v4160, 0.5
        %v4196 = vmul.f32 %v4161, 0.5
        %v4197 = vmul.f32 %v4162, 0.5
        %v4198 = vmul.f32 %v4163, 0.5
        %v4199 = vmul.f32 %v4164, 0.5
        %v4200 = vmul.f32 %v4165, 0.5
        %v4201 = vmul.f32 %v4166, 0.5
        %v4202 = vmul.f32 %v4167, 0.5
        %v4203 = vmul.f32 %v4168, 0.5
        %v4204 = vmul.f32 %v4169, 0.5
        %v4205 = vmul.f32 %v4170, 0.5
        %v4206 = vmul.f32 %v4171, 0.5
        %v4207 = vmul.f32 %v4172, 0.5
        %v4208 = vmul.f32 %v4173, 0.5
        %v4209 = vmul.f32 %v4174, 0.5
        %v4210 = vmul.f32 %v4175, 0.5
        %v4211 = vmul.f32 %v4176, 0.5
        %v4212 = vmul.f32 %v4177, 0.5
        %v4213 = vmul.f32 %v4178, 0.5
        %v4214 = vmul.f32 %v4179, 0.5
        %v4215 = vmul.f32 %v4180, 0.5
        %v4216 = vmul.f32 %v4181, 0.5
        %v4217 = vmul.f32 %v4182, 0.5
        %v4218 = vmul.f32 %v4183, 0.5
        %v4219 = vsel %vm4186, 1, 0
        %vm4220 = vcmp.eq.s32.totalorder %v4219, 1
        %v4221 = vsel %vm4220, %v4152, %v4187
        %v4222 = vsel %vm4220, %v4153, %v4188
        %v4223 = vsel %vm4220, %v4154, %v4189
        %v4224 = vsel %vm4220, %v4155, %v4190
        %v4225 = vsel %vm4220, %v4156, %v4191
        %v4226 = vsel %vm4220, %v4157, %v4192
        %v4227 = vsel %vm4220, %v4158, %v4193
        %v4228 = vsel %vm4220, %v4159, %v4194
        %v4229 = vsel %vm4220, %v4160, %v4195
        %v4230 = vsel %vm4220, %v4161, %v4196
        %v4231 = vsel %vm4220, %v4162, %v4197
        %v4232 = vsel %vm4220, %v4163, %v4198
        %v4233 = vsel %vm4220, %v4164, %v4199
        %v4234 = vsel %vm4220, %v4165, %v4200
        %v4235 = vsel %vm4220, %v4166, %v4201
        %v4236 = vsel %vm4220, %v4167, %v4202
        %v4237 = vsel %vm4220, %v4168, %v4203
        %v4238 = vsel %vm4220, %v4169, %v4204
        %v4239 = vsel %vm4220, %v4170, %v4205
        %v4240 = vsel %vm4220, %v4171, %v4206
        %v4241 = vsel %vm4220, %v4172, %v4207
        %v4242 = vsel %vm4220, %v4173, %v4208
        %v4243 = vsel %vm4220, %v4174, %v4209
        %v4244 = vsel %vm4220, %v4175, %v4210
        %v4245 = vsel %vm4220, %v4176, %v4211
        %v4246 = vsel %vm4220, %v4177, %v4212
        %v4247 = vsel %vm4220, %v4178, %v4213
        %v4248 = vsel %vm4220, %v4179, %v4214
        %v4249 = vsel %vm4220, %v4180, %v4215
        %v4250 = vsel %vm4220, %v4181, %v4216
        %v4251 = vsel %vm4220, %v4182, %v4217
        %v4252 = vsel %vm4220, %v4183, %v4218
        %v4253 = vtanh.pop %v4221
        %v4254 = vtanh.pop %v4222
        %v4255 = vtanh.pop %v4223
        %v4256 = vtanh.pop %v4224
        %v4257 = vtanh.pop %v4225
        %v4258 = vtanh.pop %v4226
        %v4259 = vtanh.pop %v4227
        %v4260 = vtanh.pop %v4228
        %v4261 = vtanh.pop %v4229
        %v4262 = vtanh.pop %v4230
        %v4263 = vtanh.pop %v4231
        %v4264 = vtanh.pop %v4232
        %v4265 = vtanh.pop %v4233
        %v4266 = vtanh.pop %v4234
        %v4267 = vtanh.pop %v4235
        %v4268 = vtanh.pop %v4236
        %v4269 = vtanh.pop %v4237
        %v4270 = vtanh.pop %v4238
        %v4271 = vtanh.pop %v4239
        %v4272 = vtanh.pop %v4240
        %v4273 = vtanh.pop %v4241
        %v4274 = vtanh.pop %v4242
        %v4275 = vtanh.pop %v4243
        %v4276 = vtanh.pop %v4244
        %v4277 = vtanh.pop %v4245
        %v4278 = vtanh.pop %v4246
        %v4279 = vtanh.pop %v4247
        %v4280 = vtanh.pop %v4248
        %v4281 = vtanh.pop %v4249
        %v4282 = vtanh.pop %v4250
        %v4283 = vtanh.pop %v4251
        %v4284 = vtanh.pop %v4252
        %v4285 = vmul.f32 %v4253, 0.5
        %v4286 = vmul.f32 %v4254, 0.5
        %v4287 = vmul.f32 %v4255, 0.5
        %v4288 = vmul.f32 %v4256, 0.5
        %v4289 = vmul.f32 %v4257, 0.5
        %v4290 = vmul.f32 %v4258, 0.5
        %v4291 = vmul.f32 %v4259, 0.5
        %v4292 = vmul.f32 %v4260, 0.5
        %v4293 = vmul.f32 %v4261, 0.5
        %v4294 = vmul.f32 %v4262, 0.5
        %v4295 = vmul.f32 %v4263, 0.5
        %v4296 = vmul.f32 %v4264, 0.5
        %v4297 = vmul.f32 %v4265, 0.5
        %v4298 = vmul.f32 %v4266, 0.5
        %v4299 = vmul.f32 %v4267, 0.5
        %v4300 = vmul.f32 %v4268, 0.5
        %v4301 = vmul.f32 %v4269, 0.5
        %v4302 = vmul.f32 %v4270, 0.5
        %v4303 = vmul.f32 %v4271, 0.5
        %v4304 = vmul.f32 %v4272, 0.5
        %v4305 = vmul.f32 %v4273, 0.5
        %v4306 = vmul.f32 %v4274, 0.5
        %v4307 = vmul.f32 %v4275, 0.5
        %v4308 = vmul.f32 %v4276, 0.5
        %v4309 = vmul.f32 %v4277, 0.5
        %v4310 = vmul.f32 %v4278, 0.5
        %v4311 = vmul.f32 %v4279, 0.5
        %v4312 = vmul.f32 %v4280, 0.5
        %v4313 = vmul.f32 %v4281, 0.5
        %v4314 = vmul.f32 %v4282, 0.5
        %v4315 = vmul.f32 %v4283, 0.5
        %v4316 = vmul.f32 %v4284, 0.5
        %v4317 = vadd.f32 %v4285, 0.5
        %v4318 = vadd.f32 %v4286, 0.5
        %v4319 = vadd.f32 %v4287, 0.5
        %v4320 = vadd.f32 %v4288, 0.5
        %v4321 = vadd.f32 %v4289, 0.5
        %v4322 = vadd.f32 %v4290, 0.5
        %v4323 = vadd.f32 %v4291, 0.5
        %v4324 = vadd.f32 %v4292, 0.5
        %v4325 = vadd.f32 %v4293, 0.5
        %v4326 = vadd.f32 %v4294, 0.5
        %v4327 = vadd.f32 %v4295, 0.5
        %v4328 = vadd.f32 %v4296, 0.5
        %v4329 = vadd.f32 %v4297, 0.5
        %v4330 = vadd.f32 %v4298, 0.5
        %v4331 = vadd.f32 %v4299, 0.5
        %v4332 = vadd.f32 %v4300, 0.5
        %v4333 = vadd.f32 %v4301, 0.5
        %v4334 = vadd.f32 %v4302, 0.5
        %v4335 = vadd.f32 %v4303, 0.5
        %v4336 = vadd.f32 %v4304, 0.5
        %v4337 = vadd.f32 %v4305, 0.5
        %v4338 = vadd.f32 %v4306, 0.5
        %v4339 = vadd.f32 %v4307, 0.5
        %v4340 = vadd.f32 %v4308, 0.5
        %v4341 = vadd.f32 %v4309, 0.5
        %v4342 = vadd.f32 %v4310, 0.5
        %v4343 = vadd.f32 %v4311, 0.5
        %v4344 = vadd.f32 %v4312, 0.5
        %v4345 = vadd.f32 %v4313, 0.5
        %v4346 = vadd.f32 %v4314, 0.5
        %v4347 = vadd.f32 %v4315, 0.5
        %v4348 = vadd.f32 %v4316, 0.5
        %v4349 = vsel %vm4220, %v4253, %v4317
        %v4350 = vsel %vm4220, %v4254, %v4318
        %v4351 = vsel %vm4220, %v4255, %v4319
        %v4352 = vsel %vm4220, %v4256, %v4320
        %v4353 = vsel %vm4220, %v4257, %v4321
        %v4354 = vsel %vm4220, %v4258, %v4322
        %v4355 = vsel %vm4220, %v4259, %v4323
        %v4356 = vsel %vm4220, %v4260, %v4324
        %v4357 = vsel %vm4220, %v4261, %v4325
        %v4358 = vsel %vm4220, %v4262, %v4326
        %v4359 = vsel %vm4220, %v4263, %v4327
        %v4360 = vsel %vm4220, %v4264, %v4328
        %v4361 = vsel %vm4220, %v4265, %v4329
        %v4362 = vsel %vm4220, %v4266, %v4330
        %v4363 = vsel %vm4220, %v4267, %v4331
        %v4364 = vsel %vm4220, %v4268, %v4332
        %v4365 = vsel %vm4220, %v4269, %v4333
        %v4366 = vsel %vm4220, %v4270, %v4334
        %v4367 = vsel %vm4220, %v4271, %v4335
        %v4368 = vsel %vm4220, %v4272, %v4336
        %v4369 = vsel %vm4220, %v4273, %v4337
        %v4370 = vsel %vm4220, %v4274, %v4338
        %v4371 = vsel %vm4220, %v4275, %v4339
        %v4372 = vsel %vm4220, %v4276, %v4340
        %v4373 = vsel %vm4220, %v4277, %v4341
        %v4374 = vsel %vm4220, %v4278, %v4342
        %v4375 = vsel %vm4220, %v4279, %v4343
        %v4376 = vsel %vm4220, %v4280, %v4344
        %v4377 = vsel %vm4220, %v4281, %v4345
        %v4378 = vsel %vm4220, %v4282, %v4346
        %v4379 = vsel %vm4220, %v4283, %v4347
        %v4380 = vsel %vm4220, %v4284, %v4348
        %v4381 = vld [vmem:[#allocation3] sm:$0xff]
        %v4382 = vld [vmem:[#allocation3 + $0x8] sm:$0xff]
        %v4383 = vld [vmem:[#allocation3 + $0x10] sm:$0xff]
        %v4384 = vld [vmem:[#allocation3 + $0x18] sm:$0xff]
        %v4385 = vld [vmem:[#allocation3 + $0x20] sm:$0xff]
        %v4386 = vld [vmem:[#allocation3 + $0x28] sm:$0xff]
        %v4387 = vld [vmem:[#allocation3 + $0x30] sm:$0xff]
        %v4388 = vld [vmem:[#allocation3 + $0x38] sm:$0xff]
        %v4389 = vld [vmem:[#allocation3 + $0x40] sm:$0xff]
        %v4390 = vld [vmem:[#allocation3 + $0x48] sm:$0xff]
        %v4391 = vld [vmem:[#allocation3 + $0x50] sm:$0xff]
        %v4392 = vld [vmem:[#allocation3 + $0x58] sm:$0xff]
        %v4393 = vld [vmem:[#allocation3 + $0x60] sm:$0xff]
        %v4394 = vld [vmem:[#allocation3 + $0x68] sm:$0xff]
        %v4395 = vld [vmem:[#allocation3 + $0x70] sm:$0xff]
        %v4396 = vld [vmem:[#allocation3 + $0x78] sm:$0xff]
        %v4397 = vld [vmem:[#allocation3 + $0x80] sm:$0xff]
        %v4398 = vld [vmem:[#allocation3 + $0x88] sm:$0xff]
        %v4399 = vld [vmem:[#allocation3 + $0x90] sm:$0xff]
        %v4400 = vld [vmem:[#allocation3 + $0x98] sm:$0xff]
        %v4401 = vld [vmem:[#allocation3 + $0xa0] sm:$0xff]
        %v4402 = vld [vmem:[#allocation3 + $0xa8] sm:$0xff]
        %v4403 = vld [vmem:[#allocation3 + $0xb0] sm:$0xff]
        %v4404 = vld [vmem:[#allocation3 + $0xb8] sm:$0xff]
        %v4405 = vld [vmem:[#allocation3 + $0xc0] sm:$0xff]
        %v4406 = vld [vmem:[#allocation3 + $0xc8] sm:$0xff]
        %v4407 = vld [vmem:[#allocation3 + $0xd0] sm:$0xff]
        %v4408 = vld [vmem:[#allocation3 + $0xd8] sm:$0xff]
        %v4409 = vld [vmem:[#allocation3 + $0xe0] sm:$0xff]
        %v4410 = vld [vmem:[#allocation3 + $0xe8] sm:$0xff]
        %v4411 = vld [vmem:[#allocation3 + $0xf0] sm:$0xff]
        %v4412 = vld [vmem:[#allocation3 + $0xf8] sm:$0xff]
        %4413 = vrot.lane.b32.xlu0 %v4349, 96
        %v4414 = vpop.permute.xlu0 %4413
        %4415 = vrot.lane.b32.xlu0 %v4350, 96
        %v4416 = vpop.permute.xlu0 %4415
        %4417 = vrot.lane.b32.xlu0 %v4351, 96
        %v4418 = vpop.permute.xlu0 %4417
        %4419 = vrot.lane.b32.xlu0 %v4352, 96
        %v4420 = vpop.permute.xlu0 %4419
        %4421 = vrot.lane.b32.xlu0 %v4353, 96
        %v4422 = vpop.permute.xlu0 %4421
        %4423 = vrot.lane.b32.xlu0 %v4354, 96
        %v4424 = vpop.permute.xlu0 %4423
        %4425 = vrot.lane.b32.xlu0 %v4355, 96
        %v4426 = vpop.permute.xlu0 %4425
        %4427 = vrot.lane.b32.xlu0 %v4356, 96
        %v4428 = vpop.permute.xlu0 %4427
        %4429 = vrot.lane.b32.xlu0 %v4357, 96
        %v4430 = vpop.permute.xlu0 %4429
        %4431 = vrot.lane.b32.xlu0 %v4358, 96
        %v4432 = vpop.permute.xlu0 %4431
        %4433 = vrot.lane.b32.xlu0 %v4359, 96
        %v4434 = vpop.permute.xlu0 %4433
        %4435 = vrot.lane.b32.xlu0 %v4360, 96
        %v4436 = vpop.permute.xlu0 %4435
        %4437 = vrot.lane.b32.xlu0 %v4361, 96
        %v4438 = vpop.permute.xlu0 %4437
        %4439 = vrot.lane.b32.xlu0 %v4362, 96
        %v4440 = vpop.permute.xlu0 %4439
        %4441 = vrot.lane.b32.xlu0 %v4363, 96
        %v4442 = vpop.permute.xlu0 %4441
        %4443 = vrot.lane.b32.xlu0 %v4364, 96
        %v4444 = vpop.permute.xlu0 %4443
        %4445 = vrot.lane.b32.xlu0 %v4365, 96
        %v4446 = vpop.permute.xlu0 %4445
        %4447 = vrot.lane.b32.xlu0 %v4366, 96
        %v4448 = vpop.permute.xlu0 %4447
        %4449 = vrot.lane.b32.xlu0 %v4367, 96
        %v4450 = vpop.permute.xlu0 %4449
        %4451 = vrot.lane.b32.xlu0 %v4368, 96
        %v4452 = vpop.permute.xlu0 %4451
        %4453 = vrot.lane.b32.xlu0 %v4369, 96
        %v4454 = vpop.permute.xlu0 %4453
        %4455 = vrot.lane.b32.xlu0 %v4370, 96
        %v4456 = vpop.permute.xlu0 %4455
        %4457 = vrot.lane.b32.xlu0 %v4371, 96
        %v4458 = vpop.permute.xlu0 %4457
        %4459 = vrot.lane.b32.xlu0 %v4372, 96
        %v4460 = vpop.permute.xlu0 %4459
        %4461 = vrot.lane.b32.xlu0 %v4373, 96
        %v4462 = vpop.permute.xlu0 %4461
        %4463 = vrot.lane.b32.xlu0 %v4374, 96
        %v4464 = vpop.permute.xlu0 %4463
        %4465 = vrot.lane.b32.xlu0 %v4375, 96
        %v4466 = vpop.permute.xlu0 %4465
        %4467 = vrot.lane.b32.xlu0 %v4376, 96
        %v4468 = vpop.permute.xlu0 %4467
        %4469 = vrot.lane.b32.xlu0 %v4377, 96
        %v4470 = vpop.permute.xlu0 %4469
        %4471 = vrot.lane.b32.xlu0 %v4378, 96
        %v4472 = vpop.permute.xlu0 %4471
        %4473 = vrot.lane.b32.xlu0 %v4379, 96
        %v4474 = vpop.permute.xlu0 %4473
        %4475 = vrot.lane.b32.xlu0 %v4380, 96
        %v4476 = vpop.permute.xlu0 %4475
        %4477 = vrot.lane.b32.xlu0 %v4349, 64
        %v4478 = vpop.permute.xlu0 %4477
        %4479 = vrot.lane.b32.xlu0 %v4350, 64
        %v4480 = vpop.permute.xlu0 %4479
        %4481 = vrot.lane.b32.xlu0 %v4351, 64
        %v4482 = vpop.permute.xlu0 %4481
        %4483 = vrot.lane.b32.xlu0 %v4352, 64
        %v4484 = vpop.permute.xlu0 %4483
        %4485 = vrot.lane.b32.xlu0 %v4353, 64
        %v4486 = vpop.permute.xlu0 %4485
        %4487 = vrot.lane.b32.xlu0 %v4354, 64
        %v4488 = vpop.permute.xlu0 %4487
        %4489 = vrot.lane.b32.xlu0 %v4355, 64
        %v4490 = vpop.permute.xlu0 %4489
        %4491 = vrot.lane.b32.xlu0 %v4356, 64
        %v4492 = vpop.permute.xlu0 %4491
        %4493 = vrot.lane.b32.xlu0 %v4357, 64
        %v4494 = vpop.permute.xlu0 %4493
        %4495 = vrot.lane.b32.xlu0 %v4358, 64
        %v4496 = vpop.permute.xlu0 %4495
        %4497 = vrot.lane.b32.xlu0 %v4359, 64
        %v4498 = vpop.permute.xlu0 %4497
        %4499 = vrot.lane.b32.xlu0 %v4360, 64
        %v4500 = vpop.permute.xlu0 %4499
        %4501 = vrot.lane.b32.xlu0 %v4361, 64
        %v4502 = vpop.permute.xlu0 %4501
        %4503 = vrot.lane.b32.xlu0 %v4362, 64
        %v4504 = vpop.permute.xlu0 %4503
        %4505 = vrot.lane.b32.xlu0 %v4363, 64
        %v4506 = vpop.permute.xlu0 %4505
        %4507 = vrot.lane.b32.xlu0 %v4364, 64
        %v4508 = vpop.permute.xlu0 %4507
        %4509 = vrot.lane.b32.xlu0 %v4365, 64
        %v4510 = vpop.permute.xlu0 %4509
        %4511 = vrot.lane.b32.xlu0 %v4366, 64
        %v4512 = vpop.permute.xlu0 %4511
        %4513 = vrot.lane.b32.xlu0 %v4367, 64
        %v4514 = vpop.permute.xlu0 %4513
        %4515 = vrot.lane.b32.xlu0 %v4368, 64
        %v4516 = vpop.permute.xlu0 %4515
        %4517 = vrot.lane.b32.xlu0 %v4369, 64
        %v4518 = vpop.permute.xlu0 %4517
        %4519 = vrot.lane.b32.xlu0 %v4370, 64
        %v4520 = vpop.permute.xlu0 %4519
        %4521 = vrot.lane.b32.xlu0 %v4371, 64
        %v4522 = vpop.permute.xlu0 %4521
        %4523 = vrot.lane.b32.xlu0 %v4372, 64
        %v4524 = vpop.permute.xlu0 %4523
        %4525 = vrot.lane.b32.xlu0 %v4373, 64
        %v4526 = vpop.permute.xlu0 %4525
        %4527 = vrot.lane.b32.xlu0 %v4374, 64
        %v4528 = vpop.permute.xlu0 %4527
        %4529 = vrot.lane.b32.xlu0 %v4375, 64
        %v4530 = vpop.permute.xlu0 %4529
        %4531 = vrot.lane.b32.xlu0 %v4376, 64
        %v4532 = vpop.permute.xlu0 %4531
        %4533 = vrot.lane.b32.xlu0 %v4377, 64
        %v4534 = vpop.permute.xlu0 %4533
        %4535 = vrot.lane.b32.xlu0 %v4378, 64
        %v4536 = vpop.permute.xlu0 %4535
        %4537 = vrot.lane.b32.xlu0 %v4379, 64
        %v4538 = vpop.permute.xlu0 %4537
        %4539 = vrot.lane.b32.xlu0 %v4380, 64
        %v4540 = vpop.permute.xlu0 %4539
        %4541 = vrot.lane.b32.xlu0 %v4349, 32
        %v4542 = vpop.permute.xlu0 %4541
        %4543 = vrot.lane.b32.xlu0 %v4350, 32
        %v4544 = vpop.permute.xlu0 %4543
        %4545 = vrot.lane.b32.xlu0 %v4351, 32
        %v4546 = vpop.permute.xlu0 %4545
        %4547 = vrot.lane.b32.xlu0 %v4352, 32
        %v4548 = vpop.permute.xlu0 %4547
        %4549 = vrot.lane.b32.xlu0 %v4353, 32
        %v4550 = vpop.permute.xlu0 %4549
        %4551 = vrot.lane.b32.xlu0 %v4354, 32
        %v4552 = vpop.permute.xlu0 %4551
        %4553 = vrot.lane.b32.xlu0 %v4355, 32
        %v4554 = vpop.permute.xlu0 %4553
        %4555 = vrot.lane.b32.xlu0 %v4356, 32
        %v4556 = vpop.permute.xlu0 %4555
        %4557 = vrot.lane.b32.xlu0 %v4357, 32
        %v4558 = vpop.permute.xlu0 %4557
        %4559 = vrot.lane.b32.xlu0 %v4358, 32
        %v4560 = vpop.permute.xlu0 %4559
        %4561 = vrot.lane.b32.xlu0 %v4359, 32
        %v4562 = vpop.permute.xlu0 %4561
        %4563 = vrot.lane.b32.xlu0 %v4360, 32
        %v4564 = vpop.permute.xlu0 %4563
        %4565 = vrot.lane.b32.xlu0 %v4361, 32
        %v4566 = vpop.permute.xlu0 %4565
        %4567 = vrot.lane.b32.xlu0 %v4362, 32
        %v4568 = vpop.permute.xlu0 %4567
        %4569 = vrot.lane.b32.xlu0 %v4363, 32
        %v4570 = vpop.permute.xlu0 %4569
        %4571 = vrot.lane.b32.xlu0 %v4364, 32
        %v4572 = vpop.permute.xlu0 %4571
        %4573 = vrot.lane.b32.xlu0 %v4365, 32
        %v4574 = vpop.permute.xlu0 %4573
        %4575 = vrot.lane.b32.xlu0 %v4366, 32
        %v4576 = vpop.permute.xlu0 %4575
        %4577 = vrot.lane.b32.xlu0 %v4367, 32
        %v4578 = vpop.permute.xlu0 %4577
        %4579 = vrot.lane.b32.xlu0 %v4368, 32
        %v4580 = vpop.permute.xlu0 %4579
        %4581 = vrot.lane.b32.xlu0 %v4369, 32
        %v4582 = vpop.permute.xlu0 %4581
        %4583 = vrot.lane.b32.xlu0 %v4370, 32
        %v4584 = vpop.permute.xlu0 %4583
        %4585 = vrot.lane.b32.xlu0 %v4371, 32
        %v4586 = vpop.permute.xlu0 %4585
        %4587 = vrot.lane.b32.xlu0 %v4372, 32
        %v4588 = vpop.permute.xlu0 %4587
        %4589 = vrot.lane.b32.xlu0 %v4373, 32
        %v4590 = vpop.permute.xlu0 %4589
        %4591 = vrot.lane.b32.xlu0 %v4374, 32
        %v4592 = vpop.permute.xlu0 %4591
        %4593 = vrot.lane.b32.xlu0 %v4375, 32
        %v4594 = vpop.permute.xlu0 %4593
        %4595 = vrot.lane.b32.xlu0 %v4376, 32
        %v4596 = vpop.permute.xlu0 %4595
        %4597 = vrot.lane.b32.xlu0 %v4377, 32
        %v4598 = vpop.permute.xlu0 %4597
        %4599 = vrot.lane.b32.xlu0 %v4378, 32
        %v4600 = vpop.permute.xlu0 %4599
        %4601 = vrot.lane.b32.xlu0 %v4379, 32
        %v4602 = vpop.permute.xlu0 %4601
        %4603 = vrot.lane.b32.xlu0 %v4380, 32
        %v4604 = vpop.permute.xlu0 %4603
        %v4605 = vmul.f32 %v4414, %v4381
        %v4606 = vmul.f32 %v4416, %v4382
        %v4607 = vmul.f32 %v4418, %v4383
        %v4608 = vmul.f32 %v4420, %v4384
        %v4609 = vmul.f32 %v4422, %v4385
        %v4610 = vmul.f32 %v4424, %v4386
        %v4611 = vmul.f32 %v4426, %v4387
        %v4612 = vmul.f32 %v4428, %v4388
        %v4613 = vmul.f32 %v4430, %v4389
        %v4614 = vmul.f32 %v4432, %v4390
        %v4615 = vmul.f32 %v4434, %v4391
        %v4616 = vmul.f32 %v4436, %v4392
        %v4617 = vmul.f32 %v4438, %v4393
        %v4618 = vmul.f32 %v4440, %v4394
        %v4619 = vmul.f32 %v4442, %v4395
        %v4620 = vmul.f32 %v4444, %v4396
        %v4621 = vmul.f32 %v4446, %v4397
        %v4622 = vmul.f32 %v4448, %v4398
        %v4623 = vmul.f32 %v4450, %v4399
        %v4624 = vmul.f32 %v4452, %v4400
        %v4625 = vmul.f32 %v4454, %v4401
        %v4626 = vmul.f32 %v4456, %v4402
        %v4627 = vmul.f32 %v4458, %v4403
        %v4628 = vmul.f32 %v4460, %v4404
        %v4629 = vmul.f32 %v4462, %v4405
        %v4630 = vmul.f32 %v4464, %v4406
        %v4631 = vmul.f32 %v4466, %v4407
        %v4632 = vmul.f32 %v4468, %v4408
        %v4633 = vmul.f32 %v4470, %v4409
        %v4634 = vmul.f32 %v4472, %v4410
        %v4635 = vmul.f32 %v4474, %v4411
        %v4636 = vmul.f32 %v4476, %v4412
        %v4637 = vmul.f32 %v4349, %v4542
        %v4638 = vmul.f32 %v4350, %v4544
        %v4639 = vmul.f32 %v4351, %v4546
        %v4640 = vmul.f32 %v4352, %v4548
        %v4641 = vmul.f32 %v4353, %v4550
        %v4642 = vmul.f32 %v4354, %v4552
        %v4643 = vmul.f32 %v4355, %v4554
        %v4644 = vmul.f32 %v4356, %v4556
        %v4645 = vmul.f32 %v4357, %v4558
        %v4646 = vmul.f32 %v4358, %v4560
        %v4647 = vmul.f32 %v4359, %v4562
        %v4648 = vmul.f32 %v4360, %v4564
        %v4649 = vmul.f32 %v4361, %v4566
        %v4650 = vmul.f32 %v4362, %v4568
        %v4651 = vmul.f32 %v4363, %v4570
        %v4652 = vmul.f32 %v4364, %v4572
        %v4653 = vmul.f32 %v4365, %v4574
        %v4654 = vmul.f32 %v4366, %v4576
        %v4655 = vmul.f32 %v4367, %v4578
        %v4656 = vmul.f32 %v4368, %v4580
        %v4657 = vmul.f32 %v4369, %v4582
        %v4658 = vmul.f32 %v4370, %v4584
        %v4659 = vmul.f32 %v4371, %v4586
        %v4660 = vmul.f32 %v4372, %v4588
        %v4661 = vmul.f32 %v4373, %v4590
        %v4662 = vmul.f32 %v4374, %v4592
        %v4663 = vmul.f32 %v4375, %v4594
        %v4664 = vmul.f32 %v4376, %v4596
        %v4665 = vmul.f32 %v4377, %v4598
        %v4666 = vmul.f32 %v4378, %v4600
        %v4667 = vmul.f32 %v4379, %v4602
        %v4668 = vmul.f32 %v4380, %v4604
        %v4669 = vadd.f32 %v4605, %v4637
        %v4670 = vadd.f32 %v4606, %v4638
        %v4671 = vadd.f32 %v4607, %v4639
        %v4672 = vadd.f32 %v4608, %v4640
        %v4673 = vadd.f32 %v4609, %v4641
        %v4674 = vadd.f32 %v4610, %v4642
        %v4675 = vadd.f32 %v4611, %v4643
        %v4676 = vadd.f32 %v4612, %v4644
        %v4677 = vadd.f32 %v4613, %v4645
        %v4678 = vadd.f32 %v4614, %v4646
        %v4679 = vadd.f32 %v4615, %v4647
        %v4680 = vadd.f32 %v4616, %v4648
        %v4681 = vadd.f32 %v4617, %v4649
        %v4682 = vadd.f32 %v4618, %v4650
        %v4683 = vadd.f32 %v4619, %v4651
        %v4684 = vadd.f32 %v4620, %v4652
        %v4685 = vadd.f32 %v4621, %v4653
        %v4686 = vadd.f32 %v4622, %v4654
        %v4687 = vadd.f32 %v4623, %v4655
        %v4688 = vadd.f32 %v4624, %v4656
        %v4689 = vadd.f32 %v4625, %v4657
        %v4690 = vadd.f32 %v4626, %v4658
        %v4691 = vadd.f32 %v4627, %v4659
        %v4692 = vadd.f32 %v4628, %v4660
        %v4693 = vadd.f32 %v4629, %v4661
        %v4694 = vadd.f32 %v4630, %v4662
        %v4695 = vadd.f32 %v4631, %v4663
        %v4696 = vadd.f32 %v4632, %v4664
        %v4697 = vadd.f32 %v4633, %v4665
        %v4698 = vadd.f32 %v4634, %v4666
        %v4699 = vadd.f32 %v4635, %v4667
        %v4700 = vadd.f32 %v4636, %v4668
        %vm4701 = vcmp.lt.s32.totalorder %v4185, 32
        %v4702 = vsel %vm4701, 1, 0
        %vm4703 = vcmp.eq.s32.totalorder %v4702, 1
        %v4704 = vsel %vm4703, %v4669, 0.0
        %v4705 = vsel %vm4703, %v4670, 0.0
        %v4706 = vsel %vm4703, %v4671, 0.0
        %v4707 = vsel %vm4703, %v4672, 0.0
        %v4708 = vsel %vm4703, %v4673, 0.0
        %v4709 = vsel %vm4703, %v4674, 0.0
        %v4710 = vsel %vm4703, %v4675, 0.0
        %v4711 = vsel %vm4703, %v4676, 0.0
        %v4712 = vsel %vm4703, %v4677, 0.0
        %v4713 = vsel %vm4703, %v4678, 0.0
        %v4714 = vsel %vm4703, %v4679, 0.0
        %v4715 = vsel %vm4703, %v4680, 0.0
        %v4716 = vsel %vm4703, %v4681, 0.0
        %v4717 = vsel %vm4703, %v4682, 0.0
        %v4718 = vsel %vm4703, %v4683, 0.0
        %v4719 = vsel %vm4703, %v4684, 0.0
        %v4720 = vsel %vm4703, %v4685, 0.0
        %v4721 = vsel %vm4703, %v4686, 0.0
        %v4722 = vsel %vm4703, %v4687, 0.0
        %v4723 = vsel %vm4703, %v4688, 0.0
        %v4724 = vsel %vm4703, %v4689, 0.0
        %v4725 = vsel %vm4703, %v4690, 0.0
        %v4726 = vsel %vm4703, %v4691, 0.0
        %v4727 = vsel %vm4703, %v4692, 0.0
        %v4728 = vsel %vm4703, %v4693, 0.0
        %v4729 = vsel %vm4703, %v4694, 0.0
        %v4730 = vsel %vm4703, %v4695, 0.0
        %v4731 = vsel %vm4703, %v4696, 0.0
        %v4732 = vsel %vm4703, %v4697, 0.0
        %v4733 = vsel %vm4703, %v4698, 0.0
        %v4734 = vsel %vm4703, %v4699, 0.0
        %v4735 = vsel %vm4703, %v4700, 0.0
        %v4736 = vtanh.pop %v4704
        %v4737 = vtanh.pop %v4705
        %v4738 = vtanh.pop %v4706
        %v4739 = vtanh.pop %v4707
        %v4740 = vtanh.pop %v4708
        %v4741 = vtanh.pop %v4709
        %v4742 = vtanh.pop %v4710
        %v4743 = vtanh.pop %v4711
        %v4744 = vtanh.pop %v4712
        %v4745 = vtanh.pop %v4713
        %v4746 = vtanh.pop %v4714
        %v4747 = vtanh.pop %v4715
        %v4748 = vtanh.pop %v4716
        %v4749 = vtanh.pop %v4717
        %v4750 = vtanh.pop %v4718
        %v4751 = vtanh.pop %v4719
        %v4752 = vtanh.pop %v4720
        %v4753 = vtanh.pop %v4721
        %v4754 = vtanh.pop %v4722
        %v4755 = vtanh.pop %v4723
        %v4756 = vtanh.pop %v4724
        %v4757 = vtanh.pop %v4725
        %v4758 = vtanh.pop %v4726
        %v4759 = vtanh.pop %v4727
        %v4760 = vtanh.pop %v4728
        %v4761 = vtanh.pop %v4729
        %v4762 = vtanh.pop %v4730
        %v4763 = vtanh.pop %v4731
        %v4764 = vtanh.pop %v4732
        %v4765 = vtanh.pop %v4733
        %v4766 = vtanh.pop %v4734
        %v4767 = vtanh.pop %v4735
        %v4768 = vmul.f32 %v4478, %v4736
        %v4769 = vmul.f32 %v4480, %v4737
        %v4770 = vmul.f32 %v4482, %v4738
        %v4771 = vmul.f32 %v4484, %v4739
        %v4772 = vmul.f32 %v4486, %v4740
        %v4773 = vmul.f32 %v4488, %v4741
        %v4774 = vmul.f32 %v4490, %v4742
        %v4775 = vmul.f32 %v4492, %v4743
        %v4776 = vmul.f32 %v4494, %v4744
        %v4777 = vmul.f32 %v4496, %v4745
        %v4778 = vmul.f32 %v4498, %v4746
        %v4779 = vmul.f32 %v4500, %v4747
        %v4780 = vmul.f32 %v4502, %v4748
        %v4781 = vmul.f32 %v4504, %v4749
        %v4782 = vmul.f32 %v4506, %v4750
        %v4783 = vmul.f32 %v4508, %v4751
        %v4784 = vmul.f32 %v4510, %v4752
        %v4785 = vmul.f32 %v4512, %v4753
        %v4786 = vmul.f32 %v4514, %v4754
        %v4787 = vmul.f32 %v4516, %v4755
        %v4788 = vmul.f32 %v4518, %v4756
        %v4789 = vmul.f32 %v4520, %v4757
        %v4790 = vmul.f32 %v4522, %v4758
        %v4791 = vmul.f32 %v4524, %v4759
        %v4792 = vmul.f32 %v4526, %v4760
        %v4793 = vmul.f32 %v4528, %v4761
        %v4794 = vmul.f32 %v4530, %v4762
        %v4795 = vmul.f32 %v4532, %v4763
        %v4796 = vmul.f32 %v4534, %v4764
        %v4797 = vmul.f32 %v4536, %v4765
        %v4798 = vmul.f32 %v4538, %v4766
        %v4799 = vmul.f32 %v4540, %v4767
        %4800 = vst [vmem:[#allocation3] sm:$0xff] %v4704
        %4801 = vst [vmem:[#allocation3 + $0x8] sm:$0xff] %v4705
        %4802 = vst [vmem:[#allocation3 + $0x10] sm:$0xff] %v4706
        %4803 = vst [vmem:[#allocation3 + $0x18] sm:$0xff] %v4707
        %4804 = vst [vmem:[#allocation3 + $0x20] sm:$0xff] %v4708
        %4805 = vst [vmem:[#allocation3 + $0x28] sm:$0xff] %v4709
        %4806 = vst [vmem:[#allocation3 + $0x30] sm:$0xff] %v4710
        %4807 = vst [vmem:[#allocation3 + $0x38] sm:$0xff] %v4711
        %4808 = vst [vmem:[#allocation3 + $0x40] sm:$0xff] %v4712
        %4809 = vst [vmem:[#allocation3 + $0x48] sm:$0xff] %v4713
        %4810 = vst [vmem:[#allocation3 + $0x50] sm:$0xff] %v4714
        %4811 = vst [vmem:[#allocation3 + $0x58] sm:$0xff] %v4715
        %4812 = vst [vmem:[#allocation3 + $0x60] sm:$0xff] %v4716
        %4813 = vst [vmem:[#allocation3 + $0x68] sm:$0xff] %v4717
        %4814 = vst [vmem:[#allocation3 + $0x70] sm:$0xff] %v4718
        %4815 = vst [vmem:[#allocation3 + $0x78] sm:$0xff] %v4719
        %4816 = vst [vmem:[#allocation3 + $0x80] sm:$0xff] %v4720
        %4817 = vst [vmem:[#allocation3 + $0x88] sm:$0xff] %v4721
        %4818 = vst [vmem:[#allocation3 + $0x90] sm:$0xff] %v4722
        %4819 = vst [vmem:[#allocation3 + $0x98] sm:$0xff] %v4723
        %4820 = vst [vmem:[#allocation3 + $0xa0] sm:$0xff] %v4724
        %4821 = vst [vmem:[#allocation3 + $0xa8] sm:$0xff] %v4725
        %4822 = vst [vmem:[#allocation3 + $0xb0] sm:$0xff] %v4726
        %4823 = vst [vmem:[#allocation3 + $0xb8] sm:$0xff] %v4727
        %4824 = vst [vmem:[#allocation3 + $0xc0] sm:$0xff] %v4728
        %4825 = vst [vmem:[#allocation3 + $0xc8] sm:$0xff] %v4729
        %4826 = vst [vmem:[#allocation3 + $0xd0] sm:$0xff] %v4730
        %4827 = vst [vmem:[#allocation3 + $0xd8] sm:$0xff] %v4731
        %4828 = vst [vmem:[#allocation3 + $0xe0] sm:$0xff] %v4732
        %4829 = vst [vmem:[#allocation3 + $0xe8] sm:$0xff] %v4733
        %4830 = vst [vmem:[#allocation3 + $0xf0] sm:$0xff] %v4734
        %4831 = vst [vmem:[#allocation3 + $0xf8] sm:$0xff] %v4735
        %s4832 = scalar_lea.vmem [#allocation2], 16
        %4833 = vst [vmem:[%s4832] sm:$0xff] %v4768
        %4834 = vst [vmem:[%s4832 + $0x8] sm:$0xff] %v4769
        %4835 = vst [vmem:[%s4832 + $0x10] sm:$0xff] %v4770
        %4836 = vst [vmem:[%s4832 + $0x18] sm:$0xff] %v4771
        %4837 = vst [vmem:[%s4832 + $0x20] sm:$0xff] %v4772
        %4838 = vst [vmem:[%s4832 + $0x28] sm:$0xff] %v4773
        %4839 = vst [vmem:[%s4832 + $0x30] sm:$0xff] %v4774
        %4840 = vst [vmem:[%s4832 + $0x38] sm:$0xff] %v4775
        %4841 = vst [vmem:[%s4832 + $0x40] sm:$0xff] %v4776
        %4842 = vst [vmem:[%s4832 + $0x48] sm:$0xff] %v4777
        %4843 = vst [vmem:[%s4832 + $0x50] sm:$0xff] %v4778
        %4844 = vst [vmem:[%s4832 + $0x58] sm:$0xff] %v4779
        %4845 = vst [vmem:[%s4832 + $0x60] sm:$0xff] %v4780
        %4846 = vst [vmem:[%s4832 + $0x68] sm:$0xff] %v4781
        %4847 = vst [vmem:[%s4832 + $0x70] sm:$0xff] %v4782
        %4848 = vst [vmem:[%s4832 + $0x78] sm:$0xff] %v4783
        %4849 = vst [vmem:[%s4832 + $0x80] sm:$0xff] %v4784
        %4850 = vst [vmem:[%s4832 + $0x88] sm:$0xff] %v4785
        %4851 = vst [vmem:[%s4832 + $0x90] sm:$0xff] %v4786
        %4852 = vst [vmem:[%s4832 + $0x98] sm:$0xff] %v4787
        %4853 = vst [vmem:[%s4832 + $0xa0] sm:$0xff] %v4788
        %4854 = vst [vmem:[%s4832 + $0xa8] sm:$0xff] %v4789
        %4855 = vst [vmem:[%s4832 + $0xb0] sm:$0xff] %v4790
        %4856 = vst [vmem:[%s4832 + $0xb8] sm:$0xff] %v4791
        %4857 = vst [vmem:[%s4832 + $0xc0] sm:$0xff] %v4792
        %4858 = vst [vmem:[%s4832 + $0xc8] sm:$0xff] %v4793
        %4859 = vst [vmem:[%s4832 + $0xd0] sm:$0xff] %v4794
        %4860 = vst [vmem:[%s4832 + $0xd8] sm:$0xff] %v4795
        %4861 = vst [vmem:[%s4832 + $0xe0] sm:$0xff] %v4796
        %4862 = vst [vmem:[%s4832 + $0xe8] sm:$0xff] %v4797
        %4863 = vst [vmem:[%s4832 + $0xf0] sm:$0xff] %v4798
        %4864 = vst [vmem:[%s4832 + $0xf8] sm:$0xff] %v4799
        %4865 = vst [vmem:[%s214] sm:$0xff] %v4768
        %4866 = vst [vmem:[%s214 + $0x8] sm:$0xff] %v4769
        %4867 = vst [vmem:[%s214 + $0x10] sm:$0xff] %v4770
        %4868 = vst [vmem:[%s214 + $0x18] sm:$0xff] %v4771
        %4869 = vst [vmem:[%s214 + $0x20] sm:$0xff] %v4772
        %4870 = vst [vmem:[%s214 + $0x28] sm:$0xff] %v4773
        %4871 = vst [vmem:[%s214 + $0x30] sm:$0xff] %v4774
        %4872 = vst [vmem:[%s214 + $0x38] sm:$0xff] %v4775
        %4873 = vst [vmem:[%s214 + $0x40] sm:$0xff] %v4776
        %4874 = vst [vmem:[%s214 + $0x48] sm:$0xff] %v4777
        %4875 = vst [vmem:[%s214 + $0x50] sm:$0xff] %v4778
        %4876 = vst [vmem:[%s214 + $0x58] sm:$0xff] %v4779
        %4877 = vst [vmem:[%s214 + $0x60] sm:$0xff] %v4780
        %4878 = vst [vmem:[%s214 + $0x68] sm:$0xff] %v4781
        %4879 = vst [vmem:[%s214 + $0x70] sm:$0xff] %v4782
        %4880 = vst [vmem:[%s214 + $0x78] sm:$0xff] %v4783
        %4881 = vst [vmem:[%s214 + $0x80] sm:$0xff] %v4784
        %4882 = vst [vmem:[%s214 + $0x88] sm:$0xff] %v4785
        %4883 = vst [vmem:[%s214 + $0x90] sm:$0xff] %v4786
        %4884 = vst [vmem:[%s214 + $0x98] sm:$0xff] %v4787
        %4885 = vst [vmem:[%s214 + $0xa0] sm:$0xff] %v4788
        %4886 = vst [vmem:[%s214 + $0xa8] sm:$0xff] %v4789
        %4887 = vst [vmem:[%s214 + $0xb0] sm:$0xff] %v4790
        %4888 = vst [vmem:[%s214 + $0xb8] sm:$0xff] %v4791
        %4889 = vst [vmem:[%s214 + $0xc0] sm:$0xff] %v4792
        %4890 = vst [vmem:[%s214 + $0xc8] sm:$0xff] %v4793
        %4891 = vst [vmem:[%s214 + $0xd0] sm:$0xff] %v4794
        %4892 = vst [vmem:[%s214 + $0xd8] sm:$0xff] %v4795
        %4893 = vst [vmem:[%s214 + $0xe0] sm:$0xff] %v4796
        %4894 = vst [vmem:[%s214 + $0xe8] sm:$0xff] %v4797
        %4895 = vst [vmem:[%s214 + $0xf0] sm:$0xff] %v4798
        %4896 = vst [vmem:[%s214 + $0xf8] sm:$0xff] %v4799
        %s4897 = sand.u32 %s131, 1
        %s4898 = scalar_lea.sflag [#allocation5], %s4897
        %s4899 = sand.u32 %s131, 1
        %s4900 = smul.addr %s4899, 256
        %s4901 = scalar_lea.vmem [#allocation4], %s4900
        // Predicated region
        $region41: #{tpu_custom_call.1} parent=35 // pred_check
          %p4902 = pneg %p141
        $region42: #{tpu_custom_call.1} parent=35 // pred_check_branch
          %4904 = sbr.rel (%p4902) target = $region44
        $region43: #{tpu_custom_call.1} parent=35 // pred_region
          %s4906 = ssub.s32 4096, 4096
          %4907 = vsyncadd %s4898, %s4906
          %s4908 = smul.addr %s22, 32
          %s4909 = smul.addr %s23, 64
          %s4910 = sadd.s32 %s4908, %s4909
          %s4911 = smul.addr %s4910, 128
          %s4912 = scalar_lea.hbm %s4, %s4911
          %s4913 = sshll.u32 %s4901, 4
          %s4914 = int_to_ptr.vmem [resolvable:$true] %s4913
          %4919 = dma.vmem_to_hbm [thread:$0]  %s4914, 4096, %s4912, %s4898, 128, 128, 8
        $region44: #{tpu_custom_call.1} parent=35 // pred_fallthru
          _
      $region36: #{tpu_custom_call.1} parent=5 // pred_fallthru
        _
      %p4920 = scmp.le.s32.totalorder 2, %s13
      // Predicated region
      $region45: #{tpu_custom_call.1} parent=5 // pred_check
        %p4921 = pneg %p4920
      $region46: #{tpu_custom_call.1} parent=5 // pred_check_branch
        %4923 = sbr.rel (%p4921) target = $region48
      $region47: #{tpu_custom_call.1} parent=5 // pred_region
        %s4924 = ssub.s32 %s13, 2
        // Predicated region
        $region49: #{tpu_custom_call.1} parent=47 // pred_check
          %p4925 = pneg %p147
        $region50: #{tpu_custom_call.1} parent=47 // pred_check_branch
          %4927 = sbr.rel (%p4925) target = $region52
        $region51: #{tpu_custom_call.1} parent=47 // pred_region
          %s4928 = sand.u32 %s132, 1
          %s4929 = scalar_lea.sflag [#allocation5], %s4928
          %s4930 = sand.u32 %s132, 1
          %s4931 = smul.addr %s4930, 256
          %s4932 = scalar_lea.vmem [#allocation4], %s4931
          %4933 = dma.done %s4929, 4096
        $region52: #{tpu_custom_call.1} parent=47 // pred_fallthru
          _
      $region48: #{tpu_custom_call.1} parent=5 // pred_fallthru
        _
    $region6: #{tpu_custom_call.1} parent=1 // loop_footer
      %s17 = sadd.s32 1, %s13
    $region7: #{tpu_custom_call.1} parent=1 // loop_footer_branch
      %12 = sbr.rel target = $region3
    $region8: #{tpu_custom_call.1} parent=1 // loop_exit
      _
    %4934 = vsyncpa [#allocation5], 1
    %s4935 = scalar_lea.sflag [#allocation5], 1
    %4936 = vsyncpa %s4935, 1

</llo_original>
